<compile_context>
chip_gen: v7x
topology: tpu7x:2x2x1
jax: 0.10.0
libtpu: 0.0.40
codegen_flags: <defaults>
</compile_context>

<pallas_src>
import jax
import jax.numpy as jnp
from jax import lax
from jax.experimental import pallas as pl
from jax.experimental.pallas import tpu as pltpu

FEAT = 512                 # backbone feature dim (fc1 in_features)
NODE = 512                 # self.node
LANE = 128                 # TPU lane width
MM_DTYPE = jnp.bfloat16    # MXU-operand dtype (f32 accumulation everywhere)


# --------------------------------------------------------------------------- prep
def _row_l2_normalize(w):
    # F.normalize(w, p=2, dim=-1): w / max(||w||_2, 1e-12), rows of (out, in)
    nrm = jnp.sqrt(jnp.sum(w * w, axis=-1, keepdims=True))
    return w / jnp.maximum(nrm, 1e-12)


def _round_up(n, m):
    return ((n + m - 1) // m) * m


def prepare_params(params, sess):
    """Pre-normalize (F.normalize of classifier/aux weights), pre-transpose to the
    MXU-native (K, N) layout, lane-pad the logits width to a multiple of 128, and
    pack the incremental heads into ONE K-stacked slab so their logits come from a
    single matmul.  Call once per weight update / session (outside the hot path)."""
    node = params['fc1'].shape[0]
    assert sess <= len(params['fc'])

    heads = [params['fc2']] + [params['fc'][i] for i in range(sess)]
    head_sizes = [int(w.shape[0]) for w in heads]
    total_c = int(sum(head_sizes))
    total_c_pad = _round_up(total_c, LANE)      # lane-dense store + clean MXU N tile

    # head 0 slab: (NODE, total_c_pad), its classes at columns [0, C0)
    w0 = jnp.zeros((node, total_c_pad), jnp.float32)
    w0 = w0.at[:, :head_sizes[0]].set(
        _row_l2_normalize(heads[0].astype(jnp.float32)).T)

    prep = {
        'sess': sess,
        'total_c': total_c,
        'total_c_pad': total_c_pad,
        'fc1_t': params['fc1'].T.astype(MM_DTYPE),                 # (FEAT, NODE)
        'w_head0': w0.astype(MM_DTYPE),                            # (NODE, total_c_pad)
        'Alpha': params['Alpha'].astype(jnp.float32),              # (n_sess, NODE)
    }

    if sess > 0:
        # K-stacked slab for heads 1..sess: head i occupies rows [(i-1)*NODE, i*NODE)
        # and its own column range -> one (B, sess*NODE) @ (sess*NODE, total_c_pad)
        # matmul produces the column-wise "concat" of all incremental-head logits.
        w_rest = jnp.zeros((sess * node, total_c_pad), jnp.float32)
        col = head_sizes[0]
        for i in range(1, sess + 1):
            wn_t = _row_l2_normalize(heads[i].astype(jnp.float32)).T   # (node, C_i)
            w_rest = w_rest.at[(i - 1) * node:i * node,
                               col:col + head_sizes[i]].set(wn_t)
            col += head_sizes[i]
        prep['w_rest'] = w_rest.astype(MM_DTYPE)                   # (sess*NODE, total_c_pad)

        # all aux heads share normalize(x) -> one stacked (FEAT, sess*NODE) RHS
        prep['w_aux_nt'] = jnp.concatenate(
            [_row_l2_normalize(params['fc_aux'][i].astype(jnp.float32)).T
             for i in range(sess)], axis=1).astype(MM_DTYPE)       # (FEAT, sess*NODE)
    return prep


# --------------------------------------------------------------------------- kernel
def _make_fused_kernel(sess, mode, node):
    """Builds the fully-fused forward kernel (structure static in sess/mode)."""

    def kernel(*refs):
        if sess > 0:
            (scal_ref, x_ref, w1t_ref, w0_ref, wrest_ref, waux_ref, alpha_ref,
             out_ref, logits_ref) = refs
        else:
            scal_ref, x_ref, w1t_ref, w0_ref, out_ref, logits_ref = refs

        gamma = scal_ref[0]          # SMEM scalars: no recompile when they change
        beta = scal_ref[1]

        x = x_ref[...]                                              # (B, FEAT) f32
        x_mm = x.astype(MM_DTYPE)

        # ---- out = self._l2norm(fc1(x)) ------------------------------------
        out1 = jnp.dot(x_mm, w1t_ref[...], preferred_element_type=jnp.float32)
        ss1 = jnp.sum(out1 * out1, axis=-1, keepdims=True)
        out = out1 * pl.reciprocal(1e-6 + jnp.sqrt(ss1), approx=True)
        out_ref[...] = out                                          # lane-dense (B, NODE)

        # F.normalize(out) == out1 * rsqrt(ss1): the _l2norm scale cancels, so the
        # second sum-of-squares reduction is dropped (reuse ss1).
        out_n = out1 * lax.rsqrt(jnp.maximum(ss1, 1e-24))

        # ---- head 0 logits (columns of all other heads are zero-padded) ----
        logits = jnp.dot(out_n.astype(MM_DTYPE), w0_ref[...],
                         preferred_element_type=jnp.float32)        # (B, total_c_pad)

        if sess > 0:
            # ---- all aux heads share normalize(x): one stacked matmul -------
            ssx = jnp.sum(x * x, axis=-1, keepdims=True)
            x_n = x * lax.rsqrt(jnp.maximum(ssx, 1e-24))
            out_aux_all = jnp.dot(x_n.astype(MM_DTYPE), waux_ref[...],
                                  preferred_element_type=jnp.float32)  # (B, sess*NODE)
            alpha_all = alpha_ref[...]                                 # (n_sess, NODE)

            # per-head gate, assembled into one (1, sess*NODE) scale row
            scales = []
            for i in range(1, sess + 1):
                if i < sess:
                    scales.append(alpha_all[i:i + 1, :])               # self.Alpha[i]
                elif mode == 'train':
                    # alpha = sigmoid(beta * mean(out_aux, dim=0)), in-kernel.
                    # NOTE: mean is over the FULL batch; if a batch grid axis is ever
                    # added, this needs a cross-block accumulation scheme.
                    aux_last = out_aux_all[:, (sess - 1) * node:sess * node]
                    t = jnp.mean(aux_last, axis=0, keepdims=True)      # (1, NODE)
                    scales.append(pl.reciprocal(1.0 + jnp.exp(-beta * t), approx=True))
                else:
                    # TODO(synk): 'train_old' needs the alpha cached by the last
                    # 'train' step; fall back to the Alpha buffer row.
                    scales.append(alpha_all[i:i + 1, :])
            scale_all = scales[0] if sess == 1 else jnp.concatenate(scales, axis=-1)

            # ---- one wide elementwise pass for ALL incremental heads --------
            out_tiled = out if sess == 1 else jnp.concatenate([out] * sess, axis=-1)
            new_all = out_tiled * gamma + out_aux_all * scale_all      # (B, sess*NODE)

            # F.normalize(_l2norm(v)) == v * rsqrt(sum(v^2)): one reduction per head.
            pieces = []
            for i in range(sess):
                blk = new_all[:, i * node:(i + 1) * node]              # lane-aligned
                ssb = jnp.sum(blk * blk, axis=-1, keepdims=True)
                pieces.append(blk * lax.rsqrt(jnp.maximum(ssb, 1e-24)))
            nn_all = pieces[0] if sess == 1 else jnp.concatenate(pieces, axis=-1)

            # ---- ONE K-stacked matmul == concat of all incremental logits ---
            logits = logits + jnp.dot(nn_all.astype(MM_DTYPE), wrest_ref[...],
                                      preferred_element_type=jnp.float32)

        logits_ref[...] = logits                                       # lane-dense store

    return kernel


# --------------------------------------------------------------------------- forward
def one_model_forward(x, prep, sess=0, epoch=0, mode='train', gamma=0.5):
    """Replicates OneModel.forward(x, sess, epoch, Mode=mode, IOF='feature').
    `prep` comes from prepare_params(params, sess)."""
    assert prep['sess'] == sess
    B = x.shape[0]
    total_c = prep['total_c']
    total_c_pad = prep['total_c_pad']
    beta = 1.0 + max(epoch, 0)
    scal = jnp.array([gamma, beta], dtype=jnp.float32)

    vmem = pl.BlockSpec(memory_space=pltpu.MemorySpace.VMEM)
    smem = pl.BlockSpec(memory_space=pltpu.MemorySpace.SMEM)

    inputs = [scal, x.astype(jnp.float32), prep['fc1_t'], prep['w_head0']]
    in_specs = [smem, vmem, vmem, vmem]
    if sess > 0:
        inputs += [prep['w_rest'], prep['w_aux_nt'], prep['Alpha']]
        in_specs += [vmem, vmem, vmem]

    # Advisory cost hint: the kernel is weight-DMA / latency bound at small B.
    flops = 2 * B * FEAT * NODE + 2 * B * NODE * total_c_pad
    if sess > 0:
        flops += 2 * B * FEAT * sess * NODE + 2 * B * sess * NODE * total_c_pad
    bytes_accessed = (sum(int(a.size) * a.dtype.itemsize for a in inputs)
                      + B * NODE * 4 + B * total_c_pad * 4)
    cost = pl.CostEstimate(flops=flops,
                           transcendentals=B * (2 + 2 * sess) + NODE,
                           bytes_accessed=bytes_accessed)

    # Whole problem (~2 MiB of weights + tiny activations) fits in VMEM on
    # v5e/v6e/v7x; gridless single invocation.  If B scales up, add a batch grid
    # axis marked "parallel" (v7x's 2 TCs) with constant-index weight BlockSpecs,
    # cap the batch tile at ~128-256 rows, and fix the batch-mean gate (see kernel).
    out, logits_pad = pl.pallas_call(
        _make_fused_kernel(sess, mode, NODE),
        out_shape=(jax.ShapeDtypeStruct((B, NODE), jnp.float32),
                   jax.ShapeDtypeStruct((B, total_c_pad), jnp.float32)),
        in_specs=in_specs,
        out_specs=(vmem, vmem),
        cost_estimate=cost,
    )(*inputs)

    # Slice the lane padding off OUTSIDE the kernel (keeps the in-kernel store dense).
    return out, logits_pad[:, :total_c]


# --------------------------------------------------------------------------- params
def init_params(key, session_len, node=NODE, feat=FEAT):
    n_sess = len(session_len)
    keys = jax.random.split(key, 2 + 2 * (n_sess - 1))

    def linear_w(k, out_f, in_f):
        bound = 1.0 / (in_f ** 0.5)     # nn.Linear default init
        return jax.random.uniform(k, (out_f, in_f), jnp.float32, -bound, bound)

    return {
        'fc1': linear_w(keys[0], node, feat),
        'fc2': linear_w(keys[1], session_len[0], node),
        'fc': [linear_w(keys[2 + j], session_len[j + 1], node)
               for j in range(n_sess - 1)],
        'fc_aux': [linear_w(keys[2 + (n_sess - 1) + j], node, feat)
                   for j in range(n_sess - 1)],
        # registered buffer: Alpha = zeros(SessLen, node); Alpha[0] += 1
        'Alpha': jnp.zeros((n_sess, node), jnp.float32).at[0].set(1.0),
    }


# --------------------------------------------------------------------------- reference
def _reference_forward(x, params, sess=0, epoch=0, mode='train', gamma=0.5):
    """Pure-JAX f32 replica of the PyTorch forward (for numeric cross-check)."""
    def l2norm(v):
        return v / (1e-6 + jnp.sqrt(jnp.sum(v * v, axis=-1, keepdims=True)))

    def norm(v):
        return v / jnp.maximum(jnp.sqrt(jnp.sum(v * v, axis=-1, keepdims=True)), 1e-12)

    out = l2norm(x @ params['fc1'].T)
    outs = [norm(out) @ norm(params['fc2']).T]
    for i in range(1, sess + 1):
        out_aux = norm(x) @ norm(params['fc_aux'][i - 1]).T
        if i < sess:
            scale = params['Alpha'][i]
        elif mode == 'train':
            beta = 1.0 + max(epoch, 0)
            scale = jax.nn.sigmoid(beta * jnp.mean(out_aux, axis=0))
        else:
            scale = params['Alpha'][i]
        new_node = l2norm(out * gamma + out_aux * scale)
        outs.append(norm(new_node) @ norm(params['fc'][i - 1]).T)
    return out, jnp.concatenate(outs, axis=1)


# --------------------------------------------------------------------------- main
if __name__ == "__main__":
    key = jax.random.PRNGKey(0)
    kx, kp = jax.random.split(key)

    session_len = [16, 8, 8]          # small synthetic session layout
    B = 8
    sess, epoch, gamma = 2, 1, 0.5    # exercises i==0, i<sess (Alpha) and i==sess (train)

    x = jax.random.normal(kx, (B, FEAT), jnp.float32)   # backbone features
    params = init_params(kp, session_len)

    # ---- fused forward, sess = 2 (all branches) ----
    prep = prepare_params(params, sess)
    out, output = one_model_forward(x, prep, sess=sess, epoch=epoch,
                                    mode='train', gamma=gamma)
    jax.block_until_ready((out, output))

    assert out.shape == (B, NODE)
    assert output.shape == (B, sum(session_len[:sess + 1]))
    assert bool(jnp.all(jnp.isfinite(out))) and bool(jnp.all(jnp.isfinite(output)))

    ref_out, ref_output = _reference_forward(x, params, sess=sess, epoch=epoch,
                                             mode='train', gamma=gamma)
    err_out = float(jnp.max(jnp.abs(out - ref_out)))
    err_log = float(jnp.max(jnp.abs(output - ref_output)))
    assert err_out < 5e-2 and err_log < 5e-2, (err_out, err_log)

    # ---- fused forward, sess = 1 ----
    prep1 = prepare_params(params, 1)
    out1_, output1 = one_model_forward(x, prep1, sess=1, epoch=0,
                                       mode='train', gamma=gamma)
    jax.block_until_ready((out1_, output1))
    ref_out1, ref_output1 = _reference_forward(x, params, sess=1, epoch=0,
                                               mode='train', gamma=gamma)
    assert output1.shape == (B, sum(session_len[:2]))
    assert float(jnp.max(jnp.abs(output1 - ref_output1))) < 5e-2

    # ---- fused forward, sess = 0 (base-session path) ----
    prep0 = prepare_params(params, 0)
    out0, output0 = one_model_forward(x, prep0, sess=0, epoch=0,
                                      mode='train', gamma=gamma)
    jax.block_until_ready((out0, output0))
    assert output0.shape == (B, session_len[0])
    ref_out0, ref_output0 = _reference_forward(x, params, sess=0, epoch=0,
                                               mode='train', gamma=gamma)
    assert float(jnp.max(jnp.abs(output0 - ref_output0))) < 5e-2

    print("KERNEL_OK")
</pallas_src>

<mosaic_0001>
module attributes {stable_mosaic.version = 11 : i64} {
  func.func @kernel(%arg0: memref<2xf32, #tpu.memory_space<smem>>, %arg1: memref<8x512xf32, #tpu.memory_space<vmem>>, %arg2: memref<512x512xbf16, #tpu.memory_space<vmem>>, %arg3: memref<512x128xbf16, #tpu.memory_space<vmem>>, %arg4: memref<1024x128xbf16, #tpu.memory_space<vmem>>, %arg5: memref<512x1024xbf16, #tpu.memory_space<vmem>>, %arg6: memref<3x512xf32, #tpu.memory_space<vmem>>, %arg7: memref<8x512xf32, #tpu.memory_space<vmem>>, %arg8: memref<8x128xf32, #tpu.memory_space<vmem>>) attributes {dimension_semantics = [], scalar_prefetch = 0 : i64, scratch_operands = 0 : i64, tpu.core_type = #tpu.core_type<tc>} {
    %c0 = arith.constant 0 : index
    %0 = memref.load %arg0[%c0] : memref<2xf32, #tpu.memory_space<smem>>
    %c1 = arith.constant 1 : index
    %1 = memref.load %arg0[%c1] : memref<2xf32, #tpu.memory_space<smem>>
    %c0_0 = arith.constant 0 : index
    %c0_1 = arith.constant 0 : index
    %2 = vector.load %arg1[%c0_0, %c0_1] : memref<8x512xf32, #tpu.memory_space<vmem>>, vector<8x512xf32>
    %3 = arith.truncf %2 : vector<8x512xf32> to vector<8x512xbf16>
    %c0_2 = arith.constant 0 : index
    %c0_3 = arith.constant 0 : index
    %4 = vector.load %arg2[%c0_2, %c0_3] : memref<512x512xbf16, #tpu.memory_space<vmem>>, vector<512x512xbf16>
    %cst = arith.constant dense<0.000000e+00> : vector<8x512xf32>
    %5 = tpu.matmul %3, %4, %cst {dimension_numbers = #tpu.dot_dimension_numbers<[1], [0], [0], [1], [0, 0, 1, 1], [], []>} : vector<8x512xbf16>, vector<512x512xbf16>, vector<8x512xf32> -> vector<8x512xf32>
    %6 = arith.mulf %5, %5 : vector<8x512xf32>
    %cst_4 = arith.constant dense<0.000000e+00> : vector<8xf32>
    %7 = vector.multi_reduction <add>, %6, %cst_4 [1] : vector<8x512xf32> to vector<8xf32>
    %8 = vector.shape_cast %7 : vector<8xf32> to vector<8x1xf32>
    %9 = math.sqrt %8 : vector<8x1xf32>
    %cst_5 = arith.constant 9.99999997E-7 : f32
    %10 = vector.broadcast %cst_5 : f32 to vector<8x1xf32>
    %11 = arith.addf %10, %9 : vector<8x1xf32>
    %12 = tpu.reciprocal %11 {approx = true} : vector<8x1xf32> -> vector<8x1xf32>
    %13 = vector.broadcast %12 : vector<8x1xf32> to vector<8x512xf32>
    %14 = arith.mulf %5, %13 : vector<8x512xf32>
    %c0_6 = arith.constant 0 : index
    %c0_7 = arith.constant 0 : index
    %15 = vector.load %arg7[%c0_6, %c0_7] : memref<8x512xf32, #tpu.memory_space<vmem>>, vector<8x512xf32>
    tpu.vector_store %arg7[%c0_6, %c0_7], %14 {strides = array<i32>} : memref<8x512xf32, #tpu.memory_space<vmem>>, vector<8x512xf32>,
    %cst_8 = arith.constant 1.000000e-24 : f32
    %16 = vector.broadcast %cst_8 : f32 to vector<8x1xf32>
    %17 = arith.maximumf %8, %16 : vector<8x1xf32>
    %18 = math.rsqrt %17 : vector<8x1xf32>
    %19 = vector.broadcast %18 : vector<8x1xf32> to vector<8x512xf32>
    %20 = arith.mulf %5, %19 : vector<8x512xf32>
    %21 = arith.truncf %20 : vector<8x512xf32> to vector<8x512xbf16>
    %c0_9 = arith.constant 0 : index
    %c0_10 = arith.constant 0 : index
    %22 = vector.load %arg3[%c0_9, %c0_10] : memref<512x128xbf16, #tpu.memory_space<vmem>>, vector<512x128xbf16>
    %cst_11 = arith.constant dense<0.000000e+00> : vector<8x128xf32>
    %23 = tpu.matmul %21, %22, %cst_11 {dimension_numbers = #tpu.dot_dimension_numbers<[1], [0], [0], [1], [0, 0, 1, 1], [], []>} : vector<8x512xbf16>, vector<512x128xbf16>, vector<8x128xf32> -> vector<8x128xf32>
    %24 = arith.mulf %2, %2 : vector<8x512xf32>
    %cst_12 = arith.constant dense<0.000000e+00> : vector<8xf32>
    %25 = vector.multi_reduction <add>, %24, %cst_12 [1] : vector<8x512xf32> to vector<8xf32>
    %26 = vector.shape_cast %25 : vector<8xf32> to vector<8x1xf32>
    %cst_13 = arith.constant 1.000000e-24 : f32
    %27 = vector.broadcast %cst_13 : f32 to vector<8x1xf32>
    %28 = arith.maximumf %26, %27 : vector<8x1xf32>
    %29 = math.rsqrt %28 : vector<8x1xf32>
    %30 = vector.broadcast %29 : vector<8x1xf32> to vector<8x512xf32>
    %31 = arith.mulf %2, %30 : vector<8x512xf32>
    %32 = arith.truncf %31 : vector<8x512xf32> to vector<8x512xbf16>
    %c0_14 = arith.constant 0 : index
    %c0_15 = arith.constant 0 : index
    %33 = vector.load %arg5[%c0_14, %c0_15] : memref<512x1024xbf16, #tpu.memory_space<vmem>>, vector<512x1024xbf16>
    %cst_16 = arith.constant dense<0.000000e+00> : vector<8x1024xf32>
    %34 = tpu.matmul %32, %33, %cst_16 {dimension_numbers = #tpu.dot_dimension_numbers<[1], [0], [0], [1], [0, 0, 1, 1], [], []>} : vector<8x512xbf16>, vector<512x1024xbf16>, vector<8x1024xf32> -> vector<8x1024xf32>
    %c0_17 = arith.constant 0 : index
    %c0_18 = arith.constant 0 : index
    %35 = vector.load %arg6[%c0_17, %c0_18] : memref<3x512xf32, #tpu.memory_space<vmem>>, vector<3x512xf32>
    %36 = vector.extract_strided_slice %35 {offsets = [1, 0], sizes = [1, 512], strides = [1, 1]} : vector<3x512xf32> to vector<1x512xf32>
    %37 = vector.extract_strided_slice %34 {offsets = [0, 512], sizes = [8, 512], strides = [1, 1]} : vector<8x1024xf32> to vector<8x512xf32>
    %cst_19 = arith.constant dense<0.000000e+00> : vector<512xf32>
    %38 = vector.multi_reduction <add>, %37, %cst_19 [0] : vector<8x512xf32> to vector<512xf32>
    %39 = vector.shape_cast %38 : vector<512xf32> to vector<1x512xf32>
    %cst_20 = arith.constant 8.000000e+00 : f32
    %40 = vector.broadcast %cst_20 : f32 to vector<1x512xf32>
    %41 = arith.divf %39, %40 : vector<1x512xf32>
    %cst_21 = arith.constant 0.000000e+00 : f32
    %42 = arith.subf %cst_21, %1 : f32
    %43 = vector.broadcast %42 : f32 to vector<1x512xf32>
    %44 = arith.mulf %43, %41 : vector<1x512xf32>
    %45 = math.exp %44 : vector<1x512xf32>
    %cst_22 = arith.constant 1.000000e+00 : f32
    %46 = vector.broadcast %cst_22 : f32 to vector<1x512xf32>
    %47 = arith.addf %46, %45 : vector<1x512xf32>
    %48 = tpu.reciprocal %47 {approx = true} : vector<1x512xf32> -> vector<1x512xf32>
    %49 = tpu.concatenate %36, %48 in 1 : vector<1x512xf32>, vector<1x512xf32> -> vector<1x1024xf32>
    %50 = tpu.concatenate %14, %14 in 1 : vector<8x512xf32>, vector<8x512xf32> -> vector<8x1024xf32>
    %51 = vector.broadcast %0 : f32 to vector<8x1024xf32>
    %52 = arith.mulf %50, %51 : vector<8x1024xf32>
    %53 = vector.broadcast %49 : vector<1x1024xf32> to vector<8x1024xf32>
    %54 = arith.mulf %34, %53 : vector<8x1024xf32>
    %55 = arith.addf %52, %54 : vector<8x1024xf32>
    %56 = vector.extract_strided_slice %55 {offsets = [0, 0], sizes = [8, 512], strides = [1, 1]} : vector<8x1024xf32> to vector<8x512xf32>
    %57 = arith.mulf %56, %56 : vector<8x512xf32>
    %cst_23 = arith.constant dense<0.000000e+00> : vector<8xf32>
    %58 = vector.multi_reduction <add>, %57, %cst_23 [1] : vector<8x512xf32> to vector<8xf32>
    %59 = vector.shape_cast %58 : vector<8xf32> to vector<8x1xf32>
    %cst_24 = arith.constant 1.000000e-24 : f32
    %60 = vector.broadcast %cst_24 : f32 to vector<8x1xf32>
    %61 = arith.maximumf %59, %60 : vector<8x1xf32>
    %62 = math.rsqrt %61 : vector<8x1xf32>
    %63 = vector.broadcast %62 : vector<8x1xf32> to vector<8x512xf32>
    %64 = arith.mulf %56, %63 : vector<8x512xf32>
    %65 = vector.extract_strided_slice %55 {offsets = [0, 512], sizes = [8, 512], strides = [1, 1]} : vector<8x1024xf32> to vector<8x512xf32>
    %66 = arith.mulf %65, %65 : vector<8x512xf32>
    %cst_25 = arith.constant dense<0.000000e+00> : vector<8xf32>
    %67 = vector.multi_reduction <add>, %66, %cst_25 [1] : vector<8x512xf32> to vector<8xf32>
    %68 = vector.shape_cast %67 : vector<8xf32> to vector<8x1xf32>
    %cst_26 = arith.constant 1.000000e-24 : f32
    %69 = vector.broadcast %cst_26 : f32 to vector<8x1xf32>
    %70 = arith.maximumf %68, %69 : vector<8x1xf32>
    %71 = math.rsqrt %70 : vector<8x1xf32>
    %72 = vector.broadcast %71 : vector<8x1xf32> to vector<8x512xf32>
    %73 = arith.mulf %65, %72 : vector<8x512xf32>
    %74 = tpu.concatenate %64, %73 in 1 : vector<8x512xf32>, vector<8x512xf32> -> vector<8x1024xf32>
    %75 = arith.truncf %74 : vector<8x1024xf32> to vector<8x1024xbf16>
    %c0_27 = arith.constant 0 : index
    %c0_28 = arith.constant 0 : index
    %76 = vector.load %arg4[%c0_27, %c0_28] : memref<1024x128xbf16, #tpu.memory_space<vmem>>, vector<1024x128xbf16>
    %cst_29 = arith.constant dense<0.000000e+00> : vector<8x128xf32>
    %77 = tpu.matmul %75, %76, %cst_29 {dimension_numbers = #tpu.dot_dimension_numbers<[1], [0], [0], [1], [0, 0, 1, 1], [], []>} : vector<8x1024xbf16>, vector<1024x128xbf16>, vector<8x128xf32> -> vector<8x128xf32>
    %78 = arith.addf %23, %77 : vector<8x128xf32>
    %c0_30 = arith.constant 0 : index
    %c0_31 = arith.constant 0 : index
    %79 = vector.load %arg8[%c0_30, %c0_31] : memref<8x128xf32, #tpu.memory_space<vmem>>, vector<8x128xf32>
    tpu.vector_store %arg8[%c0_30, %c0_31], %78 {strides = array<i32>} : memref<8x128xf32, #tpu.memory_space<vmem>>, vector<8x128xf32>,
    return
  }
}

</mosaic_0001>

<llo_original>
// kernel: tpu_custom_call.1
$region0: #{tpu_custom_call.1}
  #allocation0 [shape = 'u32[]', space=smem, size = 0x4, offset = 0x4, fixed_abs, tag = 'smem constant byte address 0x4 - core index']
  #allocation1 [shape = 'u32[144,128]{1,0:T(1,128)}', space=vmem, size = 0x12000, scoped, tag = 'internal scratch']
  %s0 = inlined_call_operand.hbm [shape: f32[2], index: 0, kind: input, shape index: {}]
  %s1 = inlined_call_operand.hbm [shape: f32[8,512], index: 1, kind: input, shape index: {}]
  %s2 = inlined_call_operand.hbm [shape: bf16[512,512], index: 2, kind: input, shape index: {}]
  %s3 = inlined_call_operand.hbm [shape: bf16[512,128], index: 3, kind: input, shape index: {}]
  %s4 = inlined_call_operand.hbm [shape: bf16[1024,128], index: 4, kind: input, shape index: {}]
  %s5 = inlined_call_operand.hbm [shape: bf16[512,1024], index: 5, kind: input, shape index: {}]
  %s6 = inlined_call_operand.vmem [shape: f32[3,512], index: 6, kind: input, shape index: {}]
  %s7 = inlined_call_operand.hbm [shape: f32[8,512], index: 7, kind: output, shape index: {0}]
  %s8 = inlined_call_operand.hbm [shape: f32[8,128], index: 8, kind: output, shape index: {1}]
  %9 = xla_tuple %s7, %s8
  %s10 = sld [smem:[#allocation0]]
  $region70: #{tpu_custom_call.1} parent=0
    _
  %s12 = ssub.s32 1, %s10
  %s13 = scalar_select 0, %s12, %s10
  $region1: #{tpu_custom_call.1} parent=0
    #allocation2 [shape = 'u8[512]{0}', space=smem, size = 0x200, scoped, tag = 'input window, operand 0, single buffered']
    #allocation3 [shape = 's32[1]{0}', space=sflag, size = 0x4, scoped, tag = 'scoped memory for tpu_custom_call.1']
    #allocation4 [shape = 's32[1]{0}', space=sflag, size = 0x4, scoped, tag = 'scoped memory for tpu_custom_call.1']
    #allocation5 [shape = 's32[1]{0}', space=sflag, size = 0x4, scoped, tag = 'scoped memory for tpu_custom_call.1']
    #allocation6 [shape = 'u8[16384]{0}', space=vmem, size = 0x4000, scoped, tag = 'input window, operand 1, single buffered']
    #allocation7 [shape = 'u8[524288]{0}', space=vmem, size = 0x80000, scoped, tag = 'input window, operand 2, single buffered']
    #allocation8 [shape = 's32[1]{0}', space=sflag, size = 0x4, scoped, tag = 'scoped memory for tpu_custom_call.1']
    #allocation9 [shape = 'u8[131072]{0}', space=vmem, size = 0x20000, scoped, tag = 'input window, operand 3, single buffered']
    #allocation10 [shape = 'u8[262144]{0}', space=vmem, size = 0x40000, scoped, tag = 'input window, operand 4, single buffered']
    #allocation11 [shape = 's32[1]{0}', space=sflag, size = 0x4, scoped, tag = 'scoped memory for tpu_custom_call.1']
    #allocation12 [shape = 'u8[1048576]{0}', space=vmem, size = 0x100000, scoped, tag = 'input window, operand 5, single buffered']
    #allocation13 [shape = 'u8[16384]{0}', space=vmem, size = 0x4000, scoped, tag = 'output window, operand 0, single buffered']
    #allocation14 [shape = 'u8[4096]{0}', space=vmem, size = 0x1000, scoped, tag = 'output window, operand 1, single buffered']
    #allocation15 [shape = 's32[1]{0}', space=sflag, size = 0x4, scoped, tag = 'scoped memory for tpu_custom_call.1']
    %14 = vsyncpa [#allocation5], 0
    %15 = vsyncpa [#allocation3], 0
    %16 = vsyncpa [#allocation8], 0
    %17 = vsyncpa [#allocation11], 0
    %18 = vsyncpa [#allocation4], 0
    %19 = vsyncpa [#allocation15], 0
    // Predicated region
    $region2: #{tpu_custom_call.1} parent=1 // pred_check
      _
    $region3: #{tpu_custom_call.1} parent=1 // pred_check_branch
      %21 = sbr.rel (0) target = $region5
    $region4: #{tpu_custom_call.1} parent=1 // pred_region
      %s23 = ssub.s32 16, 16
      %24 = vsyncadd [#allocation5], %s23
      %27 = dma.hbm_to_smem %s0, 16, [#allocation2], [#allocation5]
    $region5: #{tpu_custom_call.1} parent=1 // pred_fallthru
      _
    // Predicated region
    $region6: #{tpu_custom_call.1} parent=1 // pred_check
      _
    $region7: #{tpu_custom_call.1} parent=1 // pred_check_branch
      %29 = sbr.rel (0) target = $region9
    $region8: #{tpu_custom_call.1} parent=1 // pred_region
      %s31 = ssub.s32 512, 512
      %32 = vsyncadd [#allocation3], %s31
      %s34 = sshll.u32 [#allocation6], 4
      %s35 = int_to_ptr.vmem [resolvable:$true] %s34
      %37 = dma.hbm_to_vmem [thread:$0]  %s1, 512, %s35, [#allocation3]
    $region9: #{tpu_custom_call.1} parent=1 // pred_fallthru
      _
    // Predicated region
    $region10: #{tpu_custom_call.1} parent=1 // pred_check
      _
    $region11: #{tpu_custom_call.1} parent=1 // pred_check_branch
      %39 = sbr.rel (0) target = $region13
    $region12: #{tpu_custom_call.1} parent=1 // pred_region
      %s41 = ssub.s32 16384, 16384
      %42 = vsyncadd [#allocation8], %s41
      %s43 = sshll.u32 [#allocation7], 4
      %s44 = int_to_ptr.vmem [resolvable:$true] %s43
      %49 = dma.hbm_to_vmem [thread:$0]  %s2, 16384, %s44, [#allocation8], 256, 256, 16
    $region13: #{tpu_custom_call.1} parent=1 // pred_fallthru
      _
    // Predicated region
    $region14: #{tpu_custom_call.1} parent=1 // pred_check
      _
    $region15: #{tpu_custom_call.1} parent=1 // pred_check_branch
      %51 = sbr.rel (0) target = $region17
    $region16: #{tpu_custom_call.1} parent=1 // pred_region
      %s53 = ssub.s32 4096, 4096
      %54 = vsyncadd [#allocation8], %s53
      %s55 = sshll.u32 [#allocation9], 4
      %s56 = int_to_ptr.vmem [resolvable:$true] %s55
      %61 = dma.hbm_to_vmem [thread:$0]  %s3, 4096, %s56, [#allocation8], 64, 64, 4
    $region17: #{tpu_custom_call.1} parent=1 // pred_fallthru
      _
    // Predicated region
    $region18: #{tpu_custom_call.1} parent=1 // pred_check
      _
    $region19: #{tpu_custom_call.1} parent=1 // pred_check_branch
      %63 = sbr.rel (0) target = $region21
    $region20: #{tpu_custom_call.1} parent=1 // pred_region
      %s65 = ssub.s32 8192, 8192
      %66 = vsyncadd [#allocation11], %s65
      %s67 = sshll.u32 [#allocation10], 4
      %s68 = int_to_ptr.vmem [resolvable:$true] %s67
      %73 = dma.hbm_to_vmem [thread:$0]  %s4, 8192, %s68, [#allocation11], 64, 64, 4
    $region21: #{tpu_custom_call.1} parent=1 // pred_fallthru
      _
    // Predicated region
    $region22: #{tpu_custom_call.1} parent=1 // pred_check
      _
    $region23: #{tpu_custom_call.1} parent=1 // pred_check_branch
      %75 = sbr.rel (0) target = $region25
    $region24: #{tpu_custom_call.1} parent=1 // pred_region
      %s77 = ssub.s32 32768, 32768
      %78 = vsyncadd [#allocation11], %s77
      %s79 = sshll.u32 [#allocation12], 4
      %s80 = int_to_ptr.vmem [resolvable:$true] %s79
      %85 = dma.hbm_to_vmem [thread:$0]  %s5, 32768, %s80, [#allocation11], 512, 512, 32
    $region25: #{tpu_custom_call.1} parent=1 // pred_fallthru
      _
    // Predicated region
    $region26: #{tpu_custom_call.1} parent=1 // pred_check
      _
    $region27: #{tpu_custom_call.1} parent=1 // pred_check_branch
      %87 = sbr.rel (0) target = $region29
    $region28: #{tpu_custom_call.1} parent=1 // pred_region
      _
    $region29: #{tpu_custom_call.1} parent=1 // pred_fallthru
      _
    // Predicated region
    $region30: #{tpu_custom_call.1} parent=1 // pred_check
      _
    $region31: #{tpu_custom_call.1} parent=1 // pred_check_branch
      %89 = sbr.rel (0) target = $region33
    $region32: #{tpu_custom_call.1} parent=1 // pred_region
      %90 = dma.done [#allocation5], 16
    $region33: #{tpu_custom_call.1} parent=1 // pred_fallthru
      _
    // Predicated region
    $region34: #{tpu_custom_call.1} parent=1 // pred_check
      _
    $region35: #{tpu_custom_call.1} parent=1 // pred_check_branch
      %92 = sbr.rel (0) target = $region37
    $region36: #{tpu_custom_call.1} parent=1 // pred_region
      %93 = dma.done [#allocation3], 512
    $region37: #{tpu_custom_call.1} parent=1 // pred_fallthru
      _
    // Predicated region
    $region38: #{tpu_custom_call.1} parent=1 // pred_check
      _
    $region39: #{tpu_custom_call.1} parent=1 // pred_check_branch
      %95 = sbr.rel (0) target = $region41
    $region40: #{tpu_custom_call.1} parent=1 // pred_region
      %96 = dma.done [#allocation8], 16384
    $region41: #{tpu_custom_call.1} parent=1 // pred_fallthru
      _
    // Predicated region
    $region42: #{tpu_custom_call.1} parent=1 // pred_check
      _
    $region43: #{tpu_custom_call.1} parent=1 // pred_check_branch
      %98 = sbr.rel (0) target = $region45
    $region44: #{tpu_custom_call.1} parent=1 // pred_region
      %99 = dma.done [#allocation8], 4096
    $region45: #{tpu_custom_call.1} parent=1 // pred_fallthru
      _
    // Predicated region
    $region46: #{tpu_custom_call.1} parent=1 // pred_check
      _
    $region47: #{tpu_custom_call.1} parent=1 // pred_check_branch
      %101 = sbr.rel (0) target = $region49
    $region48: #{tpu_custom_call.1} parent=1 // pred_region
      %102 = dma.done [#allocation11], 8192
    $region49: #{tpu_custom_call.1} parent=1 // pred_fallthru
      _
    // Predicated region
    $region50: #{tpu_custom_call.1} parent=1 // pred_check
      _
    $region51: #{tpu_custom_call.1} parent=1 // pred_check_branch
      %104 = sbr.rel (0) target = $region53
    $region52: #{tpu_custom_call.1} parent=1 // pred_region
      %105 = dma.done [#allocation11], 32768
    $region53: #{tpu_custom_call.1} parent=1 // pred_fallthru
      _
    %106 = sfence
    %s108 = sld [smem:[#allocation2]]
    %s109 = sld [smem:[#allocation2 + $0x1]]
    %v110 = vld [vmem:[#allocation6] sm:$0xff]
    %v111 = vld [vmem:[#allocation6 + $0x8] sm:$0xff]
    %v112 = vld [vmem:[#allocation6 + $0x10] sm:$0xff]
    %v113 = vld [vmem:[#allocation6 + $0x18] sm:$0xff]
    %v114 = vpack.c.bf16 %v110, %v110
    %v115 = vpack.c.bf16 %v111, %v111
    %v116 = vpack.c.bf16 %v112, %v112
    %v117 = vpack.c.bf16 %v113, %v113
    %v118 = vld [vmem:[#allocation7] sm:$0xff]
    %v119 = vld [vmem:[#allocation7 + $0x8] sm:$0xff]
    %v120 = vld [vmem:[#allocation7 + $0x10] sm:$0xff]
    %v121 = vld [vmem:[#allocation7 + $0x18] sm:$0xff]
    %v122 = vld [vmem:[#allocation7 + $0x20] sm:$0xff]
    %v123 = vld [vmem:[#allocation7 + $0x28] sm:$0xff]
    %v124 = vld [vmem:[#allocation7 + $0x30] sm:$0xff]
    %v125 = vld [vmem:[#allocation7 + $0x38] sm:$0xff]
    %v126 = vld [vmem:[#allocation7 + $0x40] sm:$0xff]
    %v127 = vld [vmem:[#allocation7 + $0x48] sm:$0xff]
    %v128 = vld [vmem:[#allocation7 + $0x50] sm:$0xff]
    %v129 = vld [vmem:[#allocation7 + $0x58] sm:$0xff]
    %v130 = vld [vmem:[#allocation7 + $0x60] sm:$0xff]
    %v131 = vld [vmem:[#allocation7 + $0x68] sm:$0xff]
    %v132 = vld [vmem:[#allocation7 + $0x70] sm:$0xff]
    %v133 = vld [vmem:[#allocation7 + $0x78] sm:$0xff]
    %v134 = vld [vmem:[#allocation7 + $0x80] sm:$0xff]
    %v135 = vld [vmem:[#allocation7 + $0x88] sm:$0xff]
    %v136 = vld [vmem:[#allocation7 + $0x90] sm:$0xff]
    %v137 = vld [vmem:[#allocation7 + $0x98] sm:$0xff]
    %v138 = vld [vmem:[#allocation7 + $0xa0] sm:$0xff]
    %v139 = vld [vmem:[#allocation7 + $0xa8] sm:$0xff]
    %v140 = vld [vmem:[#allocation7 + $0xb0] sm:$0xff]
    %v141 = vld [vmem:[#allocation7 + $0xb8] sm:$0xff]
    %v142 = vld [vmem:[#allocation7 + $0xc0] sm:$0xff]
    %v143 = vld [vmem:[#allocation7 + $0xc8] sm:$0xff]
    %v144 = vld [vmem:[#allocation7 + $0xd0] sm:$0xff]
    %v145 = vld [vmem:[#allocation7 + $0xd8] sm:$0xff]
    %v146 = vld [vmem:[#allocation7 + $0xe0] sm:$0xff]
    %v147 = vld [vmem:[#allocation7 + $0xe8] sm:$0xff]
    %v148 = vld [vmem:[#allocation7 + $0xf0] sm:$0xff]
    %v149 = vld [vmem:[#allocation7 + $0xf8] sm:$0xff]
    %v150 = vld [vmem:[#allocation7 + $0x100] sm:$0xff]
    %v151 = vld [vmem:[#allocation7 + $0x108] sm:$0xff]
    %v152 = vld [vmem:[#allocation7 + $0x110] sm:$0xff]
    %v153 = vld [vmem:[#allocation7 + $0x118] sm:$0xff]
    %v154 = vld [vmem:[#allocation7 + $0x120] sm:$0xff]
    %v155 = vld [vmem:[#allocation7 + $0x128] sm:$0xff]
    %v156 = vld [vmem:[#allocation7 + $0x130] sm:$0xff]
    %v157 = vld [vmem:[#allocation7 + $0x138] sm:$0xff]
    %v158 = vld [vmem:[#allocation7 + $0x140] sm:$0xff]
    %v159 = vld [vmem:[#allocation7 + $0x148] sm:$0xff]
    %v160 = vld [vmem:[#allocation7 + $0x150] sm:$0xff]
    %v161 = vld [vmem:[#allocation7 + $0x158] sm:$0xff]
    %v162 = vld [vmem:[#allocation7 + $0x160] sm:$0xff]
    %v163 = vld [vmem:[#allocation7 + $0x168] sm:$0xff]
    %v164 = vld [vmem:[#allocation7 + $0x170] sm:$0xff]
    %v165 = vld [vmem:[#allocation7 + $0x178] sm:$0xff]
    %v166 = vld [vmem:[#allocation7 + $0x180] sm:$0xff]
    %v167 = vld [vmem:[#allocation7 + $0x188] sm:$0xff]
    %v168 = vld [vmem:[#allocation7 + $0x190] sm:$0xff]
    %v169 = vld [vmem:[#allocation7 + $0x198] sm:$0xff]
    %v170 = vld [vmem:[#allocation7 + $0x1a0] sm:$0xff]
    %v171 = vld [vmem:[#allocation7 + $0x1a8] sm:$0xff]
    %v172 = vld [vmem:[#allocation7 + $0x1b0] sm:$0xff]
    %v173 = vld [vmem:[#allocation7 + $0x1b8] sm:$0xff]
    %v174 = vld [vmem:[#allocation7 + $0x1c0] sm:$0xff]
    %v175 = vld [vmem:[#allocation7 + $0x1c8] sm:$0xff]
    %v176 = vld [vmem:[#allocation7 + $0x1d0] sm:$0xff]
    %v177 = vld [vmem:[#allocation7 + $0x1d8] sm:$0xff]
    %v178 = vld [vmem:[#allocation7 + $0x1e0] sm:$0xff]
    %v179 = vld [vmem:[#allocation7 + $0x1e8] sm:$0xff]
    %v180 = vld [vmem:[#allocation7 + $0x1f0] sm:$0xff]
    %v181 = vld [vmem:[#allocation7 + $0x1f8] sm:$0xff]
    %v182 = vld [vmem:[#allocation7 + $0x200] sm:$0xff]
    %v183 = vld [vmem:[#allocation7 + $0x208] sm:$0xff]
    %v184 = vld [vmem:[#allocation7 + $0x210] sm:$0xff]
    %v185 = vld [vmem:[#allocation7 + $0x218] sm:$0xff]
    %v186 = vld [vmem:[#allocation7 + $0x220] sm:$0xff]
    %v187 = vld [vmem:[#allocation7 + $0x228] sm:$0xff]
    %v188 = vld [vmem:[#allocation7 + $0x230] sm:$0xff]
    %v189 = vld [vmem:[#allocation7 + $0x238] sm:$0xff]
    %v190 = vld [vmem:[#allocation7 + $0x240] sm:$0xff]
    %v191 = vld [vmem:[#allocation7 + $0x248] sm:$0xff]
    %v192 = vld [vmem:[#allocation7 + $0x250] sm:$0xff]
    %v193 = vld [vmem:[#allocation7 + $0x258] sm:$0xff]
    %v194 = vld [vmem:[#allocation7 + $0x260] sm:$0xff]
    %v195 = vld [vmem:[#allocation7 + $0x268] sm:$0xff]
    %v196 = vld [vmem:[#allocation7 + $0x270] sm:$0xff]
    %v197 = vld [vmem:[#allocation7 + $0x278] sm:$0xff]
    %v198 = vld [vmem:[#allocation7 + $0x280] sm:$0xff]
    %v199 = vld [vmem:[#allocation7 + $0x288] sm:$0xff]
    %v200 = vld [vmem:[#allocation7 + $0x290] sm:$0xff]
    %v201 = vld [vmem:[#allocation7 + $0x298] sm:$0xff]
    %v202 = vld [vmem:[#allocation7 + $0x2a0] sm:$0xff]
    %v203 = vld [vmem:[#allocation7 + $0x2a8] sm:$0xff]
    %v204 = vld [vmem:[#allocation7 + $0x2b0] sm:$0xff]
    %v205 = vld [vmem:[#allocation7 + $0x2b8] sm:$0xff]
    %v206 = vld [vmem:[#allocation7 + $0x2c0] sm:$0xff]
    %v207 = vld [vmem:[#allocation7 + $0x2c8] sm:$0xff]
    %v208 = vld [vmem:[#allocation7 + $0x2d0] sm:$0xff]
    %v209 = vld [vmem:[#allocation7 + $0x2d8] sm:$0xff]
    %v210 = vld [vmem:[#allocation7 + $0x2e0] sm:$0xff]
    %v211 = vld [vmem:[#allocation7 + $0x2e8] sm:$0xff]
    %v212 = vld [vmem:[#allocation7 + $0x2f0] sm:$0xff]
    %v213 = vld [vmem:[#allocation7 + $0x2f8] sm:$0xff]
    %v214 = vld [vmem:[#allocation7 + $0x300] sm:$0xff]
    %v215 = vld [vmem:[#allocation7 + $0x308] sm:$0xff]
    %v216 = vld [vmem:[#allocation7 + $0x310] sm:$0xff]
    %v217 = vld [vmem:[#allocation7 + $0x318] sm:$0xff]
    %v218 = vld [vmem:[#allocation7 + $0x320] sm:$0xff]
    %v219 = vld [vmem:[#allocation7 + $0x328] sm:$0xff]
    %v220 = vld [vmem:[#allocation7 + $0x330] sm:$0xff]
    %v221 = vld [vmem:[#allocation7 + $0x338] sm:$0xff]
    %v222 = vld [vmem:[#allocation7 + $0x340] sm:$0xff]
    %v223 = vld [vmem:[#allocation7 + $0x348] sm:$0xff]
    %v224 = vld [vmem:[#allocation7 + $0x350] sm:$0xff]
    %v225 = vld [vmem:[#allocation7 + $0x358] sm:$0xff]
    %v226 = vld [vmem:[#allocation7 + $0x360] sm:$0xff]
    %v227 = vld [vmem:[#allocation7 + $0x368] sm:$0xff]
    %v228 = vld [vmem:[#allocation7 + $0x370] sm:$0xff]
    %v229 = vld [vmem:[#allocation7 + $0x378] sm:$0xff]
    %v230 = vld [vmem:[#allocation7 + $0x380] sm:$0xff]
    %v231 = vld [vmem:[#allocation7 + $0x388] sm:$0xff]
    %v232 = vld [vmem:[#allocation7 + $0x390] sm:$0xff]
    %v233 = vld [vmem:[#allocation7 + $0x398] sm:$0xff]
    %v234 = vld [vmem:[#allocation7 + $0x3a0] sm:$0xff]
    %v235 = vld [vmem:[#allocation7 + $0x3a8] sm:$0xff]
    %v236 = vld [vmem:[#allocation7 + $0x3b0] sm:$0xff]
    %v237 = vld [vmem:[#allocation7 + $0x3b8] sm:$0xff]
    %v238 = vld [vmem:[#allocation7 + $0x3c0] sm:$0xff]
    %v239 = vld [vmem:[#allocation7 + $0x3c8] sm:$0xff]
    %v240 = vld [vmem:[#allocation7 + $0x3d0] sm:$0xff]
    %v241 = vld [vmem:[#allocation7 + $0x3d8] sm:$0xff]
    %v242 = vld [vmem:[#allocation7 + $0x3e0] sm:$0xff]
    %v243 = vld [vmem:[#allocation7 + $0x3e8] sm:$0xff]
    %v244 = vld [vmem:[#allocation7 + $0x3f0] sm:$0xff]
    %v245 = vld [vmem:[#allocation7 + $0x3f8] sm:$0xff]
    %v374 = vunpack.c.l.b16 %v118
    %v375 = vunpack.c.h.b16 %v118
    %v376 = vunpack.c.l.b16 %v119
    %v377 = vunpack.c.h.b16 %v119
    %v378 = vunpack.c.l.b16 %v120
    %v379 = vunpack.c.h.b16 %v120
    %v380 = vunpack.c.l.b16 %v121
    %v381 = vunpack.c.h.b16 %v121
    %v382 = vunpack.c.l.b16 %v122
    %v383 = vunpack.c.h.b16 %v122
    %v384 = vunpack.c.l.b16 %v123
    %v385 = vunpack.c.h.b16 %v123
    %v386 = vunpack.c.l.b16 %v124
    %v387 = vunpack.c.h.b16 %v124
    %v388 = vunpack.c.l.b16 %v125
    %v389 = vunpack.c.h.b16 %v125
    %v390 = vunpack.c.l.b16 %v126
    %v391 = vunpack.c.h.b16 %v126
    %v392 = vunpack.c.l.b16 %v127
    %v393 = vunpack.c.h.b16 %v127
    %v394 = vunpack.c.l.b16 %v128
    %v395 = vunpack.c.h.b16 %v128
    %v396 = vunpack.c.l.b16 %v129
    %v397 = vunpack.c.h.b16 %v129
    %v398 = vunpack.c.l.b16 %v130
    %v399 = vunpack.c.h.b16 %v130
    %v400 = vunpack.c.l.b16 %v131
    %v401 = vunpack.c.h.b16 %v131
    %v402 = vunpack.c.l.b16 %v132
    %v403 = vunpack.c.h.b16 %v132
    %v404 = vunpack.c.l.b16 %v133
    %v405 = vunpack.c.h.b16 %v133
    %v406 = vunpack.c.l.b16 %v134
    %v407 = vunpack.c.h.b16 %v134
    %v408 = vunpack.c.l.b16 %v135
    %v409 = vunpack.c.h.b16 %v135
    %v410 = vunpack.c.l.b16 %v136
    %v411 = vunpack.c.h.b16 %v136
    %v412 = vunpack.c.l.b16 %v137
    %v413 = vunpack.c.h.b16 %v137
    %v414 = vunpack.c.l.b16 %v138
    %v415 = vunpack.c.h.b16 %v138
    %v416 = vunpack.c.l.b16 %v139
    %v417 = vunpack.c.h.b16 %v139
    %v418 = vunpack.c.l.b16 %v140
    %v419 = vunpack.c.h.b16 %v140
    %v420 = vunpack.c.l.b16 %v141
    %v421 = vunpack.c.h.b16 %v141
    %v422 = vunpack.c.l.b16 %v142
    %v423 = vunpack.c.h.b16 %v142
    %v424 = vunpack.c.l.b16 %v143
    %v425 = vunpack.c.h.b16 %v143
    %v426 = vunpack.c.l.b16 %v144
    %v427 = vunpack.c.h.b16 %v144
    %v428 = vunpack.c.l.b16 %v145
    %v429 = vunpack.c.h.b16 %v145
    %v430 = vunpack.c.l.b16 %v146
    %v431 = vunpack.c.h.b16 %v146
    %v432 = vunpack.c.l.b16 %v147
    %v433 = vunpack.c.h.b16 %v147
    %v434 = vunpack.c.l.b16 %v148
    %v435 = vunpack.c.h.b16 %v148
    %v436 = vunpack.c.l.b16 %v149
    %v437 = vunpack.c.h.b16 %v149
    %v438 = vunpack.c.l.b16 %v150
    %v439 = vunpack.c.h.b16 %v150
    %v440 = vunpack.c.l.b16 %v151
    %v441 = vunpack.c.h.b16 %v151
    %v442 = vunpack.c.l.b16 %v152
    %v443 = vunpack.c.h.b16 %v152
    %v444 = vunpack.c.l.b16 %v153
    %v445 = vunpack.c.h.b16 %v153
    %v446 = vunpack.c.l.b16 %v154
    %v447 = vunpack.c.h.b16 %v154
    %v448 = vunpack.c.l.b16 %v155
    %v449 = vunpack.c.h.b16 %v155
    %v450 = vunpack.c.l.b16 %v156
    %v451 = vunpack.c.h.b16 %v156
    %v452 = vunpack.c.l.b16 %v157
    %v453 = vunpack.c.h.b16 %v157
    %v454 = vunpack.c.l.b16 %v158
    %v455 = vunpack.c.h.b16 %v158
    %v456 = vunpack.c.l.b16 %v159
    %v457 = vunpack.c.h.b16 %v159
    %v458 = vunpack.c.l.b16 %v160
    %v459 = vunpack.c.h.b16 %v160
    %v460 = vunpack.c.l.b16 %v161
    %v461 = vunpack.c.h.b16 %v161
    %v462 = vunpack.c.l.b16 %v162
    %v463 = vunpack.c.h.b16 %v162
    %v464 = vunpack.c.l.b16 %v163
    %v465 = vunpack.c.h.b16 %v163
    %v466 = vunpack.c.l.b16 %v164
    %v467 = vunpack.c.h.b16 %v164
    %v468 = vunpack.c.l.b16 %v165
    %v469 = vunpack.c.h.b16 %v165
    %v470 = vunpack.c.l.b16 %v166
    %v471 = vunpack.c.h.b16 %v166
    %v472 = vunpack.c.l.b16 %v167
    %v473 = vunpack.c.h.b16 %v167
    %v474 = vunpack.c.l.b16 %v168
    %v475 = vunpack.c.h.b16 %v168
    %v476 = vunpack.c.l.b16 %v169
    %v477 = vunpack.c.h.b16 %v169
    %v478 = vunpack.c.l.b16 %v170
    %v479 = vunpack.c.h.b16 %v170
    %v480 = vunpack.c.l.b16 %v171
    %v481 = vunpack.c.h.b16 %v171
    %v482 = vunpack.c.l.b16 %v172
    %v483 = vunpack.c.h.b16 %v172
    %v484 = vunpack.c.l.b16 %v173
    %v485 = vunpack.c.h.b16 %v173
    %v486 = vunpack.c.l.b16 %v174
    %v487 = vunpack.c.h.b16 %v174
    %v488 = vunpack.c.l.b16 %v175
    %v489 = vunpack.c.h.b16 %v175
    %v490 = vunpack.c.l.b16 %v176
    %v491 = vunpack.c.h.b16 %v176
    %v492 = vunpack.c.l.b16 %v177
    %v493 = vunpack.c.h.b16 %v177
    %v494 = vunpack.c.l.b16 %v178
    %v495 = vunpack.c.h.b16 %v178
    %v496 = vunpack.c.l.b16 %v179
    %v497 = vunpack.c.h.b16 %v179
    %v498 = vunpack.c.l.b16 %v180
    %v499 = vunpack.c.h.b16 %v180
    %v500 = vunpack.c.l.b16 %v181
    %v501 = vunpack.c.h.b16 %v181
    %v502 = vunpack.c.l.b16 %v182
    %v503 = vunpack.c.h.b16 %v182
    %v504 = vunpack.c.l.b16 %v183
    %v505 = vunpack.c.h.b16 %v183
    %v506 = vunpack.c.l.b16 %v184
    %v507 = vunpack.c.h.b16 %v184
    %v508 = vunpack.c.l.b16 %v185
    %v509 = vunpack.c.h.b16 %v185
    %v510 = vunpack.c.l.b16 %v186
    %v511 = vunpack.c.h.b16 %v186
    %v512 = vunpack.c.l.b16 %v187
    %v513 = vunpack.c.h.b16 %v187
    %v514 = vunpack.c.l.b16 %v188
    %v515 = vunpack.c.h.b16 %v188
    %v516 = vunpack.c.l.b16 %v189
    %v517 = vunpack.c.h.b16 %v189
    %v518 = vunpack.c.l.b16 %v190
    %v519 = vunpack.c.h.b16 %v190
    %v520 = vunpack.c.l.b16 %v191
    %v521 = vunpack.c.h.b16 %v191
    %v522 = vunpack.c.l.b16 %v192
    %v523 = vunpack.c.h.b16 %v192
    %v524 = vunpack.c.l.b16 %v193
    %v525 = vunpack.c.h.b16 %v193
    %v526 = vunpack.c.l.b16 %v194
    %v527 = vunpack.c.h.b16 %v194
    %v528 = vunpack.c.l.b16 %v195
    %v529 = vunpack.c.h.b16 %v195
    %v530 = vunpack.c.l.b16 %v196
    %v531 = vunpack.c.h.b16 %v196
    %v532 = vunpack.c.l.b16 %v197
    %v533 = vunpack.c.h.b16 %v197
    %v534 = vunpack.c.l.b16 %v198
    %v535 = vunpack.c.h.b16 %v198
    %v536 = vunpack.c.l.b16 %v199
    %v537 = vunpack.c.h.b16 %v199
    %v538 = vunpack.c.l.b16 %v200
    %v539 = vunpack.c.h.b16 %v200
    %v540 = vunpack.c.l.b16 %v201
    %v541 = vunpack.c.h.b16 %v201
    %v542 = vunpack.c.l.b16 %v202
    %v543 = vunpack.c.h.b16 %v202
    %v544 = vunpack.c.l.b16 %v203
    %v545 = vunpack.c.h.b16 %v203
    %v546 = vunpack.c.l.b16 %v204
    %v547 = vunpack.c.h.b16 %v204
    %v548 = vunpack.c.l.b16 %v205
    %v549 = vunpack.c.h.b16 %v205
    %v550 = vunpack.c.l.b16 %v206
    %v551 = vunpack.c.h.b16 %v206
    %v552 = vunpack.c.l.b16 %v207
    %v553 = vunpack.c.h.b16 %v207
    %v554 = vunpack.c.l.b16 %v208
    %v555 = vunpack.c.h.b16 %v208
    %v556 = vunpack.c.l.b16 %v209
    %v557 = vunpack.c.h.b16 %v209
    %v558 = vunpack.c.l.b16 %v210
    %v559 = vunpack.c.h.b16 %v210
    %v560 = vunpack.c.l.b16 %v211
    %v561 = vunpack.c.h.b16 %v211
    %v562 = vunpack.c.l.b16 %v212
    %v563 = vunpack.c.h.b16 %v212
    %v564 = vunpack.c.l.b16 %v213
    %v565 = vunpack.c.h.b16 %v213
    %v566 = vunpack.c.l.b16 %v214
    %v567 = vunpack.c.h.b16 %v214
    %v568 = vunpack.c.l.b16 %v215
    %v569 = vunpack.c.h.b16 %v215
    %v570 = vunpack.c.l.b16 %v216
    %v571 = vunpack.c.h.b16 %v216
    %v572 = vunpack.c.l.b16 %v217
    %v573 = vunpack.c.h.b16 %v217
    %v574 = vunpack.c.l.b16 %v218
    %v575 = vunpack.c.h.b16 %v218
    %v576 = vunpack.c.l.b16 %v219
    %v577 = vunpack.c.h.b16 %v219
    %v578 = vunpack.c.l.b16 %v220
    %v579 = vunpack.c.h.b16 %v220
    %v580 = vunpack.c.l.b16 %v221
    %v581 = vunpack.c.h.b16 %v221
    %v582 = vunpack.c.l.b16 %v222
    %v583 = vunpack.c.h.b16 %v222
    %v584 = vunpack.c.l.b16 %v223
    %v585 = vunpack.c.h.b16 %v223
    %v586 = vunpack.c.l.b16 %v224
    %v587 = vunpack.c.h.b16 %v224
    %v588 = vunpack.c.l.b16 %v225
    %v589 = vunpack.c.h.b16 %v225
    %v590 = vunpack.c.l.b16 %v226
    %v591 = vunpack.c.h.b16 %v226
    %v592 = vunpack.c.l.b16 %v227
    %v593 = vunpack.c.h.b16 %v227
    %v594 = vunpack.c.l.b16 %v228
    %v595 = vunpack.c.h.b16 %v228
    %v596 = vunpack.c.l.b16 %v229
    %v597 = vunpack.c.h.b16 %v229
    %v598 = vunpack.c.l.b16 %v230
    %v599 = vunpack.c.h.b16 %v230
    %v600 = vunpack.c.l.b16 %v231
    %v601 = vunpack.c.h.b16 %v231
    %v602 = vunpack.c.l.b16 %v232
    %v603 = vunpack.c.h.b16 %v232
    %v604 = vunpack.c.l.b16 %v233
    %v605 = vunpack.c.h.b16 %v233
    %v606 = vunpack.c.l.b16 %v234
    %v607 = vunpack.c.h.b16 %v234
    %v608 = vunpack.c.l.b16 %v235
    %v609 = vunpack.c.h.b16 %v235
    %v610 = vunpack.c.l.b16 %v236
    %v611 = vunpack.c.h.b16 %v236
    %v612 = vunpack.c.l.b16 %v237
    %v613 = vunpack.c.h.b16 %v237
    %v614 = vunpack.c.l.b16 %v238
    %v615 = vunpack.c.h.b16 %v238
    %v616 = vunpack.c.l.b16 %v239
    %v617 = vunpack.c.h.b16 %v239
    %v618 = vunpack.c.l.b16 %v240
    %v619 = vunpack.c.h.b16 %v240
    %v620 = vunpack.c.l.b16 %v241
    %v621 = vunpack.c.h.b16 %v241
    %v622 = vunpack.c.l.b16 %v242
    %v623 = vunpack.c.h.b16 %v242
    %v624 = vunpack.c.l.b16 %v243
    %v625 = vunpack.c.h.b16 %v243
    %v626 = vunpack.c.l.b16 %v244
    %v627 = vunpack.c.h.b16 %v244
    %v628 = vunpack.c.l.b16 %v245
    %v629 = vunpack.c.h.b16 %v245
    %v630 = vpack.c.b16 %v378, %v374
    %v631 = vpack.c.b16 %v379, %v375
    %v632 = vpack.c.b16 %v380, %v376
    %v633 = vpack.c.b16 %v381, %v377
    %v634 = vpack.c.b16 %v386, %v382
    %v635 = vpack.c.b16 %v387, %v383
    %v636 = vpack.c.b16 %v388, %v384
    %v637 = vpack.c.b16 %v389, %v385
    %v638 = vpack.c.b16 %v394, %v390
    %v639 = vpack.c.b16 %v395, %v391
    %v640 = vpack.c.b16 %v396, %v392
    %v641 = vpack.c.b16 %v397, %v393
    %v642 = vpack.c.b16 %v402, %v398
    %v643 = vpack.c.b16 %v403, %v399
    %v644 = vpack.c.b16 %v404, %v400
    %v645 = vpack.c.b16 %v405, %v401
    %v646 = vpack.c.b16 %v410, %v406
    %v647 = vpack.c.b16 %v411, %v407
    %v648 = vpack.c.b16 %v412, %v408
    %v649 = vpack.c.b16 %v413, %v409
    %v650 = vpack.c.b16 %v418, %v414
    %v651 = vpack.c.b16 %v419, %v415
    %v652 = vpack.c.b16 %v420, %v416
    %v653 = vpack.c.b16 %v421, %v417
    %v654 = vpack.c.b16 %v426, %v422
    %v655 = vpack.c.b16 %v427, %v423
    %v656 = vpack.c.b16 %v428, %v424
    %v657 = vpack.c.b16 %v429, %v425
    %v658 = vpack.c.b16 %v434, %v430
    %v659 = vpack.c.b16 %v435, %v431
    %v660 = vpack.c.b16 %v436, %v432
    %v661 = vpack.c.b16 %v437, %v433
    %v662 = vpack.c.b16 %v442, %v438
    %v663 = vpack.c.b16 %v443, %v439
    %v664 = vpack.c.b16 %v444, %v440
    %v665 = vpack.c.b16 %v445, %v441
    %v666 = vpack.c.b16 %v450, %v446
    %v667 = vpack.c.b16 %v451, %v447
    %v668 = vpack.c.b16 %v452, %v448
    %v669 = vpack.c.b16 %v453, %v449
    %v670 = vpack.c.b16 %v458, %v454
    %v671 = vpack.c.b16 %v459, %v455
    %v672 = vpack.c.b16 %v460, %v456
    %v673 = vpack.c.b16 %v461, %v457
    %v674 = vpack.c.b16 %v466, %v462
    %v675 = vpack.c.b16 %v467, %v463
    %v676 = vpack.c.b16 %v468, %v464
    %v677 = vpack.c.b16 %v469, %v465
    %v678 = vpack.c.b16 %v474, %v470
    %v679 = vpack.c.b16 %v475, %v471
    %v680 = vpack.c.b16 %v476, %v472
    %v681 = vpack.c.b16 %v477, %v473
    %v682 = vpack.c.b16 %v482, %v478
    %v683 = vpack.c.b16 %v483, %v479
    %v684 = vpack.c.b16 %v484, %v480
    %v685 = vpack.c.b16 %v485, %v481
    %v686 = vpack.c.b16 %v490, %v486
    %v687 = vpack.c.b16 %v491, %v487
    %v688 = vpack.c.b16 %v492, %v488
    %v689 = vpack.c.b16 %v493, %v489
    %v690 = vpack.c.b16 %v498, %v494
    %v691 = vpack.c.b16 %v499, %v495
    %v692 = vpack.c.b16 %v500, %v496
    %v693 = vpack.c.b16 %v501, %v497
    %v694 = vpack.c.b16 %v506, %v502
    %v695 = vpack.c.b16 %v507, %v503
    %v696 = vpack.c.b16 %v508, %v504
    %v697 = vpack.c.b16 %v509, %v505
    %v698 = vpack.c.b16 %v514, %v510
    %v699 = vpack.c.b16 %v515, %v511
    %v700 = vpack.c.b16 %v516, %v512
    %v701 = vpack.c.b16 %v517, %v513
    %v702 = vpack.c.b16 %v522, %v518
    %v703 = vpack.c.b16 %v523, %v519
    %v704 = vpack.c.b16 %v524, %v520
    %v705 = vpack.c.b16 %v525, %v521
    %v706 = vpack.c.b16 %v530, %v526
    %v707 = vpack.c.b16 %v531, %v527
    %v708 = vpack.c.b16 %v532, %v528
    %v709 = vpack.c.b16 %v533, %v529
    %v710 = vpack.c.b16 %v538, %v534
    %v711 = vpack.c.b16 %v539, %v535
    %v712 = vpack.c.b16 %v540, %v536
    %v713 = vpack.c.b16 %v541, %v537
    %v714 = vpack.c.b16 %v546, %v542
    %v715 = vpack.c.b16 %v547, %v543
    %v716 = vpack.c.b16 %v548, %v544
    %v717 = vpack.c.b16 %v549, %v545
    %v718 = vpack.c.b16 %v554, %v550
    %v719 = vpack.c.b16 %v555, %v551
    %v720 = vpack.c.b16 %v556, %v552
    %v721 = vpack.c.b16 %v557, %v553
    %v722 = vpack.c.b16 %v562, %v558
    %v723 = vpack.c.b16 %v563, %v559
    %v724 = vpack.c.b16 %v564, %v560
    %v725 = vpack.c.b16 %v565, %v561
    %v726 = vpack.c.b16 %v570, %v566
    %v727 = vpack.c.b16 %v571, %v567
    %v728 = vpack.c.b16 %v572, %v568
    %v729 = vpack.c.b16 %v573, %v569
    %v730 = vpack.c.b16 %v578, %v574
    %v731 = vpack.c.b16 %v579, %v575
    %v732 = vpack.c.b16 %v580, %v576
    %v733 = vpack.c.b16 %v581, %v577
    %v734 = vpack.c.b16 %v586, %v582
    %v735 = vpack.c.b16 %v587, %v583
    %v736 = vpack.c.b16 %v588, %v584
    %v737 = vpack.c.b16 %v589, %v585
    %v738 = vpack.c.b16 %v594, %v590
    %v739 = vpack.c.b16 %v595, %v591
    %v740 = vpack.c.b16 %v596, %v592
    %v741 = vpack.c.b16 %v597, %v593
    %v742 = vpack.c.b16 %v602, %v598
    %v743 = vpack.c.b16 %v603, %v599
    %v744 = vpack.c.b16 %v604, %v600
    %v745 = vpack.c.b16 %v605, %v601
    %v746 = vpack.c.b16 %v610, %v606
    %v747 = vpack.c.b16 %v611, %v607
    %v748 = vpack.c.b16 %v612, %v608
    %v749 = vpack.c.b16 %v613, %v609
    %v750 = vpack.c.b16 %v618, %v614
    %v751 = vpack.c.b16 %v619, %v615
    %v752 = vpack.c.b16 %v620, %v616
    %v753 = vpack.c.b16 %v621, %v617
    %v754 = vpack.c.b16 %v626, %v622
    %v755 = vpack.c.b16 %v627, %v623
    %v756 = vpack.c.b16 %v628, %v624
    %v757 = vpack.c.b16 %v629, %v625
    %886 = vmatprep.subr.bf16.mxu0 %v631
    %887 = vmatpush1.bf16.msra.mxu0 %v630
    %888 = vmatprep.subr.bf16.mxu0 %v635
    %889 = vmatpush1.bf16.msra.mxu0 %v634
    %890 = vmatprep.subr.bf16.mxu0 %v639
    %891 = vmatpush1.bf16.msra.mxu0 %v638
    %892 = vmatprep.subr.bf16.mxu0 %v643
    %893 = vmatpush1.bf16.msra.mxu0 %v642
    %894 = vmatprep.subr.bf16.mxu0 %v647
    %895 = vmatpush1.bf16.msra.mxu0 %v646
    %896 = vmatprep.subr.bf16.mxu0 %v651
    %897 = vmatpush1.bf16.msra.mxu0 %v650
    %898 = vmatprep.subr.bf16.mxu0 %v655
    %899 = vmatpush1.bf16.msra.mxu0 %v654
    %900 = vmatprep.subr.bf16.mxu0 %v659
    %901 = vmatpush1.bf16.msra.mxu0 %v658
    %902 = vmatprep.subr.bf16.mxu0 %v663
    %903 = vmatpush1.bf16.msra.mxu0 %v662
    %904 = vmatprep.subr.bf16.mxu0 %v667
    %905 = vmatpush1.bf16.msra.mxu0 %v666
    %906 = vmatprep.subr.bf16.mxu0 %v671
    %907 = vmatpush1.bf16.msra.mxu0 %v670
    %908 = vmatprep.subr.bf16.mxu0 %v675
    %909 = vmatpush1.bf16.msra.mxu0 %v674
    %910 = vmatprep.subr.bf16.mxu0 %v679
    %911 = vmatpush1.bf16.msra.mxu0 %v678
    %912 = vmatprep.subr.bf16.mxu0 %v683
    %913 = vmatpush1.bf16.msra.mxu0 %v682
    %914 = vmatprep.subr.bf16.mxu0 %v687
    %915 = vmatpush1.bf16.msra.mxu0 %v686
    %916 = vmatprep.subr.bf16.mxu0 %v691
    %917 = vmatpush1.bf16.msra.mxu0 %v690
    %918 = vmatprep.mubr.bf16.mxu0 %v115
    %919 = vmatmul.mubr.bf16.gmra.mrb[0].mxu0 %v114
    %v920 = vpop.f32.mrb[0].mxu0
    %v921 = vadd.f32 0.0, %v920
    %v922 = vpop.f32.mrb[0].mxu0
    %v923 = vadd.f32 0.0, %v922
    %v924 = vpop.f32.mrb[0].mxu0
    %v925 = vpop.f32.mrb[0].mxu0
    %926 = vdwg.mxu0
    %927 = vmatprep.subr.bf16.mxu0 %v695
    %928 = vmatpush1.bf16.msra.mxu0 %v694
    %929 = vmatprep.subr.bf16.mxu0 %v699
    %930 = vmatpush1.bf16.msra.mxu0 %v698
    %931 = vmatprep.subr.bf16.mxu0 %v703
    %932 = vmatpush1.bf16.msra.mxu0 %v702
    %933 = vmatprep.subr.bf16.mxu0 %v707
    %934 = vmatpush1.bf16.msra.mxu0 %v706
    %935 = vmatprep.subr.bf16.mxu0 %v711
    %936 = vmatpush1.bf16.msra.mxu0 %v710
    %937 = vmatprep.subr.bf16.mxu0 %v715
    %938 = vmatpush1.bf16.msra.mxu0 %v714
    %939 = vmatprep.subr.bf16.mxu0 %v719
    %940 = vmatpush1.bf16.msra.mxu0 %v718
    %941 = vmatprep.subr.bf16.mxu0 %v723
    %942 = vmatpush1.bf16.msra.mxu0 %v722
    %943 = vmatprep.subr.bf16.mxu0 %v727
    %944 = vmatpush1.bf16.msra.mxu0 %v726
    %945 = vmatprep.subr.bf16.mxu0 %v731
    %946 = vmatpush1.bf16.msra.mxu0 %v730
    %947 = vmatprep.subr.bf16.mxu0 %v735
    %948 = vmatpush1.bf16.msra.mxu0 %v734
    %949 = vmatprep.subr.bf16.mxu0 %v739
    %950 = vmatpush1.bf16.msra.mxu0 %v738
    %951 = vmatprep.subr.bf16.mxu0 %v743
    %952 = vmatpush1.bf16.msra.mxu0 %v742
    %953 = vmatprep.subr.bf16.mxu0 %v747
    %954 = vmatpush1.bf16.msra.mxu0 %v746
    %955 = vmatprep.subr.bf16.mxu0 %v751
    %956 = vmatpush1.bf16.msra.mxu0 %v750
    %957 = vmatprep.subr.bf16.mxu0 %v755
    %958 = vmatpush1.bf16.msra.mxu0 %v754
    %959 = vmatprep.mubr.bf16.mxu0 %v117
    %960 = vmatmul.mubr.bf16.gmra.mrb[0].mxu0 %v116
    %v961 = vpop.f32.mrb[0].mxu0
    %v962 = vadd.f32 %v921, %v961
    %v963 = vpop.f32.mrb[0].mxu0
    %v964 = vadd.f32 %v923, %v963
    %v965 = vpop.f32.mrb[0].mxu0
    %v966 = vpop.f32.mrb[0].mxu0
    %967 = vdwg.mxu0
    %968 = vmatprep.subr.bf16.mxu0 %v633
    %969 = vmatpush1.bf16.msra.mxu0 %v632
    %970 = vmatprep.subr.bf16.mxu0 %v637
    %971 = vmatpush1.bf16.msra.mxu0 %v636
    %972 = vmatprep.subr.bf16.mxu0 %v641
    %973 = vmatpush1.bf16.msra.mxu0 %v640
    %974 = vmatprep.subr.bf16.mxu0 %v645
    %975 = vmatpush1.bf16.msra.mxu0 %v644
    %976 = vmatprep.subr.bf16.mxu0 %v649
    %977 = vmatpush1.bf16.msra.mxu0 %v648
    %978 = vmatprep.subr.bf16.mxu0 %v653
    %979 = vmatpush1.bf16.msra.mxu0 %v652
    %980 = vmatprep.subr.bf16.mxu0 %v657
    %981 = vmatpush1.bf16.msra.mxu0 %v656
    %982 = vmatprep.subr.bf16.mxu0 %v661
    %983 = vmatpush1.bf16.msra.mxu0 %v660
    %984 = vmatprep.subr.bf16.mxu0 %v665
    %985 = vmatpush1.bf16.msra.mxu0 %v664
    %986 = vmatprep.subr.bf16.mxu0 %v669
    %987 = vmatpush1.bf16.msra.mxu0 %v668
    %988 = vmatprep.subr.bf16.mxu0 %v673
    %989 = vmatpush1.bf16.msra.mxu0 %v672
    %990 = vmatprep.subr.bf16.mxu0 %v677
    %991 = vmatpush1.bf16.msra.mxu0 %v676
    %992 = vmatprep.subr.bf16.mxu0 %v681
    %993 = vmatpush1.bf16.msra.mxu0 %v680
    %994 = vmatprep.subr.bf16.mxu0 %v685
    %995 = vmatpush1.bf16.msra.mxu0 %v684
    %996 = vmatprep.subr.bf16.mxu0 %v689
    %997 = vmatpush1.bf16.msra.mxu0 %v688
    %998 = vmatprep.subr.bf16.mxu0 %v693
    %999 = vmatpush1.bf16.msra.mxu0 %v692
    %1000 = vmatprep.mubr.bf16.mxu0 %v115
    %1001 = vmatmul.mubr.bf16.gmra.mrb[0].mxu0 %v114
    %v1002 = vpop.f32.mrb[0].mxu0
    %v1003 = vadd.f32 0.0, %v1002
    %v1004 = vpop.f32.mrb[0].mxu0
    %v1005 = vadd.f32 0.0, %v1004
    %v1006 = vpop.f32.mrb[0].mxu0
    %v1007 = vpop.f32.mrb[0].mxu0
    %1008 = vdwg.mxu0
    %1009 = vmatprep.subr.bf16.mxu0 %v697
    %1010 = vmatpush1.bf16.msra.mxu0 %v696
    %1011 = vmatprep.subr.bf16.mxu0 %v701
    %1012 = vmatpush1.bf16.msra.mxu0 %v700
    %1013 = vmatprep.subr.bf16.mxu0 %v705
    %1014 = vmatpush1.bf16.msra.mxu0 %v704
    %1015 = vmatprep.subr.bf16.mxu0 %v709
    %1016 = vmatpush1.bf16.msra.mxu0 %v708
    %1017 = vmatprep.subr.bf16.mxu0 %v713
    %1018 = vmatpush1.bf16.msra.mxu0 %v712
    %1019 = vmatprep.subr.bf16.mxu0 %v717
    %1020 = vmatpush1.bf16.msra.mxu0 %v716
    %1021 = vmatprep.subr.bf16.mxu0 %v721
    %1022 = vmatpush1.bf16.msra.mxu0 %v720
    %1023 = vmatprep.subr.bf16.mxu0 %v725
    %1024 = vmatpush1.bf16.msra.mxu0 %v724
    %1025 = vmatprep.subr.bf16.mxu0 %v729
    %1026 = vmatpush1.bf16.msra.mxu0 %v728
    %1027 = vmatprep.subr.bf16.mxu0 %v733
    %1028 = vmatpush1.bf16.msra.mxu0 %v732
    %1029 = vmatprep.subr.bf16.mxu0 %v737
    %1030 = vmatpush1.bf16.msra.mxu0 %v736
    %1031 = vmatprep.subr.bf16.mxu0 %v741
    %1032 = vmatpush1.bf16.msra.mxu0 %v740
    %1033 = vmatprep.subr.bf16.mxu0 %v745
    %1034 = vmatpush1.bf16.msra.mxu0 %v744
    %1035 = vmatprep.subr.bf16.mxu0 %v749
    %1036 = vmatpush1.bf16.msra.mxu0 %v748
    %1037 = vmatprep.subr.bf16.mxu0 %v753
    %1038 = vmatpush1.bf16.msra.mxu0 %v752
    %1039 = vmatprep.subr.bf16.mxu0 %v757
    %1040 = vmatpush1.bf16.msra.mxu0 %v756
    %1041 = vmatprep.mubr.bf16.mxu0 %v117
    %1042 = vmatmul.mubr.bf16.gmra.mrb[0].mxu0 %v116
    %v1043 = vpop.f32.mrb[0].mxu0
    %v1044 = vadd.f32 %v1003, %v1043
    %v1045 = vpop.f32.mrb[0].mxu0
    %v1046 = vadd.f32 %v1005, %v1045
    %v1047 = vpop.f32.mrb[0].mxu0
    %v1048 = vpop.f32.mrb[0].mxu0
    %1049 = vdwg.mxu0
    %v1050 = vmul.f32 %v962, %v962
    %v1051 = vmul.f32 %v964, %v964
    %v1052 = vmul.f32 %v1044, %v1044
    %v1053 = vmul.f32 %v1046, %v1046
    %v1054 = vadd.f32 %v1050, %v1051
    %v1055 = vadd.f32 %v1054, %v1052
    %v1056 = vadd.f32 %v1055, %v1053
    %1057 = vadd.xlane.f32.xlu0 %v1056
    %v1058 = vpop.xlane.xlu0 %1057
    %v1059 = vrsqrt.pop %v1058
    %v1060 = vmul.f32 %v1058, %v1059
    %vm1061 = vcmp.eq.f32.partialorder %v1058, inf
    %v1062 = vsel %vm1061, %v1058, %v1060
    %vm1063 = vcmp.eq.f32.partialorder %v1058, 0.0
    %v1064 = vand.u32 %v1058, 2147483648
    %v1065 = vsel %vm1063, %v1064, %v1062
    %v1066 = vadd.f32 %v1065, 1e-06
    %v1067 = vrcp.pop %v1066
    %v1068 = vmul.f32 %v962, %v1067
    %v1069 = vmul.f32 %v964, %v1067
    %v1070 = vmul.f32 %v1044, %v1067
    %v1071 = vmul.f32 %v1046, %v1067
    %1072 = vst [vmem:[#allocation13] sm:$0xff] %v1068
    %1073 = vst [vmem:[#allocation13 + $0x8] sm:$0xff] %v1069
    %1074 = vst [vmem:[#allocation13 + $0x10] sm:$0xff] %v1070
    %1075 = vst [vmem:[#allocation13 + $0x18] sm:$0xff] %v1071
    %v1076 = vmax.f32 %v1058, 1e-24
    %v1077 = vrsqrt.pop %v1076
    %v1078 = vmul.f32 %v962, %v1077
    %v1079 = vmul.f32 %v964, %v1077
    %v1080 = vmul.f32 %v1044, %v1077
    %v1081 = vmul.f32 %v1046, %v1077
    %v1082 = vpack.c.bf16 %v1078, %v1078
    %v1083 = vpack.c.bf16 %v1079, %v1079
    %v1084 = vpack.c.bf16 %v1080, %v1080
    %v1085 = vpack.c.bf16 %v1081, %v1081
    %v1086 = vld [vmem:[#allocation9] sm:$0xf]
    %v1087 = vld [vmem:[#allocation9 + $0x4] sm:$0xf]
    %v1088 = vld [vmem:[#allocation9 + $0x8] sm:$0xf]
    %v1089 = vld [vmem:[#allocation9 + $0xc] sm:$0xf]
    %v1090 = vld [vmem:[#allocation9 + $0x10] sm:$0xf]
    %v1091 = vld [vmem:[#allocation9 + $0x14] sm:$0xf]
    %v1092 = vld [vmem:[#allocation9 + $0x18] sm:$0xf]
    %v1093 = vld [vmem:[#allocation9 + $0x1c] sm:$0xf]
    %v1094 = vld [vmem:[#allocation9 + $0x20] sm:$0xf]
    %v1095 = vld [vmem:[#allocation9 + $0x24] sm:$0xf]
    %v1096 = vld [vmem:[#allocation9 + $0x28] sm:$0xf]
    %v1097 = vld [vmem:[#allocation9 + $0x2c] sm:$0xf]
    %v1098 = vld [vmem:[#allocation9 + $0x30] sm:$0xf]
    %v1099 = vld [vmem:[#allocation9 + $0x34] sm:$0xf]
    %v1100 = vld [vmem:[#allocation9 + $0x38] sm:$0xf]
    %v1101 = vld [vmem:[#allocation9 + $0x3c] sm:$0xf]
    %v1102 = vld [vmem:[#allocation9 + $0x40] sm:$0xf]
    %v1103 = vld [vmem:[#allocation9 + $0x44] sm:$0xf]
    %v1104 = vld [vmem:[#allocation9 + $0x48] sm:$0xf]
    %v1105 = vld [vmem:[#allocation9 + $0x4c] sm:$0xf]
    %v1106 = vld [vmem:[#allocation9 + $0x50] sm:$0xf]
    %v1107 = vld [vmem:[#allocation9 + $0x54] sm:$0xf]
    %v1108 = vld [vmem:[#allocation9 + $0x58] sm:$0xf]
    %v1109 = vld [vmem:[#allocation9 + $0x5c] sm:$0xf]
    %v1110 = vld [vmem:[#allocation9 + $0x60] sm:$0xf]
    %v1111 = vld [vmem:[#allocation9 + $0x64] sm:$0xf]
    %v1112 = vld [vmem:[#allocation9 + $0x68] sm:$0xf]
    %v1113 = vld [vmem:[#allocation9 + $0x6c] sm:$0xf]
    %v1114 = vld [vmem:[#allocation9 + $0x70] sm:$0xf]
    %v1115 = vld [vmem:[#allocation9 + $0x74] sm:$0xf]
    %v1116 = vld [vmem:[#allocation9 + $0x78] sm:$0xf]
    %v1117 = vld [vmem:[#allocation9 + $0x7c] sm:$0xf]
    %v1118 = vld [vmem:[#allocation9 + $0x80] sm:$0xf]
    %v1119 = vld [vmem:[#allocation9 + $0x84] sm:$0xf]
    %v1120 = vld [vmem:[#allocation9 + $0x88] sm:$0xf]
    %v1121 = vld [vmem:[#allocation9 + $0x8c] sm:$0xf]
    %v1122 = vld [vmem:[#allocation9 + $0x90] sm:$0xf]
    %v1123 = vld [vmem:[#allocation9 + $0x94] sm:$0xf]
    %v1124 = vld [vmem:[#allocation9 + $0x98] sm:$0xf]
    %v1125 = vld [vmem:[#allocation9 + $0x9c] sm:$0xf]
    %v1126 = vld [vmem:[#allocation9 + $0xa0] sm:$0xf]
    %v1127 = vld [vmem:[#allocation9 + $0xa4] sm:$0xf]
    %v1128 = vld [vmem:[#allocation9 + $0xa8] sm:$0xf]
    %v1129 = vld [vmem:[#allocation9 + $0xac] sm:$0xf]
    %v1130 = vld [vmem:[#allocation9 + $0xb0] sm:$0xf]
    %v1131 = vld [vmem:[#allocation9 + $0xb4] sm:$0xf]
    %v1132 = vld [vmem:[#allocation9 + $0xb8] sm:$0xf]
    %v1133 = vld [vmem:[#allocation9 + $0xbc] sm:$0xf]
    %v1134 = vld [vmem:[#allocation9 + $0xc0] sm:$0xf]
    %v1135 = vld [vmem:[#allocation9 + $0xc4] sm:$0xf]
    %v1136 = vld [vmem:[#allocation9 + $0xc8] sm:$0xf]
    %v1137 = vld [vmem:[#allocation9 + $0xcc] sm:$0xf]
    %v1138 = vld [vmem:[#allocation9 + $0xd0] sm:$0xf]
    %v1139 = vld [vmem:[#allocation9 + $0xd4] sm:$0xf]
    %v1140 = vld [vmem:[#allocation9 + $0xd8] sm:$0xf]
    %v1141 = vld [vmem:[#allocation9 + $0xdc] sm:$0xf]
    %v1142 = vld [vmem:[#allocation9 + $0xe0] sm:$0xf]
    %v1143 = vld [vmem:[#allocation9 + $0xe4] sm:$0xf]
    %v1144 = vld [vmem:[#allocation9 + $0xe8] sm:$0xf]
    %v1145 = vld [vmem:[#allocation9 + $0xec] sm:$0xf]
    %v1146 = vld [vmem:[#allocation9 + $0xf0] sm:$0xf]
    %v1147 = vld [vmem:[#allocation9 + $0xf4] sm:$0xf]
    %v1148 = vld [vmem:[#allocation9 + $0xf8] sm:$0xf]
    %v1149 = vld [vmem:[#allocation9 + $0xfc] sm:$0xf]
    %v1150 = vmul.f32 %v110, %v110
    %v1151 = vmul.f32 %v111, %v111
    %v1152 = vmul.f32 %v112, %v112
    %v1153 = vmul.f32 %v113, %v113
    %v1154 = vadd.f32 %v1150, %v1151
    %v1155 = vadd.f32 %v1154, %v1152
    %v1156 = vadd.f32 %v1155, %v1153
    %1157 = vadd.xlane.f32.xlu0 %v1156
    %v1158 = vpop.xlane.xlu0 %1157
    %v1159 = vmax.f32 %v1158, 1e-24
    %v1160 = vrsqrt.pop %v1159
    %v1161 = vmul.f32 %v110, %v1160
    %v1162 = vmul.f32 %v111, %v1160
    %v1163 = vmul.f32 %v112, %v1160
    %v1164 = vmul.f32 %v113, %v1160
    %v1165 = vpack.c.bf16 %v1161, %v1161
    %v1166 = vpack.c.bf16 %v1162, %v1162
    %v1167 = vpack.c.bf16 %v1163, %v1163
    %v1168 = vpack.c.bf16 %v1164, %v1164
    %v1169 = vld [vmem:[#allocation12] sm:$0xff]
    %v1170 = vld [vmem:[#allocation12 + $0x8] sm:$0xff]
    %v1171 = vld [vmem:[#allocation12 + $0x10] sm:$0xff]
    %v1172 = vld [vmem:[#allocation12 + $0x18] sm:$0xff]
    %v1173 = vld [vmem:[#allocation12 + $0x20] sm:$0xff]
    %v1174 = vld [vmem:[#allocation12 + $0x28] sm:$0xff]
    %v1175 = vld [vmem:[#allocation12 + $0x30] sm:$0xff]
    %v1176 = vld [vmem:[#allocation12 + $0x38] sm:$0xff]
    %v1177 = vld [vmem:[#allocation12 + $0x40] sm:$0xff]
    %v1178 = vld [vmem:[#allocation12 + $0x48] sm:$0xff]
    %v1179 = vld [vmem:[#allocation12 + $0x50] sm:$0xff]
    %v1180 = vld [vmem:[#allocation12 + $0x58] sm:$0xff]
    %v1181 = vld [vmem:[#allocation12 + $0x60] sm:$0xff]
    %v1182 = vld [vmem:[#allocation12 + $0x68] sm:$0xff]
    %v1183 = vld [vmem:[#allocation12 + $0x70] sm:$0xff]
    %v1184 = vld [vmem:[#allocation12 + $0x78] sm:$0xff]
    %v1185 = vld [vmem:[#allocation12 + $0x80] sm:$0xff]
    %v1186 = vld [vmem:[#allocation12 + $0x88] sm:$0xff]
    %v1187 = vld [vmem:[#allocation12 + $0x90] sm:$0xff]
    %v1188 = vld [vmem:[#allocation12 + $0x98] sm:$0xff]
    %v1189 = vld [vmem:[#allocation12 + $0xa0] sm:$0xff]
    %v1190 = vld [vmem:[#allocation12 + $0xa8] sm:$0xff]
    %v1191 = vld [vmem:[#allocation12 + $0xb0] sm:$0xff]
    %v1192 = vld [vmem:[#allocation12 + $0xb8] sm:$0xff]
    %v1193 = vld [vmem:[#allocation12 + $0xc0] sm:$0xff]
    %v1194 = vld [vmem:[#allocation12 + $0xc8] sm:$0xff]
    %v1195 = vld [vmem:[#allocation12 + $0xd0] sm:$0xff]
    %v1196 = vld [vmem:[#allocation12 + $0xd8] sm:$0xff]
    %v1197 = vld [vmem:[#allocation12 + $0xe0] sm:$0xff]
    %v1198 = vld [vmem:[#allocation12 + $0xe8] sm:$0xff]
    %v1199 = vld [vmem:[#allocation12 + $0xf0] sm:$0xff]
    %v1200 = vld [vmem:[#allocation12 + $0xf8] sm:$0xff]
    %v1201 = vld [vmem:[#allocation12 + $0x100] sm:$0xff]
    %v1202 = vld [vmem:[#allocation12 + $0x108] sm:$0xff]
    %v1203 = vld [vmem:[#allocation12 + $0x110] sm:$0xff]
    %v1204 = vld [vmem:[#allocation12 + $0x118] sm:$0xff]
    %v1205 = vld [vmem:[#allocation12 + $0x120] sm:$0xff]
    %v1206 = vld [vmem:[#allocation12 + $0x128] sm:$0xff]
    %v1207 = vld [vmem:[#allocation12 + $0x130] sm:$0xff]
    %v1208 = vld [vmem:[#allocation12 + $0x138] sm:$0xff]
    %v1209 = vld [vmem:[#allocation12 + $0x140] sm:$0xff]
    %v1210 = vld [vmem:[#allocation12 + $0x148] sm:$0xff]
    %v1211 = vld [vmem:[#allocation12 + $0x150] sm:$0xff]
    %v1212 = vld [vmem:[#allocation12 + $0x158] sm:$0xff]
    %v1213 = vld [vmem:[#allocation12 + $0x160] sm:$0xff]
    %v1214 = vld [vmem:[#allocation12 + $0x168] sm:$0xff]
    %v1215 = vld [vmem:[#allocation12 + $0x170] sm:$0xff]
    %v1216 = vld [vmem:[#allocation12 + $0x178] sm:$0xff]
    %v1217 = vld [vmem:[#allocation12 + $0x180] sm:$0xff]
    %v1218 = vld [vmem:[#allocation12 + $0x188] sm:$0xff]
    %v1219 = vld [vmem:[#allocation12 + $0x190] sm:$0xff]
    %v1220 = vld [vmem:[#allocation12 + $0x198] sm:$0xff]
    %v1221 = vld [vmem:[#allocation12 + $0x1a0] sm:$0xff]
    %v1222 = vld [vmem:[#allocation12 + $0x1a8] sm:$0xff]
    %v1223 = vld [vmem:[#allocation12 + $0x1b0] sm:$0xff]
    %v1224 = vld [vmem:[#allocation12 + $0x1b8] sm:$0xff]
    %v1225 = vld [vmem:[#allocation12 + $0x1c0] sm:$0xff]
    %v1226 = vld [vmem:[#allocation12 + $0x1c8] sm:$0xff]
    %v1227 = vld [vmem:[#allocation12 + $0x1d0] sm:$0xff]
    %v1228 = vld [vmem:[#allocation12 + $0x1d8] sm:$0xff]
    %v1229 = vld [vmem:[#allocation12 + $0x1e0] sm:$0xff]
    %v1230 = vld [vmem:[#allocation12 + $0x1e8] sm:$0xff]
    %v1231 = vld [vmem:[#allocation12 + $0x1f0] sm:$0xff]
    %v1232 = vld [vmem:[#allocation12 + $0x1f8] sm:$0xff]
    %v1233 = vld [vmem:[#allocation12 + $0x200] sm:$0xff]
    %v1234 = vld [vmem:[#allocation12 + $0x208] sm:$0xff]
    %v1235 = vld [vmem:[#allocation12 + $0x210] sm:$0xff]
    %v1236 = vld [vmem:[#allocation12 + $0x218] sm:$0xff]
    %v1237 = vld [vmem:[#allocation12 + $0x220] sm:$0xff]
    %v1238 = vld [vmem:[#allocation12 + $0x228] sm:$0xff]
    %v1239 = vld [vmem:[#allocation12 + $0x230] sm:$0xff]
    %v1240 = vld [vmem:[#allocation12 + $0x238] sm:$0xff]
    %v1241 = vld [vmem:[#allocation12 + $0x240] sm:$0xff]
    %v1242 = vld [vmem:[#allocation12 + $0x248] sm:$0xff]
    %v1243 = vld [vmem:[#allocation12 + $0x250] sm:$0xff]
    %v1244 = vld [vmem:[#allocation12 + $0x258] sm:$0xff]
    %v1245 = vld [vmem:[#allocation12 + $0x260] sm:$0xff]
    %v1246 = vld [vmem:[#allocation12 + $0x268] sm:$0xff]
    %v1247 = vld [vmem:[#allocation12 + $0x270] sm:$0xff]
    %v1248 = vld [vmem:[#allocation12 + $0x278] sm:$0xff]
    %v1249 = vld [vmem:[#allocation12 + $0x280] sm:$0xff]
    %v1250 = vld [vmem:[#allocation12 + $0x288] sm:$0xff]
    %v1251 = vld [vmem:[#allocation12 + $0x290] sm:$0xff]
    %v1252 = vld [vmem:[#allocation12 + $0x298] sm:$0xff]
    %v1253 = vld [vmem:[#allocation12 + $0x2a0] sm:$0xff]
    %v1254 = vld [vmem:[#allocation12 + $0x2a8] sm:$0xff]
    %v1255 = vld [vmem:[#allocation12 + $0x2b0] sm:$0xff]
    %v1256 = vld [vmem:[#allocation12 + $0x2b8] sm:$0xff]
    %v1257 = vld [vmem:[#allocation12 + $0x2c0] sm:$0xff]
    %v1258 = vld [vmem:[#allocation12 + $0x2c8] sm:$0xff]
    %v1259 = vld [vmem:[#allocation12 + $0x2d0] sm:$0xff]
    %v1260 = vld [vmem:[#allocation12 + $0x2d8] sm:$0xff]
    %v1261 = vld [vmem:[#allocation12 + $0x2e0] sm:$0xff]
    %v1262 = vld [vmem:[#allocation12 + $0x2e8] sm:$0xff]
    %v1263 = vld [vmem:[#allocation12 + $0x2f0] sm:$0xff]
    %v1264 = vld [vmem:[#allocation12 + $0x2f8] sm:$0xff]
    %v1265 = vld [vmem:[#allocation12 + $0x300] sm:$0xff]
    %v1266 = vld [vmem:[#allocation12 + $0x308] sm:$0xff]
    %v1267 = vld [vmem:[#allocation12 + $0x310] sm:$0xff]
    %v1268 = vld [vmem:[#allocation12 + $0x318] sm:$0xff]
    %v1269 = vld [vmem:[#allocation12 + $0x320] sm:$0xff]
    %v1270 = vld [vmem:[#allocation12 + $0x328] sm:$0xff]
    %v1271 = vld [vmem:[#allocation12 + $0x330] sm:$0xff]
    %v1272 = vld [vmem:[#allocation12 + $0x338] sm:$0xff]
    %v1273 = vld [vmem:[#allocation12 + $0x340] sm:$0xff]
    %v1274 = vld [vmem:[#allocation12 + $0x348] sm:$0xff]
    %v1275 = vld [vmem:[#allocation12 + $0x350] sm:$0xff]
    %v1276 = vld [vmem:[#allocation12 + $0x358] sm:$0xff]
    %v1277 = vld [vmem:[#allocation12 + $0x360] sm:$0xff]
    %v1278 = vld [vmem:[#allocation12 + $0x368] sm:$0xff]
    %v1279 = vld [vmem:[#allocation12 + $0x370] sm:$0xff]
    %v1280 = vld [vmem:[#allocation12 + $0x378] sm:$0xff]
    %v1281 = vld [vmem:[#allocation12 + $0x380] sm:$0xff]
    %v1282 = vld [vmem:[#allocation12 + $0x388] sm:$0xff]
    %v1283 = vld [vmem:[#allocation12 + $0x390] sm:$0xff]
    %v1284 = vld [vmem:[#allocation12 + $0x398] sm:$0xff]
    %v1285 = vld [vmem:[#allocation12 + $0x3a0] sm:$0xff]
    %v1286 = vld [vmem:[#allocation12 + $0x3a8] sm:$0xff]
    %v1287 = vld [vmem:[#allocation12 + $0x3b0] sm:$0xff]
    %v1288 = vld [vmem:[#allocation12 + $0x3b8] sm:$0xff]
    %v1289 = vld [vmem:[#allocation12 + $0x3c0] sm:$0xff]
    %v1290 = vld [vmem:[#allocation12 + $0x3c8] sm:$0xff]
    %v1291 = vld [vmem:[#allocation12 + $0x3d0] sm:$0xff]
    %v1292 = vld [vmem:[#allocation12 + $0x3d8] sm:$0xff]
    %v1293 = vld [vmem:[#allocation12 + $0x3e0] sm:$0xff]
    %v1294 = vld [vmem:[#allocation12 + $0x3e8] sm:$0xff]
    %v1295 = vld [vmem:[#allocation12 + $0x3f0] sm:$0xff]
    %v1296 = vld [vmem:[#allocation12 + $0x3f8] sm:$0xff]
    %v1297 = vld [vmem:[#allocation12 + $0x400] sm:$0xff]
    %v1298 = vld [vmem:[#allocation12 + $0x408] sm:$0xff]
    %v1299 = vld [vmem:[#allocation12 + $0x410] sm:$0xff]
    %v1300 = vld [vmem:[#allocation12 + $0x418] sm:$0xff]
    %v1301 = vld [vmem:[#allocation12 + $0x420] sm:$0xff]
    %v1302 = vld [vmem:[#allocation12 + $0x428] sm:$0xff]
    %v1303 = vld [vmem:[#allocation12 + $0x430] sm:$0xff]
    %v1304 = vld [vmem:[#allocation12 + $0x438] sm:$0xff]
    %v1305 = vld [vmem:[#allocation12 + $0x440] sm:$0xff]
    %v1306 = vld [vmem:[#allocation12 + $0x448] sm:$0xff]
    %v1307 = vld [vmem:[#allocation12 + $0x450] sm:$0xff]
    %v1308 = vld [vmem:[#allocation12 + $0x458] sm:$0xff]
    %v1309 = vld [vmem:[#allocation12 + $0x460] sm:$0xff]
    %v1310 = vld [vmem:[#allocation12 + $0x468] sm:$0xff]
    %v1311 = vld [vmem:[#allocation12 + $0x470] sm:$0xff]
    %v1312 = vld [vmem:[#allocation12 + $0x478] sm:$0xff]
    %v1313 = vld [vmem:[#allocation12 + $0x480] sm:$0xff]
    %v1314 = vld [vmem:[#allocation12 + $0x488] sm:$0xff]
    %v1315 = vld [vmem:[#allocation12 + $0x490] sm:$0xff]
    %v1316 = vld [vmem:[#allocation12 + $0x498] sm:$0xff]
    %v1317 = vld [vmem:[#allocation12 + $0x4a0] sm:$0xff]
    %v1318 = vld [vmem:[#allocation12 + $0x4a8] sm:$0xff]
    %v1319 = vld [vmem:[#allocation12 + $0x4b0] sm:$0xff]
    %v1320 = vld [vmem:[#allocation12 + $0x4b8] sm:$0xff]
    %v1321 = vld [vmem:[#allocation12 + $0x4c0] sm:$0xff]
    %v1322 = vld [vmem:[#allocation12 + $0x4c8] sm:$0xff]
    %v1323 = vld [vmem:[#allocation12 + $0x4d0] sm:$0xff]
    %v1324 = vld [vmem:[#allocation12 + $0x4d8] sm:$0xff]
    %v1325 = vld [vmem:[#allocation12 + $0x4e0] sm:$0xff]
    %v1326 = vld [vmem:[#allocation12 + $0x4e8] sm:$0xff]
    %v1327 = vld [vmem:[#allocation12 + $0x4f0] sm:$0xff]
    %v1328 = vld [vmem:[#allocation12 + $0x4f8] sm:$0xff]
    %v1329 = vld [vmem:[#allocation12 + $0x500] sm:$0xff]
    %v1330 = vld [vmem:[#allocation12 + $0x508] sm:$0xff]
    %v1331 = vld [vmem:[#allocation12 + $0x510] sm:$0xff]
    %v1332 = vld [vmem:[#allocation12 + $0x518] sm:$0xff]
    %v1333 = vld [vmem:[#allocation12 + $0x520] sm:$0xff]
    %v1334 = vld [vmem:[#allocation12 + $0x528] sm:$0xff]
    %v1335 = vld [vmem:[#allocation12 + $0x530] sm:$0xff]
    %v1336 = vld [vmem:[#allocation12 + $0x538] sm:$0xff]
    %v1337 = vld [vmem:[#allocation12 + $0x540] sm:$0xff]
    %v1338 = vld [vmem:[#allocation12 + $0x548] sm:$0xff]
    %v1339 = vld [vmem:[#allocation12 + $0x550] sm:$0xff]
    %v1340 = vld [vmem:[#allocation12 + $0x558] sm:$0xff]
    %v1341 = vld [vmem:[#allocation12 + $0x560] sm:$0xff]
    %v1342 = vld [vmem:[#allocation12 + $0x568] sm:$0xff]
    %v1343 = vld [vmem:[#allocation12 + $0x570] sm:$0xff]
    %v1344 = vld [vmem:[#allocation12 + $0x578] sm:$0xff]
    %v1345 = vld [vmem:[#allocation12 + $0x580] sm:$0xff]
    %v1346 = vld [vmem:[#allocation12 + $0x588] sm:$0xff]
    %v1347 = vld [vmem:[#allocation12 + $0x590] sm:$0xff]
    %v1348 = vld [vmem:[#allocation12 + $0x598] sm:$0xff]
    %v1349 = vld [vmem:[#allocation12 + $0x5a0] sm:$0xff]
    %v1350 = vld [vmem:[#allocation12 + $0x5a8] sm:$0xff]
    %v1351 = vld [vmem:[#allocation12 + $0x5b0] sm:$0xff]
    %v1352 = vld [vmem:[#allocation12 + $0x5b8] sm:$0xff]
    %v1353 = vld [vmem:[#allocation12 + $0x5c0] sm:$0xff]
    %v1354 = vld [vmem:[#allocation12 + $0x5c8] sm:$0xff]
    %v1355 = vld [vmem:[#allocation12 + $0x5d0] sm:$0xff]
    %v1356 = vld [vmem:[#allocation12 + $0x5d8] sm:$0xff]
    %v1357 = vld [vmem:[#allocation12 + $0x5e0] sm:$0xff]
    %v1358 = vld [vmem:[#allocation12 + $0x5e8] sm:$0xff]
    %v1359 = vld [vmem:[#allocation12 + $0x5f0] sm:$0xff]
    %v1360 = vld [vmem:[#allocation12 + $0x5f8] sm:$0xff]
    %v1361 = vld [vmem:[#allocation12 + $0x600] sm:$0xff]
    %v1362 = vld [vmem:[#allocation12 + $0x608] sm:$0xff]
    %v1363 = vld [vmem:[#allocation12 + $0x610] sm:$0xff]
    %v1364 = vld [vmem:[#allocation12 + $0x618] sm:$0xff]
    %v1365 = vld [vmem:[#allocation12 + $0x620] sm:$0xff]
    %v1366 = vld [vmem:[#allocation12 + $0x628] sm:$0xff]
    %v1367 = vld [vmem:[#allocation12 + $0x630] sm:$0xff]
    %v1368 = vld [vmem:[#allocation12 + $0x638] sm:$0xff]
    %v1369 = vld [vmem:[#allocation12 + $0x640] sm:$0xff]
    %v1370 = vld [vmem:[#allocation12 + $0x648] sm:$0xff]
    %v1371 = vld [vmem:[#allocation12 + $0x650] sm:$0xff]
    %v1372 = vld [vmem:[#allocation12 + $0x658] sm:$0xff]
    %v1373 = vld [vmem:[#allocation12 + $0x660] sm:$0xff]
    %v1374 = vld [vmem:[#allocation12 + $0x668] sm:$0xff]
    %v1375 = vld [vmem:[#allocation12 + $0x670] sm:$0xff]
    %v1376 = vld [vmem:[#allocation12 + $0x678] sm:$0xff]
    %v1377 = vld [vmem:[#allocation12 + $0x680] sm:$0xff]
    %v1378 = vld [vmem:[#allocation12 + $0x688] sm:$0xff]
    %v1379 = vld [vmem:[#allocation12 + $0x690] sm:$0xff]
    %v1380 = vld [vmem:[#allocation12 + $0x698] sm:$0xff]
    %v1381 = vld [vmem:[#allocation12 + $0x6a0] sm:$0xff]
    %v1382 = vld [vmem:[#allocation12 + $0x6a8] sm:$0xff]
    %v1383 = vld [vmem:[#allocation12 + $0x6b0] sm:$0xff]
    %v1384 = vld [vmem:[#allocation12 + $0x6b8] sm:$0xff]
    %v1385 = vld [vmem:[#allocation12 + $0x6c0] sm:$0xff]
    %v1386 = vld [vmem:[#allocation12 + $0x6c8] sm:$0xff]
    %v1387 = vld [vmem:[#allocation12 + $0x6d0] sm:$0xff]
    %v1388 = vld [vmem:[#allocation12 + $0x6d8] sm:$0xff]
    %v1389 = vld [vmem:[#allocation12 + $0x6e0] sm:$0xff]
    %v1390 = vld [vmem:[#allocation12 + $0x6e8] sm:$0xff]
    %v1391 = vld [vmem:[#allocation12 + $0x6f0] sm:$0xff]
    %v1392 = vld [vmem:[#allocation12 + $0x6f8] sm:$0xff]
    %v1393 = vld [vmem:[#allocation12 + $0x700] sm:$0xff]
    %v1394 = vld [vmem:[#allocation12 + $0x708] sm:$0xff]
    %v1395 = vld [vmem:[#allocation12 + $0x710] sm:$0xff]
    %v1396 = vld [vmem:[#allocation12 + $0x718] sm:$0xff]
    %v1397 = vld [vmem:[#allocation12 + $0x720] sm:$0xff]
    %v1398 = vld [vmem:[#allocation12 + $0x728] sm:$0xff]
    %v1399 = vld [vmem:[#allocation12 + $0x730] sm:$0xff]
    %v1400 = vld [vmem:[#allocation12 + $0x738] sm:$0xff]
    %v1401 = vld [vmem:[#allocation12 + $0x740] sm:$0xff]
    %v1402 = vld [vmem:[#allocation12 + $0x748] sm:$0xff]
    %v1403 = vld [vmem:[#allocation12 + $0x750] sm:$0xff]
    %v1404 = vld [vmem:[#allocation12 + $0x758] sm:$0xff]
    %v1405 = vld [vmem:[#allocation12 + $0x760] sm:$0xff]
    %v1406 = vld [vmem:[#allocation12 + $0x768] sm:$0xff]
    %v1407 = vld [vmem:[#allocation12 + $0x770] sm:$0xff]
    %v1408 = vld [vmem:[#allocation12 + $0x778] sm:$0xff]
    %v1409 = vld [vmem:[#allocation12 + $0x780] sm:$0xff]
    %v1410 = vld [vmem:[#allocation12 + $0x788] sm:$0xff]
    %v1411 = vld [vmem:[#allocation12 + $0x790] sm:$0xff]
    %v1412 = vld [vmem:[#allocation12 + $0x798] sm:$0xff]
    %v1413 = vld [vmem:[#allocation12 + $0x7a0] sm:$0xff]
    %v1414 = vld [vmem:[#allocation12 + $0x7a8] sm:$0xff]
    %v1415 = vld [vmem:[#allocation12 + $0x7b0] sm:$0xff]
    %v1416 = vld [vmem:[#allocation12 + $0x7b8] sm:$0xff]
    %v1417 = vld [vmem:[#allocation12 + $0x7c0] sm:$0xff]
    %v1418 = vld [vmem:[#allocation12 + $0x7c8] sm:$0xff]
    %v1419 = vld [vmem:[#allocation12 + $0x7d0] sm:$0xff]
    %v1420 = vld [vmem:[#allocation12 + $0x7d8] sm:$0xff]
    %v1421 = vld [vmem:[#allocation12 + $0x7e0] sm:$0xff]
    %v1422 = vld [vmem:[#allocation12 + $0x7e8] sm:$0xff]
    %v1423 = vld [vmem:[#allocation12 + $0x7f0] sm:$0xff]
    %v1424 = vld [vmem:[#allocation12 + $0x7f8] sm:$0xff]
    %v1681 = vunpack.c.l.b16 %v1169
    %v1682 = vunpack.c.h.b16 %v1169
    %v1683 = vunpack.c.l.b16 %v1170
    %v1684 = vunpack.c.h.b16 %v1170
    %v1685 = vunpack.c.l.b16 %v1171
    %v1686 = vunpack.c.h.b16 %v1171
    %v1687 = vunpack.c.l.b16 %v1172
    %v1688 = vunpack.c.h.b16 %v1172
    %v1689 = vunpack.c.l.b16 %v1173
    %v1690 = vunpack.c.h.b16 %v1173
    %v1691 = vunpack.c.l.b16 %v1174
    %v1692 = vunpack.c.h.b16 %v1174
    %v1693 = vunpack.c.l.b16 %v1175
    %v1694 = vunpack.c.h.b16 %v1175
    %v1695 = vunpack.c.l.b16 %v1176
    %v1696 = vunpack.c.h.b16 %v1176
    %v1697 = vunpack.c.l.b16 %v1177
    %v1698 = vunpack.c.h.b16 %v1177
    %v1699 = vunpack.c.l.b16 %v1178
    %v1700 = vunpack.c.h.b16 %v1178
    %v1701 = vunpack.c.l.b16 %v1179
    %v1702 = vunpack.c.h.b16 %v1179
    %v1703 = vunpack.c.l.b16 %v1180
    %v1704 = vunpack.c.h.b16 %v1180
    %v1705 = vunpack.c.l.b16 %v1181
    %v1706 = vunpack.c.h.b16 %v1181
    %v1707 = vunpack.c.l.b16 %v1182
    %v1708 = vunpack.c.h.b16 %v1182
    %v1709 = vunpack.c.l.b16 %v1183
    %v1710 = vunpack.c.h.b16 %v1183
    %v1711 = vunpack.c.l.b16 %v1184
    %v1712 = vunpack.c.h.b16 %v1184
    %v1713 = vunpack.c.l.b16 %v1185
    %v1714 = vunpack.c.h.b16 %v1185
    %v1715 = vunpack.c.l.b16 %v1186
    %v1716 = vunpack.c.h.b16 %v1186
    %v1717 = vunpack.c.l.b16 %v1187
    %v1718 = vunpack.c.h.b16 %v1187
    %v1719 = vunpack.c.l.b16 %v1188
    %v1720 = vunpack.c.h.b16 %v1188
    %v1721 = vunpack.c.l.b16 %v1189
    %v1722 = vunpack.c.h.b16 %v1189
    %v1723 = vunpack.c.l.b16 %v1190
    %v1724 = vunpack.c.h.b16 %v1190
    %v1725 = vunpack.c.l.b16 %v1191
    %v1726 = vunpack.c.h.b16 %v1191
    %v1727 = vunpack.c.l.b16 %v1192
    %v1728 = vunpack.c.h.b16 %v1192
    %v1729 = vunpack.c.l.b16 %v1193
    %v1730 = vunpack.c.h.b16 %v1193
    %v1731 = vunpack.c.l.b16 %v1194
    %v1732 = vunpack.c.h.b16 %v1194
    %v1733 = vunpack.c.l.b16 %v1195
    %v1734 = vunpack.c.h.b16 %v1195
    %v1735 = vunpack.c.l.b16 %v1196
    %v1736 = vunpack.c.h.b16 %v1196
    %v1737 = vunpack.c.l.b16 %v1197
    %v1738 = vunpack.c.h.b16 %v1197
    %v1739 = vunpack.c.l.b16 %v1198
    %v1740 = vunpack.c.h.b16 %v1198
    %v1741 = vunpack.c.l.b16 %v1199
    %v1742 = vunpack.c.h.b16 %v1199
    %v1743 = vunpack.c.l.b16 %v1200
    %v1744 = vunpack.c.h.b16 %v1200
    %v1745 = vunpack.c.l.b16 %v1201
    %v1746 = vunpack.c.h.b16 %v1201
    %v1747 = vunpack.c.l.b16 %v1202
    %v1748 = vunpack.c.h.b16 %v1202
    %v1749 = vunpack.c.l.b16 %v1203
    %v1750 = vunpack.c.h.b16 %v1203
    %v1751 = vunpack.c.l.b16 %v1204
    %v1752 = vunpack.c.h.b16 %v1204
    %v1753 = vunpack.c.l.b16 %v1205
    %v1754 = vunpack.c.h.b16 %v1205
    %v1755 = vunpack.c.l.b16 %v1206
    %v1756 = vunpack.c.h.b16 %v1206
    %v1757 = vunpack.c.l.b16 %v1207
    %v1758 = vunpack.c.h.b16 %v1207
    %v1759 = vunpack.c.l.b16 %v1208
    %v1760 = vunpack.c.h.b16 %v1208
    %v1761 = vunpack.c.l.b16 %v1209
    %v1762 = vunpack.c.h.b16 %v1209
    %v1763 = vunpack.c.l.b16 %v1210
    %v1764 = vunpack.c.h.b16 %v1210
    %v1765 = vunpack.c.l.b16 %v1211
    %v1766 = vunpack.c.h.b16 %v1211
    %v1767 = vunpack.c.l.b16 %v1212
    %v1768 = vunpack.c.h.b16 %v1212
    %v1769 = vunpack.c.l.b16 %v1213
    %v1770 = vunpack.c.h.b16 %v1213
    %v1771 = vunpack.c.l.b16 %v1214
    %v1772 = vunpack.c.h.b16 %v1214
    %v1773 = vunpack.c.l.b16 %v1215
    %v1774 = vunpack.c.h.b16 %v1215
    %v1775 = vunpack.c.l.b16 %v1216
    %v1776 = vunpack.c.h.b16 %v1216
    %v1777 = vunpack.c.l.b16 %v1217
    %v1778 = vunpack.c.h.b16 %v1217
    %v1779 = vunpack.c.l.b16 %v1218
    %v1780 = vunpack.c.h.b16 %v1218
    %v1781 = vunpack.c.l.b16 %v1219
    %v1782 = vunpack.c.h.b16 %v1219
    %v1783 = vunpack.c.l.b16 %v1220
    %v1784 = vunpack.c.h.b16 %v1220
    %v1785 = vunpack.c.l.b16 %v1221
    %v1786 = vunpack.c.h.b16 %v1221
    %v1787 = vunpack.c.l.b16 %v1222
    %v1788 = vunpack.c.h.b16 %v1222
    %v1789 = vunpack.c.l.b16 %v1223
    %v1790 = vunpack.c.h.b16 %v1223
    %v1791 = vunpack.c.l.b16 %v1224
    %v1792 = vunpack.c.h.b16 %v1224
    %v1793 = vunpack.c.l.b16 %v1225
    %v1794 = vunpack.c.h.b16 %v1225
    %v1795 = vunpack.c.l.b16 %v1226
    %v1796 = vunpack.c.h.b16 %v1226
    %v1797 = vunpack.c.l.b16 %v1227
    %v1798 = vunpack.c.h.b16 %v1227
    %v1799 = vunpack.c.l.b16 %v1228
    %v1800 = vunpack.c.h.b16 %v1228
    %v1801 = vunpack.c.l.b16 %v1229
    %v1802 = vunpack.c.h.b16 %v1229
    %v1803 = vunpack.c.l.b16 %v1230
    %v1804 = vunpack.c.h.b16 %v1230
    %v1805 = vunpack.c.l.b16 %v1231
    %v1806 = vunpack.c.h.b16 %v1231
    %v1807 = vunpack.c.l.b16 %v1232
    %v1808 = vunpack.c.h.b16 %v1232
    %v1809 = vunpack.c.l.b16 %v1233
    %v1810 = vunpack.c.h.b16 %v1233
    %v1811 = vunpack.c.l.b16 %v1234
    %v1812 = vunpack.c.h.b16 %v1234
    %v1813 = vunpack.c.l.b16 %v1235
    %v1814 = vunpack.c.h.b16 %v1235
    %v1815 = vunpack.c.l.b16 %v1236
    %v1816 = vunpack.c.h.b16 %v1236
    %v1817 = vunpack.c.l.b16 %v1237
    %v1818 = vunpack.c.h.b16 %v1237
    %v1819 = vunpack.c.l.b16 %v1238
    %v1820 = vunpack.c.h.b16 %v1238
    %v1821 = vunpack.c.l.b16 %v1239
    %v1822 = vunpack.c.h.b16 %v1239
    %v1823 = vunpack.c.l.b16 %v1240
    %v1824 = vunpack.c.h.b16 %v1240
    %v1825 = vunpack.c.l.b16 %v1241
    %v1826 = vunpack.c.h.b16 %v1241
    %v1827 = vunpack.c.l.b16 %v1242
    %v1828 = vunpack.c.h.b16 %v1242
    %v1829 = vunpack.c.l.b16 %v1243
    %v1830 = vunpack.c.h.b16 %v1243
    %v1831 = vunpack.c.l.b16 %v1244
    %v1832 = vunpack.c.h.b16 %v1244
    %v1833 = vunpack.c.l.b16 %v1245
    %v1834 = vunpack.c.h.b16 %v1245
    %v1835 = vunpack.c.l.b16 %v1246
    %v1836 = vunpack.c.h.b16 %v1246
    %v1837 = vunpack.c.l.b16 %v1247
    %v1838 = vunpack.c.h.b16 %v1247
    %v1839 = vunpack.c.l.b16 %v1248
    %v1840 = vunpack.c.h.b16 %v1248
    %v1841 = vunpack.c.l.b16 %v1249
    %v1842 = vunpack.c.h.b16 %v1249
    %v1843 = vunpack.c.l.b16 %v1250
    %v1844 = vunpack.c.h.b16 %v1250
    %v1845 = vunpack.c.l.b16 %v1251
    %v1846 = vunpack.c.h.b16 %v1251
    %v1847 = vunpack.c.l.b16 %v1252
    %v1848 = vunpack.c.h.b16 %v1252
    %v1849 = vunpack.c.l.b16 %v1253
    %v1850 = vunpack.c.h.b16 %v1253
    %v1851 = vunpack.c.l.b16 %v1254
    %v1852 = vunpack.c.h.b16 %v1254
    %v1853 = vunpack.c.l.b16 %v1255
    %v1854 = vunpack.c.h.b16 %v1255
    %v1855 = vunpack.c.l.b16 %v1256
    %v1856 = vunpack.c.h.b16 %v1256
    %v1857 = vunpack.c.l.b16 %v1257
    %v1858 = vunpack.c.h.b16 %v1257
    %v1859 = vunpack.c.l.b16 %v1258
    %v1860 = vunpack.c.h.b16 %v1258
    %v1861 = vunpack.c.l.b16 %v1259
    %v1862 = vunpack.c.h.b16 %v1259
    %v1863 = vunpack.c.l.b16 %v1260
    %v1864 = vunpack.c.h.b16 %v1260
    %v1865 = vunpack.c.l.b16 %v1261
    %v1866 = vunpack.c.h.b16 %v1261
    %v1867 = vunpack.c.l.b16 %v1262
    %v1868 = vunpack.c.h.b16 %v1262
    %v1869 = vunpack.c.l.b16 %v1263
    %v1870 = vunpack.c.h.b16 %v1263
    %v1871 = vunpack.c.l.b16 %v1264
    %v1872 = vunpack.c.h.b16 %v1264
    %v1873 = vunpack.c.l.b16 %v1265
    %v1874 = vunpack.c.h.b16 %v1265
    %v1875 = vunpack.c.l.b16 %v1266
    %v1876 = vunpack.c.h.b16 %v1266
    %v1877 = vunpack.c.l.b16 %v1267
    %v1878 = vunpack.c.h.b16 %v1267
    %v1879 = vunpack.c.l.b16 %v1268
    %v1880 = vunpack.c.h.b16 %v1268
    %v1881 = vunpack.c.l.b16 %v1269
    %v1882 = vunpack.c.h.b16 %v1269
    %v1883 = vunpack.c.l.b16 %v1270
    %v1884 = vunpack.c.h.b16 %v1270
    %v1885 = vunpack.c.l.b16 %v1271
    %v1886 = vunpack.c.h.b16 %v1271
    %v1887 = vunpack.c.l.b16 %v1272
    %v1888 = vunpack.c.h.b16 %v1272
    %v1889 = vunpack.c.l.b16 %v1273
    %v1890 = vunpack.c.h.b16 %v1273
    %v1891 = vunpack.c.l.b16 %v1274
    %v1892 = vunpack.c.h.b16 %v1274
    %v1893 = vunpack.c.l.b16 %v1275
    %v1894 = vunpack.c.h.b16 %v1275
    %v1895 = vunpack.c.l.b16 %v1276
    %v1896 = vunpack.c.h.b16 %v1276
    %v1897 = vunpack.c.l.b16 %v1277
    %v1898 = vunpack.c.h.b16 %v1277
    %v1899 = vunpack.c.l.b16 %v1278
    %v1900 = vunpack.c.h.b16 %v1278
    %v1901 = vunpack.c.l.b16 %v1279
    %v1902 = vunpack.c.h.b16 %v1279
    %v1903 = vunpack.c.l.b16 %v1280
    %v1904 = vunpack.c.h.b16 %v1280
    %v1905 = vunpack.c.l.b16 %v1281
    %v1906 = vunpack.c.h.b16 %v1281
    %v1907 = vunpack.c.l.b16 %v1282
    %v1908 = vunpack.c.h.b16 %v1282
    %v1909 = vunpack.c.l.b16 %v1283
    %v1910 = vunpack.c.h.b16 %v1283
    %v1911 = vunpack.c.l.b16 %v1284
    %v1912 = vunpack.c.h.b16 %v1284
    %v1913 = vunpack.c.l.b16 %v1285
    %v1914 = vunpack.c.h.b16 %v1285
    %v1915 = vunpack.c.l.b16 %v1286
    %v1916 = vunpack.c.h.b16 %v1286
    %v1917 = vunpack.c.l.b16 %v1287
    %v1918 = vunpack.c.h.b16 %v1287
    %v1919 = vunpack.c.l.b16 %v1288
    %v1920 = vunpack.c.h.b16 %v1288
    %v1921 = vunpack.c.l.b16 %v1289
    %v1922 = vunpack.c.h.b16 %v1289
    %v1923 = vunpack.c.l.b16 %v1290
    %v1924 = vunpack.c.h.b16 %v1290
    %v1925 = vunpack.c.l.b16 %v1291
    %v1926 = vunpack.c.h.b16 %v1291
    %v1927 = vunpack.c.l.b16 %v1292
    %v1928 = vunpack.c.h.b16 %v1292
    %v1929 = vunpack.c.l.b16 %v1293
    %v1930 = vunpack.c.h.b16 %v1293
    %v1931 = vunpack.c.l.b16 %v1294
    %v1932 = vunpack.c.h.b16 %v1294
    %v1933 = vunpack.c.l.b16 %v1295
    %v1934 = vunpack.c.h.b16 %v1295
    %v1935 = vunpack.c.l.b16 %v1296
    %v1936 = vunpack.c.h.b16 %v1296
    %v1937 = vunpack.c.l.b16 %v1297
    %v1938 = vunpack.c.h.b16 %v1297
    %v1939 = vunpack.c.l.b16 %v1298
    %v1940 = vunpack.c.h.b16 %v1298
    %v1941 = vunpack.c.l.b16 %v1299
    %v1942 = vunpack.c.h.b16 %v1299
    %v1943 = vunpack.c.l.b16 %v1300
    %v1944 = vunpack.c.h.b16 %v1300
    %v1945 = vunpack.c.l.b16 %v1301
    %v1946 = vunpack.c.h.b16 %v1301
    %v1947 = vunpack.c.l.b16 %v1302
    %v1948 = vunpack.c.h.b16 %v1302
    %v1949 = vunpack.c.l.b16 %v1303
    %v1950 = vunpack.c.h.b16 %v1303
    %v1951 = vunpack.c.l.b16 %v1304
    %v1952 = vunpack.c.h.b16 %v1304
    %v1953 = vunpack.c.l.b16 %v1305
    %v1954 = vunpack.c.h.b16 %v1305
    %v1955 = vunpack.c.l.b16 %v1306
    %v1956 = vunpack.c.h.b16 %v1306
    %v1957 = vunpack.c.l.b16 %v1307
    %v1958 = vunpack.c.h.b16 %v1307
    %v1959 = vunpack.c.l.b16 %v1308
    %v1960 = vunpack.c.h.b16 %v1308
    %v1961 = vunpack.c.l.b16 %v1309
    %v1962 = vunpack.c.h.b16 %v1309
    %v1963 = vunpack.c.l.b16 %v1310
    %v1964 = vunpack.c.h.b16 %v1310
    %v1965 = vunpack.c.l.b16 %v1311
    %v1966 = vunpack.c.h.b16 %v1311
    %v1967 = vunpack.c.l.b16 %v1312
    %v1968 = vunpack.c.h.b16 %v1312
    %v1969 = vunpack.c.l.b16 %v1313
    %v1970 = vunpack.c.h.b16 %v1313
    %v1971 = vunpack.c.l.b16 %v1314
    %v1972 = vunpack.c.h.b16 %v1314
    %v1973 = vunpack.c.l.b16 %v1315
    %v1974 = vunpack.c.h.b16 %v1315
    %v1975 = vunpack.c.l.b16 %v1316
    %v1976 = vunpack.c.h.b16 %v1316
    %v1977 = vunpack.c.l.b16 %v1317
    %v1978 = vunpack.c.h.b16 %v1317
    %v1979 = vunpack.c.l.b16 %v1318
    %v1980 = vunpack.c.h.b16 %v1318
    %v1981 = vunpack.c.l.b16 %v1319
    %v1982 = vunpack.c.h.b16 %v1319
    %v1983 = vunpack.c.l.b16 %v1320
    %v1984 = vunpack.c.h.b16 %v1320
    %v1985 = vunpack.c.l.b16 %v1321
    %v1986 = vunpack.c.h.b16 %v1321
    %v1987 = vunpack.c.l.b16 %v1322
    %v1988 = vunpack.c.h.b16 %v1322
    %v1989 = vunpack.c.l.b16 %v1323
    %v1990 = vunpack.c.h.b16 %v1323
    %v1991 = vunpack.c.l.b16 %v1324
    %v1992 = vunpack.c.h.b16 %v1324
    %v1993 = vunpack.c.l.b16 %v1325
    %v1994 = vunpack.c.h.b16 %v1325
    %v1995 = vunpack.c.l.b16 %v1326
    %v1996 = vunpack.c.h.b16 %v1326
    %v1997 = vunpack.c.l.b16 %v1327
    %v1998 = vunpack.c.h.b16 %v1327
    %v1999 = vunpack.c.l.b16 %v1328
    %v2000 = vunpack.c.h.b16 %v1328
    %v2001 = vunpack.c.l.b16 %v1329
    %v2002 = vunpack.c.h.b16 %v1329
    %v2003 = vunpack.c.l.b16 %v1330
    %v2004 = vunpack.c.h.b16 %v1330
    %v2005 = vunpack.c.l.b16 %v1331
    %v2006 = vunpack.c.h.b16 %v1331
    %v2007 = vunpack.c.l.b16 %v1332
    %v2008 = vunpack.c.h.b16 %v1332
    %v2009 = vunpack.c.l.b16 %v1333
    %v2010 = vunpack.c.h.b16 %v1333
    %v2011 = vunpack.c.l.b16 %v1334
    %v2012 = vunpack.c.h.b16 %v1334
    %v2013 = vunpack.c.l.b16 %v1335
    %v2014 = vunpack.c.h.b16 %v1335
    %v2015 = vunpack.c.l.b16 %v1336
    %v2016 = vunpack.c.h.b16 %v1336
    %v2017 = vunpack.c.l.b16 %v1337
    %v2018 = vunpack.c.h.b16 %v1337
    %v2019 = vunpack.c.l.b16 %v1338
    %v2020 = vunpack.c.h.b16 %v1338
    %v2021 = vunpack.c.l.b16 %v1339
    %v2022 = vunpack.c.h.b16 %v1339
    %v2023 = vunpack.c.l.b16 %v1340
    %v2024 = vunpack.c.h.b16 %v1340
    %v2025 = vunpack.c.l.b16 %v1341
    %v2026 = vunpack.c.h.b16 %v1341
    %v2027 = vunpack.c.l.b16 %v1342
    %v2028 = vunpack.c.h.b16 %v1342
    %v2029 = vunpack.c.l.b16 %v1343
    %v2030 = vunpack.c.h.b16 %v1343
    %v2031 = vunpack.c.l.b16 %v1344
    %v2032 = vunpack.c.h.b16 %v1344
    %v2033 = vunpack.c.l.b16 %v1345
    %v2034 = vunpack.c.h.b16 %v1345
    %v2035 = vunpack.c.l.b16 %v1346
    %v2036 = vunpack.c.h.b16 %v1346
    %v2037 = vunpack.c.l.b16 %v1347
    %v2038 = vunpack.c.h.b16 %v1347
    %v2039 = vunpack.c.l.b16 %v1348
    %v2040 = vunpack.c.h.b16 %v1348
    %v2041 = vunpack.c.l.b16 %v1349
    %v2042 = vunpack.c.h.b16 %v1349
    %v2043 = vunpack.c.l.b16 %v1350
    %v2044 = vunpack.c.h.b16 %v1350
    %v2045 = vunpack.c.l.b16 %v1351
    %v2046 = vunpack.c.h.b16 %v1351
    %v2047 = vunpack.c.l.b16 %v1352
    %v2048 = vunpack.c.h.b16 %v1352
    %v2049 = vunpack.c.l.b16 %v1353
    %v2050 = vunpack.c.h.b16 %v1353
    %v2051 = vunpack.c.l.b16 %v1354
    %v2052 = vunpack.c.h.b16 %v1354
    %v2053 = vunpack.c.l.b16 %v1355
    %v2054 = vunpack.c.h.b16 %v1355
    %v2055 = vunpack.c.l.b16 %v1356
    %v2056 = vunpack.c.h.b16 %v1356
    %v2057 = vunpack.c.l.b16 %v1357
    %v2058 = vunpack.c.h.b16 %v1357
    %v2059 = vunpack.c.l.b16 %v1358
    %v2060 = vunpack.c.h.b16 %v1358
    %v2061 = vunpack.c.l.b16 %v1359
    %v2062 = vunpack.c.h.b16 %v1359
    %v2063 = vunpack.c.l.b16 %v1360
    %v2064 = vunpack.c.h.b16 %v1360
    %v2065 = vunpack.c.l.b16 %v1361
    %v2066 = vunpack.c.h.b16 %v1361
    %v2067 = vunpack.c.l.b16 %v1362
    %v2068 = vunpack.c.h.b16 %v1362
    %v2069 = vunpack.c.l.b16 %v1363
    %v2070 = vunpack.c.h.b16 %v1363
    %v2071 = vunpack.c.l.b16 %v1364
    %v2072 = vunpack.c.h.b16 %v1364
    %v2073 = vunpack.c.l.b16 %v1365
    %v2074 = vunpack.c.h.b16 %v1365
    %v2075 = vunpack.c.l.b16 %v1366
    %v2076 = vunpack.c.h.b16 %v1366
    %v2077 = vunpack.c.l.b16 %v1367
    %v2078 = vunpack.c.h.b16 %v1367
    %v2079 = vunpack.c.l.b16 %v1368
    %v2080 = vunpack.c.h.b16 %v1368
    %v2081 = vunpack.c.l.b16 %v1369
    %v2082 = vunpack.c.h.b16 %v1369
    %v2083 = vunpack.c.l.b16 %v1370
    %v2084 = vunpack.c.h.b16 %v1370
    %v2085 = vunpack.c.l.b16 %v1371
    %v2086 = vunpack.c.h.b16 %v1371
    %v2087 = vunpack.c.l.b16 %v1372
    %v2088 = vunpack.c.h.b16 %v1372
    %v2089 = vunpack.c.l.b16 %v1373
    %v2090 = vunpack.c.h.b16 %v1373
    %v2091 = vunpack.c.l.b16 %v1374
    %v2092 = vunpack.c.h.b16 %v1374
    %v2093 = vunpack.c.l.b16 %v1375
    %v2094 = vunpack.c.h.b16 %v1375
    %v2095 = vunpack.c.l.b16 %v1376
    %v2096 = vunpack.c.h.b16 %v1376
    %v2097 = vunpack.c.l.b16 %v1377
    %v2098 = vunpack.c.h.b16 %v1377
    %v2099 = vunpack.c.l.b16 %v1378
    %v2100 = vunpack.c.h.b16 %v1378
    %v2101 = vunpack.c.l.b16 %v1379
    %v2102 = vunpack.c.h.b16 %v1379
    %v2103 = vunpack.c.l.b16 %v1380
    %v2104 = vunpack.c.h.b16 %v1380
    %v2105 = vunpack.c.l.b16 %v1381
    %v2106 = vunpack.c.h.b16 %v1381
    %v2107 = vunpack.c.l.b16 %v1382
    %v2108 = vunpack.c.h.b16 %v1382
    %v2109 = vunpack.c.l.b16 %v1383
    %v2110 = vunpack.c.h.b16 %v1383
    %v2111 = vunpack.c.l.b16 %v1384
    %v2112 = vunpack.c.h.b16 %v1384
    %v2113 = vunpack.c.l.b16 %v1385
    %v2114 = vunpack.c.h.b16 %v1385
    %v2115 = vunpack.c.l.b16 %v1386
    %v2116 = vunpack.c.h.b16 %v1386
    %v2117 = vunpack.c.l.b16 %v1387
    %v2118 = vunpack.c.h.b16 %v1387
    %v2119 = vunpack.c.l.b16 %v1388
    %v2120 = vunpack.c.h.b16 %v1388
    %v2121 = vunpack.c.l.b16 %v1389
    %v2122 = vunpack.c.h.b16 %v1389
    %v2123 = vunpack.c.l.b16 %v1390
    %v2124 = vunpack.c.h.b16 %v1390
    %v2125 = vunpack.c.l.b16 %v1391
    %v2126 = vunpack.c.h.b16 %v1391
    %v2127 = vunpack.c.l.b16 %v1392
    %v2128 = vunpack.c.h.b16 %v1392
    %v2129 = vunpack.c.l.b16 %v1393
    %v2130 = vunpack.c.h.b16 %v1393
    %v2131 = vunpack.c.l.b16 %v1394
    %v2132 = vunpack.c.h.b16 %v1394
    %v2133 = vunpack.c.l.b16 %v1395
    %v2134 = vunpack.c.h.b16 %v1395
    %v2135 = vunpack.c.l.b16 %v1396
    %v2136 = vunpack.c.h.b16 %v1396
    %v2137 = vunpack.c.l.b16 %v1397
    %v2138 = vunpack.c.h.b16 %v1397
    %v2139 = vunpack.c.l.b16 %v1398
    %v2140 = vunpack.c.h.b16 %v1398
    %v2141 = vunpack.c.l.b16 %v1399
    %v2142 = vunpack.c.h.b16 %v1399
    %v2143 = vunpack.c.l.b16 %v1400
    %v2144 = vunpack.c.h.b16 %v1400
    %v2145 = vunpack.c.l.b16 %v1401
    %v2146 = vunpack.c.h.b16 %v1401
    %v2147 = vunpack.c.l.b16 %v1402
    %v2148 = vunpack.c.h.b16 %v1402
    %v2149 = vunpack.c.l.b16 %v1403
    %v2150 = vunpack.c.h.b16 %v1403
    %v2151 = vunpack.c.l.b16 %v1404
    %v2152 = vunpack.c.h.b16 %v1404
    %v2153 = vunpack.c.l.b16 %v1405
    %v2154 = vunpack.c.h.b16 %v1405
    %v2155 = vunpack.c.l.b16 %v1406
    %v2156 = vunpack.c.h.b16 %v1406
    %v2157 = vunpack.c.l.b16 %v1407
    %v2158 = vunpack.c.h.b16 %v1407
    %v2159 = vunpack.c.l.b16 %v1408
    %v2160 = vunpack.c.h.b16 %v1408
    %v2161 = vunpack.c.l.b16 %v1409
    %v2162 = vunpack.c.h.b16 %v1409
    %v2163 = vunpack.c.l.b16 %v1410
    %v2164 = vunpack.c.h.b16 %v1410
    %v2165 = vunpack.c.l.b16 %v1411
    %v2166 = vunpack.c.h.b16 %v1411
    %v2167 = vunpack.c.l.b16 %v1412
    %v2168 = vunpack.c.h.b16 %v1412
    %v2169 = vunpack.c.l.b16 %v1413
    %v2170 = vunpack.c.h.b16 %v1413
    %v2171 = vunpack.c.l.b16 %v1414
    %v2172 = vunpack.c.h.b16 %v1414
    %v2173 = vunpack.c.l.b16 %v1415
    %v2174 = vunpack.c.h.b16 %v1415
    %v2175 = vunpack.c.l.b16 %v1416
    %v2176 = vunpack.c.h.b16 %v1416
    %v2177 = vunpack.c.l.b16 %v1417
    %v2178 = vunpack.c.h.b16 %v1417
    %v2179 = vunpack.c.l.b16 %v1418
    %v2180 = vunpack.c.h.b16 %v1418
    %v2181 = vunpack.c.l.b16 %v1419
    %v2182 = vunpack.c.h.b16 %v1419
    %v2183 = vunpack.c.l.b16 %v1420
    %v2184 = vunpack.c.h.b16 %v1420
    %v2185 = vunpack.c.l.b16 %v1421
    %v2186 = vunpack.c.h.b16 %v1421
    %v2187 = vunpack.c.l.b16 %v1422
    %v2188 = vunpack.c.h.b16 %v1422
    %v2189 = vunpack.c.l.b16 %v1423
    %v2190 = vunpack.c.h.b16 %v1423
    %v2191 = vunpack.c.l.b16 %v1424
    %v2192 = vunpack.c.h.b16 %v1424
    %v2193 = vpack.c.b16 %v1689, %v1681
    %v2194 = vpack.c.b16 %v1690, %v1682
    %v2195 = vpack.c.b16 %v1691, %v1683
    %v2196 = vpack.c.b16 %v1692, %v1684
    %v2197 = vpack.c.b16 %v1693, %v1685
    %v2198 = vpack.c.b16 %v1694, %v1686
    %v2199 = vpack.c.b16 %v1695, %v1687
    %v2200 = vpack.c.b16 %v1696, %v1688
    %v2201 = vpack.c.b16 %v1705, %v1697
    %v2202 = vpack.c.b16 %v1706, %v1698
    %v2203 = vpack.c.b16 %v1707, %v1699
    %v2204 = vpack.c.b16 %v1708, %v1700
    %v2205 = vpack.c.b16 %v1709, %v1701
    %v2206 = vpack.c.b16 %v1710, %v1702
    %v2207 = vpack.c.b16 %v1711, %v1703
    %v2208 = vpack.c.b16 %v1712, %v1704
    %v2209 = vpack.c.b16 %v1721, %v1713
    %v2210 = vpack.c.b16 %v1722, %v1714
    %v2211 = vpack.c.b16 %v1723, %v1715
    %v2212 = vpack.c.b16 %v1724, %v1716
    %v2213 = vpack.c.b16 %v1725, %v1717
    %v2214 = vpack.c.b16 %v1726, %v1718
    %v2215 = vpack.c.b16 %v1727, %v1719
    %v2216 = vpack.c.b16 %v1728, %v1720
    %v2217 = vpack.c.b16 %v1737, %v1729
    %v2218 = vpack.c.b16 %v1738, %v1730
    %v2219 = vpack.c.b16 %v1739, %v1731
    %v2220 = vpack.c.b16 %v1740, %v1732
    %v2221 = vpack.c.b16 %v1741, %v1733
    %v2222 = vpack.c.b16 %v1742, %v1734
    %v2223 = vpack.c.b16 %v1743, %v1735
    %v2224 = vpack.c.b16 %v1744, %v1736
    %v2225 = vpack.c.b16 %v1753, %v1745
    %v2226 = vpack.c.b16 %v1754, %v1746
    %v2227 = vpack.c.b16 %v1755, %v1747
    %v2228 = vpack.c.b16 %v1756, %v1748
    %v2229 = vpack.c.b16 %v1757, %v1749
    %v2230 = vpack.c.b16 %v1758, %v1750
    %v2231 = vpack.c.b16 %v1759, %v1751
    %v2232 = vpack.c.b16 %v1760, %v1752
    %v2233 = vpack.c.b16 %v1769, %v1761
    %v2234 = vpack.c.b16 %v1770, %v1762
    %v2235 = vpack.c.b16 %v1771, %v1763
    %v2236 = vpack.c.b16 %v1772, %v1764
    %v2237 = vpack.c.b16 %v1773, %v1765
    %v2238 = vpack.c.b16 %v1774, %v1766
    %v2239 = vpack.c.b16 %v1775, %v1767
    %v2240 = vpack.c.b16 %v1776, %v1768
    %v2241 = vpack.c.b16 %v1785, %v1777
    %v2242 = vpack.c.b16 %v1786, %v1778
    %v2243 = vpack.c.b16 %v1787, %v1779
    %v2244 = vpack.c.b16 %v1788, %v1780
    %v2245 = vpack.c.b16 %v1789, %v1781
    %v2246 = vpack.c.b16 %v1790, %v1782
    %v2247 = vpack.c.b16 %v1791, %v1783
    %v2248 = vpack.c.b16 %v1792, %v1784
    %v2249 = vpack.c.b16 %v1801, %v1793
    %v2250 = vpack.c.b16 %v1802, %v1794
    %v2251 = vpack.c.b16 %v1803, %v1795
    %v2252 = vpack.c.b16 %v1804, %v1796
    %v2253 = vpack.c.b16 %v1805, %v1797
    %v2254 = vpack.c.b16 %v1806, %v1798
    %v2255 = vpack.c.b16 %v1807, %v1799
    %v2256 = vpack.c.b16 %v1808, %v1800
    %v2257 = vpack.c.b16 %v1817, %v1809
    %v2258 = vpack.c.b16 %v1818, %v1810
    %v2259 = vpack.c.b16 %v1819, %v1811
    %v2260 = vpack.c.b16 %v1820, %v1812
    %v2261 = vpack.c.b16 %v1821, %v1813
    %v2262 = vpack.c.b16 %v1822, %v1814
    %v2263 = vpack.c.b16 %v1823, %v1815
    %v2264 = vpack.c.b16 %v1824, %v1816
    %v2265 = vpack.c.b16 %v1833, %v1825
    %v2266 = vpack.c.b16 %v1834, %v1826
    %v2267 = vpack.c.b16 %v1835, %v1827
    %v2268 = vpack.c.b16 %v1836, %v1828
    %v2269 = vpack.c.b16 %v1837, %v1829
    %v2270 = vpack.c.b16 %v1838, %v1830
    %v2271 = vpack.c.b16 %v1839, %v1831
    %v2272 = vpack.c.b16 %v1840, %v1832
    %v2273 = vpack.c.b16 %v1849, %v1841
    %v2274 = vpack.c.b16 %v1850, %v1842
    %v2275 = vpack.c.b16 %v1851, %v1843
    %v2276 = vpack.c.b16 %v1852, %v1844
    %v2277 = vpack.c.b16 %v1853, %v1845
    %v2278 = vpack.c.b16 %v1854, %v1846
    %v2279 = vpack.c.b16 %v1855, %v1847
    %v2280 = vpack.c.b16 %v1856, %v1848
    %v2281 = vpack.c.b16 %v1865, %v1857
    %v2282 = vpack.c.b16 %v1866, %v1858
    %v2283 = vpack.c.b16 %v1867, %v1859
    %v2284 = vpack.c.b16 %v1868, %v1860
    %v2285 = vpack.c.b16 %v1869, %v1861
    %v2286 = vpack.c.b16 %v1870, %v1862
    %v2287 = vpack.c.b16 %v1871, %v1863
    %v2288 = vpack.c.b16 %v1872, %v1864
    %v2289 = vpack.c.b16 %v1881, %v1873
    %v2290 = vpack.c.b16 %v1882, %v1874
    %v2291 = vpack.c.b16 %v1883, %v1875
    %v2292 = vpack.c.b16 %v1884, %v1876
    %v2293 = vpack.c.b16 %v1885, %v1877
    %v2294 = vpack.c.b16 %v1886, %v1878
    %v2295 = vpack.c.b16 %v1887, %v1879
    %v2296 = vpack.c.b16 %v1888, %v1880
    %v2297 = vpack.c.b16 %v1897, %v1889
    %v2298 = vpack.c.b16 %v1898, %v1890
    %v2299 = vpack.c.b16 %v1899, %v1891
    %v2300 = vpack.c.b16 %v1900, %v1892
    %v2301 = vpack.c.b16 %v1901, %v1893
    %v2302 = vpack.c.b16 %v1902, %v1894
    %v2303 = vpack.c.b16 %v1903, %v1895
    %v2304 = vpack.c.b16 %v1904, %v1896
    %v2305 = vpack.c.b16 %v1913, %v1905
    %v2306 = vpack.c.b16 %v1914, %v1906
    %v2307 = vpack.c.b16 %v1915, %v1907
    %v2308 = vpack.c.b16 %v1916, %v1908
    %v2309 = vpack.c.b16 %v1917, %v1909
    %v2310 = vpack.c.b16 %v1918, %v1910
    %v2311 = vpack.c.b16 %v1919, %v1911
    %v2312 = vpack.c.b16 %v1920, %v1912
    %v2313 = vpack.c.b16 %v1929, %v1921
    %v2314 = vpack.c.b16 %v1930, %v1922
    %v2315 = vpack.c.b16 %v1931, %v1923
    %v2316 = vpack.c.b16 %v1932, %v1924
    %v2317 = vpack.c.b16 %v1933, %v1925
    %v2318 = vpack.c.b16 %v1934, %v1926
    %v2319 = vpack.c.b16 %v1935, %v1927
    %v2320 = vpack.c.b16 %v1936, %v1928
    %v2321 = vpack.c.b16 %v1945, %v1937
    %v2322 = vpack.c.b16 %v1946, %v1938
    %v2323 = vpack.c.b16 %v1947, %v1939
    %v2324 = vpack.c.b16 %v1948, %v1940
    %v2325 = vpack.c.b16 %v1949, %v1941
    %v2326 = vpack.c.b16 %v1950, %v1942
    %v2327 = vpack.c.b16 %v1951, %v1943
    %v2328 = vpack.c.b16 %v1952, %v1944
    %v2329 = vpack.c.b16 %v1961, %v1953
    %v2330 = vpack.c.b16 %v1962, %v1954
    %v2331 = vpack.c.b16 %v1963, %v1955
    %v2332 = vpack.c.b16 %v1964, %v1956
    %v2333 = vpack.c.b16 %v1965, %v1957
    %v2334 = vpack.c.b16 %v1966, %v1958
    %v2335 = vpack.c.b16 %v1967, %v1959
    %v2336 = vpack.c.b16 %v1968, %v1960
    %v2337 = vpack.c.b16 %v1977, %v1969
    %v2338 = vpack.c.b16 %v1978, %v1970
    %v2339 = vpack.c.b16 %v1979, %v1971
    %v2340 = vpack.c.b16 %v1980, %v1972
    %v2341 = vpack.c.b16 %v1981, %v1973
    %v2342 = vpack.c.b16 %v1982, %v1974
    %v2343 = vpack.c.b16 %v1983, %v1975
    %v2344 = vpack.c.b16 %v1984, %v1976
    %v2345 = vpack.c.b16 %v1993, %v1985
    %v2346 = vpack.c.b16 %v1994, %v1986
    %v2347 = vpack.c.b16 %v1995, %v1987
    %v2348 = vpack.c.b16 %v1996, %v1988
    %v2349 = vpack.c.b16 %v1997, %v1989
    %v2350 = vpack.c.b16 %v1998, %v1990
    %v2351 = vpack.c.b16 %v1999, %v1991
    %v2352 = vpack.c.b16 %v2000, %v1992
    %v2353 = vpack.c.b16 %v2009, %v2001
    %v2354 = vpack.c.b16 %v2010, %v2002
    %v2355 = vpack.c.b16 %v2011, %v2003
    %v2356 = vpack.c.b16 %v2012, %v2004
    %v2357 = vpack.c.b16 %v2013, %v2005
    %v2358 = vpack.c.b16 %v2014, %v2006
    %v2359 = vpack.c.b16 %v2015, %v2007
    %v2360 = vpack.c.b16 %v2016, %v2008
    %v2361 = vpack.c.b16 %v2025, %v2017
    %v2362 = vpack.c.b16 %v2026, %v2018
    %v2363 = vpack.c.b16 %v2027, %v2019
    %v2364 = vpack.c.b16 %v2028, %v2020
    %v2365 = vpack.c.b16 %v2029, %v2021
    %v2366 = vpack.c.b16 %v2030, %v2022
    %v2367 = vpack.c.b16 %v2031, %v2023
    %v2368 = vpack.c.b16 %v2032, %v2024
    %v2369 = vpack.c.b16 %v2041, %v2033
    %v2370 = vpack.c.b16 %v2042, %v2034
    %v2371 = vpack.c.b16 %v2043, %v2035
    %v2372 = vpack.c.b16 %v2044, %v2036
    %v2373 = vpack.c.b16 %v2045, %v2037
    %v2374 = vpack.c.b16 %v2046, %v2038
    %v2375 = vpack.c.b16 %v2047, %v2039
    %v2376 = vpack.c.b16 %v2048, %v2040
    %v2377 = vpack.c.b16 %v2057, %v2049
    %v2378 = vpack.c.b16 %v2058, %v2050
    %v2379 = vpack.c.b16 %v2059, %v2051
    %v2380 = vpack.c.b16 %v2060, %v2052
    %v2381 = vpack.c.b16 %v2061, %v2053
    %v2382 = vpack.c.b16 %v2062, %v2054
    %v2383 = vpack.c.b16 %v2063, %v2055
    %v2384 = vpack.c.b16 %v2064, %v2056
    %v2385 = vpack.c.b16 %v2073, %v2065
    %v2386 = vpack.c.b16 %v2074, %v2066
    %v2387 = vpack.c.b16 %v2075, %v2067
    %v2388 = vpack.c.b16 %v2076, %v2068
    %v2389 = vpack.c.b16 %v2077, %v2069
    %v2390 = vpack.c.b16 %v2078, %v2070
    %v2391 = vpack.c.b16 %v2079, %v2071
    %v2392 = vpack.c.b16 %v2080, %v2072
    %v2393 = vpack.c.b16 %v2089, %v2081
    %v2394 = vpack.c.b16 %v2090, %v2082
    %v2395 = vpack.c.b16 %v2091, %v2083
    %v2396 = vpack.c.b16 %v2092, %v2084
    %v2397 = vpack.c.b16 %v2093, %v2085
    %v2398 = vpack.c.b16 %v2094, %v2086
    %v2399 = vpack.c.b16 %v2095, %v2087
    %v2400 = vpack.c.b16 %v2096, %v2088
    %v2401 = vpack.c.b16 %v2105, %v2097
    %v2402 = vpack.c.b16 %v2106, %v2098
    %v2403 = vpack.c.b16 %v2107, %v2099
    %v2404 = vpack.c.b16 %v2108, %v2100
    %v2405 = vpack.c.b16 %v2109, %v2101
    %v2406 = vpack.c.b16 %v2110, %v2102
    %v2407 = vpack.c.b16 %v2111, %v2103
    %v2408 = vpack.c.b16 %v2112, %v2104
    %v2409 = vpack.c.b16 %v2121, %v2113
    %v2410 = vpack.c.b16 %v2122, %v2114
    %v2411 = vpack.c.b16 %v2123, %v2115
    %v2412 = vpack.c.b16 %v2124, %v2116
    %v2413 = vpack.c.b16 %v2125, %v2117
    %v2414 = vpack.c.b16 %v2126, %v2118
    %v2415 = vpack.c.b16 %v2127, %v2119
    %v2416 = vpack.c.b16 %v2128, %v2120
    %v2417 = vpack.c.b16 %v2137, %v2129
    %v2418 = vpack.c.b16 %v2138, %v2130
    %v2419 = vpack.c.b16 %v2139, %v2131
    %v2420 = vpack.c.b16 %v2140, %v2132
    %v2421 = vpack.c.b16 %v2141, %v2133
    %v2422 = vpack.c.b16 %v2142, %v2134
    %v2423 = vpack.c.b16 %v2143, %v2135
    %v2424 = vpack.c.b16 %v2144, %v2136
    %v2425 = vpack.c.b16 %v2153, %v2145
    %v2426 = vpack.c.b16 %v2154, %v2146
    %v2427 = vpack.c.b16 %v2155, %v2147
    %v2428 = vpack.c.b16 %v2156, %v2148
    %v2429 = vpack.c.b16 %v2157, %v2149
    %v2430 = vpack.c.b16 %v2158, %v2150
    %v2431 = vpack.c.b16 %v2159, %v2151
    %v2432 = vpack.c.b16 %v2160, %v2152
    %v2433 = vpack.c.b16 %v2169, %v2161
    %v2434 = vpack.c.b16 %v2170, %v2162
    %v2435 = vpack.c.b16 %v2171, %v2163
    %v2436 = vpack.c.b16 %v2172, %v2164
    %v2437 = vpack.c.b16 %v2173, %v2165
    %v2438 = vpack.c.b16 %v2174, %v2166
    %v2439 = vpack.c.b16 %v2175, %v2167
    %v2440 = vpack.c.b16 %v2176, %v2168
    %v2441 = vpack.c.b16 %v2185, %v2177
    %v2442 = vpack.c.b16 %v2186, %v2178
    %v2443 = vpack.c.b16 %v2187, %v2179
    %v2444 = vpack.c.b16 %v2188, %v2180
    %v2445 = vpack.c.b16 %v2189, %v2181
    %v2446 = vpack.c.b16 %v2190, %v2182
    %v2447 = vpack.c.b16 %v2191, %v2183
    %v2448 = vpack.c.b16 %v2192, %v2184
    %2705 = vmatprep.subr.bf16.mxu0 %v2194
    %2706 = vmatpush1.bf16.msra.mxu0 %v2193
    %2707 = vmatprep.subr.bf16.mxu0 %v2202
    %2708 = vmatpush1.bf16.msra.mxu0 %v2201
    %2709 = vmatprep.subr.bf16.mxu0 %v2210
    %2710 = vmatpush1.bf16.msra.mxu0 %v2209
    %2711 = vmatprep.subr.bf16.mxu0 %v2218
    %2712 = vmatpush1.bf16.msra.mxu0 %v2217
    %2713 = vmatprep.subr.bf16.mxu0 %v2226
    %2714 = vmatpush1.bf16.msra.mxu0 %v2225
    %2715 = vmatprep.subr.bf16.mxu0 %v2234
    %2716 = vmatpush1.bf16.msra.mxu0 %v2233
    %2717 = vmatprep.subr.bf16.mxu0 %v2242
    %2718 = vmatpush1.bf16.msra.mxu0 %v2241
    %2719 = vmatprep.subr.bf16.mxu0 %v2250
    %2720 = vmatpush1.bf16.msra.mxu0 %v2249
    %2721 = vmatprep.subr.bf16.mxu0 %v2258
    %2722 = vmatpush1.bf16.msra.mxu0 %v2257
    %2723 = vmatprep.subr.bf16.mxu0 %v2266
    %2724 = vmatpush1.bf16.msra.mxu0 %v2265
    %2725 = vmatprep.subr.bf16.mxu0 %v2274
    %2726 = vmatpush1.bf16.msra.mxu0 %v2273
    %2727 = vmatprep.subr.bf16.mxu0 %v2282
    %2728 = vmatpush1.bf16.msra.mxu0 %v2281
    %2729 = vmatprep.subr.bf16.mxu0 %v2290
    %2730 = vmatpush1.bf16.msra.mxu0 %v2289
    %2731 = vmatprep.subr.bf16.mxu0 %v2298
    %2732 = vmatpush1.bf16.msra.mxu0 %v2297
    %2733 = vmatprep.subr.bf16.mxu0 %v2306
    %2734 = vmatpush1.bf16.msra.mxu0 %v2305
    %2735 = vmatprep.subr.bf16.mxu0 %v2314
    %2736 = vmatpush1.bf16.msra.mxu0 %v2313
    %2737 = vmatprep.mubr.bf16.mxu0 %v1166
    %2738 = vmatmul.mubr.bf16.gmra.mrb[0].mxu0 %v1165
    %v2739 = vpop.f32.mrb[0].mxu0
    %v2740 = vadd.f32 0.0, %v2739
    %v2741 = vpop.f32.mrb[0].mxu0
    %v2742 = vadd.f32 0.0, %v2741
    %v2743 = vpop.f32.mrb[0].mxu0
    %v2744 = vpop.f32.mrb[0].mxu0
    %2745 = vdwg.mxu0
    %2746 = vmatprep.subr.bf16.mxu0 %v2322
    %2747 = vmatpush1.bf16.msra.mxu0 %v2321
    %2748 = vmatprep.subr.bf16.mxu0 %v2330
    %2749 = vmatpush1.bf16.msra.mxu0 %v2329
    %2750 = vmatprep.subr.bf16.mxu0 %v2338
    %2751 = vmatpush1.bf16.msra.mxu0 %v2337
    %2752 = vmatprep.subr.bf16.mxu0 %v2346
    %2753 = vmatpush1.bf16.msra.mxu0 %v2345
    %2754 = vmatprep.subr.bf16.mxu0 %v2354
    %2755 = vmatpush1.bf16.msra.mxu0 %v2353
    %2756 = vmatprep.subr.bf16.mxu0 %v2362
    %2757 = vmatpush1.bf16.msra.mxu0 %v2361
    %2758 = vmatprep.subr.bf16.mxu0 %v2370
    %2759 = vmatpush1.bf16.msra.mxu0 %v2369
    %2760 = vmatprep.subr.bf16.mxu0 %v2378
    %2761 = vmatpush1.bf16.msra.mxu0 %v2377
    %2762 = vmatprep.subr.bf16.mxu0 %v2386
    %2763 = vmatpush1.bf16.msra.mxu0 %v2385
    %2764 = vmatprep.subr.bf16.mxu0 %v2394
    %2765 = vmatpush1.bf16.msra.mxu0 %v2393
    %2766 = vmatprep.subr.bf16.mxu0 %v2402
    %2767 = vmatpush1.bf16.msra.mxu0 %v2401
    %2768 = vmatprep.subr.bf16.mxu0 %v2410
    %2769 = vmatpush1.bf16.msra.mxu0 %v2409
    %2770 = vmatprep.subr.bf16.mxu0 %v2418
    %2771 = vmatpush1.bf16.msra.mxu0 %v2417
    %2772 = vmatprep.subr.bf16.mxu0 %v2426
    %2773 = vmatpush1.bf16.msra.mxu0 %v2425
    %2774 = vmatprep.subr.bf16.mxu0 %v2434
    %2775 = vmatpush1.bf16.msra.mxu0 %v2433
    %2776 = vmatprep.subr.bf16.mxu0 %v2442
    %2777 = vmatpush1.bf16.msra.mxu0 %v2441
    %2778 = vmatprep.mubr.bf16.mxu0 %v1168
    %2779 = vmatmul.mubr.bf16.gmra.mrb[0].mxu0 %v1167
    %v2780 = vpop.f32.mrb[0].mxu0
    %v2781 = vadd.f32 %v2740, %v2780
    %v2782 = vpop.f32.mrb[0].mxu0
    %v2783 = vadd.f32 %v2742, %v2782
    %v2784 = vpop.f32.mrb[0].mxu0
    %v2785 = vpop.f32.mrb[0].mxu0
    %2786 = vdwg.mxu0
    %2787 = vmatprep.subr.bf16.mxu0 %v2196
    %2788 = vmatpush1.bf16.msra.mxu0 %v2195
    %2789 = vmatprep.subr.bf16.mxu0 %v2204
    %2790 = vmatpush1.bf16.msra.mxu0 %v2203
    %2791 = vmatprep.subr.bf16.mxu0 %v2212
    %2792 = vmatpush1.bf16.msra.mxu0 %v2211
    %2793 = vmatprep.subr.bf16.mxu0 %v2220
    %2794 = vmatpush1.bf16.msra.mxu0 %v2219
    %2795 = vmatprep.subr.bf16.mxu0 %v2228
    %2796 = vmatpush1.bf16.msra.mxu0 %v2227
    %2797 = vmatprep.subr.bf16.mxu0 %v2236
    %2798 = vmatpush1.bf16.msra.mxu0 %v2235
    %2799 = vmatprep.subr.bf16.mxu0 %v2244
    %2800 = vmatpush1.bf16.msra.mxu0 %v2243
    %2801 = vmatprep.subr.bf16.mxu0 %v2252
    %2802 = vmatpush1.bf16.msra.mxu0 %v2251
    %2803 = vmatprep.subr.bf16.mxu0 %v2260
    %2804 = vmatpush1.bf16.msra.mxu0 %v2259
    %2805 = vmatprep.subr.bf16.mxu0 %v2268
    %2806 = vmatpush1.bf16.msra.mxu0 %v2267
    %2807 = vmatprep.subr.bf16.mxu0 %v2276
    %2808 = vmatpush1.bf16.msra.mxu0 %v2275
    %2809 = vmatprep.subr.bf16.mxu0 %v2284
    %2810 = vmatpush1.bf16.msra.mxu0 %v2283
    %2811 = vmatprep.subr.bf16.mxu0 %v2292
    %2812 = vmatpush1.bf16.msra.mxu0 %v2291
    %2813 = vmatprep.subr.bf16.mxu0 %v2300
    %2814 = vmatpush1.bf16.msra.mxu0 %v2299
    %2815 = vmatprep.subr.bf16.mxu0 %v2308
    %2816 = vmatpush1.bf16.msra.mxu0 %v2307
    %2817 = vmatprep.subr.bf16.mxu0 %v2316
    %2818 = vmatpush1.bf16.msra.mxu0 %v2315
    %2819 = vmatprep.mubr.bf16.mxu0 %v1166
    %2820 = vmatmul.mubr.bf16.gmra.mrb[0].mxu0 %v1165
    %v2821 = vpop.f32.mrb[0].mxu0
    %v2822 = vadd.f32 0.0, %v2821
    %v2823 = vpop.f32.mrb[0].mxu0
    %v2824 = vadd.f32 0.0, %v2823
    %v2825 = vpop.f32.mrb[0].mxu0
    %v2826 = vpop.f32.mrb[0].mxu0
    %2827 = vdwg.mxu0
    %2828 = vmatprep.subr.bf16.mxu0 %v2324
    %2829 = vmatpush1.bf16.msra.mxu0 %v2323
    %2830 = vmatprep.subr.bf16.mxu0 %v2332
    %2831 = vmatpush1.bf16.msra.mxu0 %v2331
    %2832 = vmatprep.subr.bf16.mxu0 %v2340
    %2833 = vmatpush1.bf16.msra.mxu0 %v2339
    %2834 = vmatprep.subr.bf16.mxu0 %v2348
    %2835 = vmatpush1.bf16.msra.mxu0 %v2347
    %2836 = vmatprep.subr.bf16.mxu0 %v2356
    %2837 = vmatpush1.bf16.msra.mxu0 %v2355
    %2838 = vmatprep.subr.bf16.mxu0 %v2364
    %2839 = vmatpush1.bf16.msra.mxu0 %v2363
    %2840 = vmatprep.subr.bf16.mxu0 %v2372
    %2841 = vmatpush1.bf16.msra.mxu0 %v2371
    %2842 = vmatprep.subr.bf16.mxu0 %v2380
    %2843 = vmatpush1.bf16.msra.mxu0 %v2379
    %2844 = vmatprep.subr.bf16.mxu0 %v2388
    %2845 = vmatpush1.bf16.msra.mxu0 %v2387
    %2846 = vmatprep.subr.bf16.mxu0 %v2396
    %2847 = vmatpush1.bf16.msra.mxu0 %v2395
    %2848 = vmatprep.subr.bf16.mxu0 %v2404
    %2849 = vmatpush1.bf16.msra.mxu0 %v2403
    %2850 = vmatprep.subr.bf16.mxu0 %v2412
    %2851 = vmatpush1.bf16.msra.mxu0 %v2411
    %2852 = vmatprep.subr.bf16.mxu0 %v2420
    %2853 = vmatpush1.bf16.msra.mxu0 %v2419
    %2854 = vmatprep.subr.bf16.mxu0 %v2428
    %2855 = vmatpush1.bf16.msra.mxu0 %v2427
    %2856 = vmatprep.subr.bf16.mxu0 %v2436
    %2857 = vmatpush1.bf16.msra.mxu0 %v2435
    %2858 = vmatprep.subr.bf16.mxu0 %v2444
    %2859 = vmatpush1.bf16.msra.mxu0 %v2443
    %2860 = vmatprep.mubr.bf16.mxu0 %v1168
    %2861 = vmatmul.mubr.bf16.gmra.mrb[0].mxu0 %v1167
    %v2862 = vpop.f32.mrb[0].mxu0
    %v2863 = vadd.f32 %v2822, %v2862
    %v2864 = vpop.f32.mrb[0].mxu0
    %v2865 = vadd.f32 %v2824, %v2864
    %v2866 = vpop.f32.mrb[0].mxu0
    %v2867 = vpop.f32.mrb[0].mxu0
    %2868 = vdwg.mxu0
    %2869 = vmatprep.subr.bf16.mxu0 %v2198
    %2870 = vmatpush1.bf16.msra.mxu0 %v2197
    %2871 = vmatprep.subr.bf16.mxu0 %v2206
    %2872 = vmatpush1.bf16.msra.mxu0 %v2205
    %2873 = vmatprep.subr.bf16.mxu0 %v2214
    %2874 = vmatpush1.bf16.msra.mxu0 %v2213
    %2875 = vmatprep.subr.bf16.mxu0 %v2222
    %2876 = vmatpush1.bf16.msra.mxu0 %v2221
    %2877 = vmatprep.subr.bf16.mxu0 %v2230
    %2878 = vmatpush1.bf16.msra.mxu0 %v2229
    %2879 = vmatprep.subr.bf16.mxu0 %v2238
    %2880 = vmatpush1.bf16.msra.mxu0 %v2237
    %2881 = vmatprep.subr.bf16.mxu0 %v2246
    %2882 = vmatpush1.bf16.msra.mxu0 %v2245
    %2883 = vmatprep.subr.bf16.mxu0 %v2254
    %2884 = vmatpush1.bf16.msra.mxu0 %v2253
    %2885 = vmatprep.subr.bf16.mxu0 %v2262
    %2886 = vmatpush1.bf16.msra.mxu0 %v2261
    %2887 = vmatprep.subr.bf16.mxu0 %v2270
    %2888 = vmatpush1.bf16.msra.mxu0 %v2269
    %2889 = vmatprep.subr.bf16.mxu0 %v2278
    %2890 = vmatpush1.bf16.msra.mxu0 %v2277
    %2891 = vmatprep.subr.bf16.mxu0 %v2286
    %2892 = vmatpush1.bf16.msra.mxu0 %v2285
    %2893 = vmatprep.subr.bf16.mxu0 %v2294
    %2894 = vmatpush1.bf16.msra.mxu0 %v2293
    %2895 = vmatprep.subr.bf16.mxu0 %v2302
    %2896 = vmatpush1.bf16.msra.mxu0 %v2301
    %2897 = vmatprep.subr.bf16.mxu0 %v2310
    %2898 = vmatpush1.bf16.msra.mxu0 %v2309
    %2899 = vmatprep.subr.bf16.mxu0 %v2318
    %2900 = vmatpush1.bf16.msra.mxu0 %v2317
    %2901 = vmatprep.mubr.bf16.mxu0 %v1166
    %2902 = vmatmul.mubr.bf16.gmra.mrb[0].mxu0 %v1165
    %v2903 = vpop.f32.mrb[0].mxu0
    %v2904 = vadd.f32 0.0, %v2903
    %v2905 = vpop.f32.mrb[0].mxu0
    %v2906 = vadd.f32 0.0, %v2905
    %v2907 = vpop.f32.mrb[0].mxu0
    %v2908 = vpop.f32.mrb[0].mxu0
    %2909 = vdwg.mxu0
    %2910 = vmatprep.subr.bf16.mxu0 %v2326
    %2911 = vmatpush1.bf16.msra.mxu0 %v2325
    %2912 = vmatprep.subr.bf16.mxu0 %v2334
    %2913 = vmatpush1.bf16.msra.mxu0 %v2333
    %2914 = vmatprep.subr.bf16.mxu0 %v2342
    %2915 = vmatpush1.bf16.msra.mxu0 %v2341
    %2916 = vmatprep.subr.bf16.mxu0 %v2350
    %2917 = vmatpush1.bf16.msra.mxu0 %v2349
    %2918 = vmatprep.subr.bf16.mxu0 %v2358
    %2919 = vmatpush1.bf16.msra.mxu0 %v2357
    %2920 = vmatprep.subr.bf16.mxu0 %v2366
    %2921 = vmatpush1.bf16.msra.mxu0 %v2365
    %2922 = vmatprep.subr.bf16.mxu0 %v2374
    %2923 = vmatpush1.bf16.msra.mxu0 %v2373
    %2924 = vmatprep.subr.bf16.mxu0 %v2382
    %2925 = vmatpush1.bf16.msra.mxu0 %v2381
    %2926 = vmatprep.subr.bf16.mxu0 %v2390
    %2927 = vmatpush1.bf16.msra.mxu0 %v2389
    %2928 = vmatprep.subr.bf16.mxu0 %v2398
    %2929 = vmatpush1.bf16.msra.mxu0 %v2397
    %2930 = vmatprep.subr.bf16.mxu0 %v2406
    %2931 = vmatpush1.bf16.msra.mxu0 %v2405
    %2932 = vmatprep.subr.bf16.mxu0 %v2414
    %2933 = vmatpush1.bf16.msra.mxu0 %v2413
    %2934 = vmatprep.subr.bf16.mxu0 %v2422
    %2935 = vmatpush1.bf16.msra.mxu0 %v2421
    %2936 = vmatprep.subr.bf16.mxu0 %v2430
    %2937 = vmatpush1.bf16.msra.mxu0 %v2429
    %2938 = vmatprep.subr.bf16.mxu0 %v2438
    %2939 = vmatpush1.bf16.msra.mxu0 %v2437
    %2940 = vmatprep.subr.bf16.mxu0 %v2446
    %2941 = vmatpush1.bf16.msra.mxu0 %v2445
    %2942 = vmatprep.mubr.bf16.mxu0 %v1168
    %2943 = vmatmul.mubr.bf16.gmra.mrb[0].mxu0 %v1167
    %v2944 = vpop.f32.mrb[0].mxu0
    %v2945 = vadd.f32 %v2904, %v2944
    %v2946 = vpop.f32.mrb[0].mxu0
    %v2947 = vadd.f32 %v2906, %v2946
    %v2948 = vpop.f32.mrb[0].mxu0
    %v2949 = vpop.f32.mrb[0].mxu0
    %2950 = vdwg.mxu0
    %2951 = vmatprep.subr.bf16.mxu0 %v2200
    %2952 = vmatpush1.bf16.msra.mxu0 %v2199
    %2953 = vmatprep.subr.bf16.mxu0 %v2208
    %2954 = vmatpush1.bf16.msra.mxu0 %v2207
    %2955 = vmatprep.subr.bf16.mxu0 %v2216
    %2956 = vmatpush1.bf16.msra.mxu0 %v2215
    %2957 = vmatprep.subr.bf16.mxu0 %v2224
    %2958 = vmatpush1.bf16.msra.mxu0 %v2223
    %2959 = vmatprep.subr.bf16.mxu0 %v2232
    %2960 = vmatpush1.bf16.msra.mxu0 %v2231
    %2961 = vmatprep.subr.bf16.mxu0 %v2240
    %2962 = vmatpush1.bf16.msra.mxu0 %v2239
    %2963 = vmatprep.subr.bf16.mxu0 %v2248
    %2964 = vmatpush1.bf16.msra.mxu0 %v2247
    %2965 = vmatprep.subr.bf16.mxu0 %v2256
    %2966 = vmatpush1.bf16.msra.mxu0 %v2255
    %2967 = vmatprep.subr.bf16.mxu0 %v2264
    %2968 = vmatpush1.bf16.msra.mxu0 %v2263
    %2969 = vmatprep.subr.bf16.mxu0 %v2272
    %2970 = vmatpush1.bf16.msra.mxu0 %v2271
    %2971 = vmatprep.subr.bf16.mxu0 %v2280
    %2972 = vmatpush1.bf16.msra.mxu0 %v2279
    %2973 = vmatprep.subr.bf16.mxu0 %v2288
    %2974 = vmatpush1.bf16.msra.mxu0 %v2287
    %2975 = vmatprep.subr.bf16.mxu0 %v2296
    %2976 = vmatpush1.bf16.msra.mxu0 %v2295
    %2977 = vmatprep.subr.bf16.mxu0 %v2304
    %2978 = vmatpush1.bf16.msra.mxu0 %v2303
    %2979 = vmatprep.subr.bf16.mxu0 %v2312
    %2980 = vmatpush1.bf16.msra.mxu0 %v2311
    %2981 = vmatprep.subr.bf16.mxu0 %v2320
    %2982 = vmatpush1.bf16.msra.mxu0 %v2319
    %2983 = vmatprep.mubr.bf16.mxu0 %v1166
    %2984 = vmatmul.mubr.bf16.gmra.mrb[0].mxu0 %v1165
    %v2985 = vpop.f32.mrb[0].mxu0
    %v2986 = vadd.f32 0.0, %v2985
    %v2987 = vpop.f32.mrb[0].mxu0
    %v2988 = vadd.f32 0.0, %v2987
    %v2989 = vpop.f32.mrb[0].mxu0
    %v2990 = vpop.f32.mrb[0].mxu0
    %2991 = vdwg.mxu0
    %2992 = vmatprep.subr.bf16.mxu0 %v2328
    %2993 = vmatpush1.bf16.msra.mxu0 %v2327
    %2994 = vmatprep.subr.bf16.mxu0 %v2336
    %2995 = vmatpush1.bf16.msra.mxu0 %v2335
    %2996 = vmatprep.subr.bf16.mxu0 %v2344
    %2997 = vmatpush1.bf16.msra.mxu0 %v2343
    %2998 = vmatprep.subr.bf16.mxu0 %v2352
    %2999 = vmatpush1.bf16.msra.mxu0 %v2351
    %3000 = vmatprep.subr.bf16.mxu0 %v2360
    %3001 = vmatpush1.bf16.msra.mxu0 %v2359
    %3002 = vmatprep.subr.bf16.mxu0 %v2368
    %3003 = vmatpush1.bf16.msra.mxu0 %v2367
    %3004 = vmatprep.subr.bf16.mxu0 %v2376
    %3005 = vmatpush1.bf16.msra.mxu0 %v2375
    %3006 = vmatprep.subr.bf16.mxu0 %v2384
    %3007 = vmatpush1.bf16.msra.mxu0 %v2383
    %3008 = vmatprep.subr.bf16.mxu0 %v2392
    %3009 = vmatpush1.bf16.msra.mxu0 %v2391
    %3010 = vmatprep.subr.bf16.mxu0 %v2400
    %3011 = vmatpush1.bf16.msra.mxu0 %v2399
    %3012 = vmatprep.subr.bf16.mxu0 %v2408
    %3013 = vmatpush1.bf16.msra.mxu0 %v2407
    %3014 = vmatprep.subr.bf16.mxu0 %v2416
    %3015 = vmatpush1.bf16.msra.mxu0 %v2415
    %3016 = vmatprep.subr.bf16.mxu0 %v2424
    %3017 = vmatpush1.bf16.msra.mxu0 %v2423
    %3018 = vmatprep.subr.bf16.mxu0 %v2432
    %3019 = vmatpush1.bf16.msra.mxu0 %v2431
    %3020 = vmatprep.subr.bf16.mxu0 %v2440
    %3021 = vmatpush1.bf16.msra.mxu0 %v2439
    %3022 = vmatprep.subr.bf16.mxu0 %v2448
    %3023 = vmatpush1.bf16.msra.mxu0 %v2447
    %3024 = vmatprep.mubr.bf16.mxu0 %v1168
    %3025 = vmatmul.mubr.bf16.gmra.mrb[0].mxu0 %v1167
    %v3026 = vpop.f32.mrb[0].mxu0
    %v3027 = vadd.f32 %v2986, %v3026
    %v3028 = vpop.f32.mrb[0].mxu0
    %v3029 = vadd.f32 %v2988, %v3028
    %v3030 = vpop.f32.mrb[0].mxu0
    %v3031 = vpop.f32.mrb[0].mxu0
    %3032 = vdwg.mxu0
    %v3033 = vld [vmem:[%s6] sm:$0x77]
    %v3034 = vld [vmem:[%s6 + $0x8] sm:$0x77]
    %v3035 = vrot.slane %v2945, 4
    %v3036 = vadd.f32 %v2945, %v3035
    %v3037 = vrot.slane %v3036, 2
    %v3038 = vadd.f32 %v3036, %v3037
    %v3039 = vrot.slane %v3038, 1
    %v3040 = vadd.f32 %v3038, %v3039
    %v3041 = vrot.slane %v2947, 4
    %v3042 = vadd.f32 %v2947, %v3041
    %v3043 = vrot.slane %v3042, 2
    %v3044 = vadd.f32 %v3042, %v3043
    %v3045 = vrot.slane %v3044, 1
    %v3046 = vadd.f32 %v3044, %v3045
    %v3047 = vrot.slane %v3027, 4
    %v3048 = vadd.f32 %v3027, %v3047
    %v3049 = vrot.slane %v3048, 2
    %v3050 = vadd.f32 %v3048, %v3049
    %v3051 = vrot.slane %v3050, 1
    %v3052 = vadd.f32 %v3050, %v3051
    %v3053 = vrot.slane %v3029, 4
    %v3054 = vadd.f32 %v3029, %v3053
    %v3055 = vrot.slane %v3054, 2
    %v3056 = vadd.f32 %v3054, %v3055
    %v3057 = vrot.slane %v3056, 1
    %v3058 = vadd.f32 %v3056, %v3057
    %v3059 = vrcp.pop 8.0
    %v3060 = vmul.f32 %v3040, %v3059
    %v3061 = vmul.f32 %v3046, %v3059
    %v3062 = vmul.f32 %v3052, %v3059
    %v3063 = vmul.f32 %v3058, %v3059
    %s3064 = ssub.f32 0.0, %s109
    %v3065 = vstv %s3064
    %v3066 = vmul.f32 %v3065, %v3060
    %v3067 = vmul.f32 %v3065, %v3061
    %v3068 = vmul.f32 %v3065, %v3062
    %v3069 = vmul.f32 %v3065, %v3063
    %v3070 = vmul.f32 %v3066, 1.442695
    %v3071 = vpow.pop %v3070
    %v3072 = vmul.f32 %v3067, 1.442695
    %v3073 = vpow.pop %v3072
    %v3074 = vmul.f32 %v3068, 1.442695
    %v3075 = vpow.pop %v3074
    %v3076 = vmul.f32 %v3069, 1.442695
    %v3077 = vpow.pop %v3076
    %v3078 = vadd.f32 %v3071, 1.0
    %v3079 = vadd.f32 %v3073, 1.0
    %v3080 = vadd.f32 %v3075, 1.0
    %v3081 = vadd.f32 %v3077, 1.0
    %v3082 = vrcp.pop %v3078
    %v3083 = vrcp.pop %v3079
    %v3084 = vrcp.pop %v3080
    %v3085 = vrcp.pop %v3081
    %v3088 = vlaneseq
    %v3089 = vshrl.u32 %v3088, 7
    %v3090 = vsub.s32 1, %v3089
    %v3091 = vrot.slane %v3033, %v3090
    %v3092 = vlaneseq
    %v3093 = vshrl.u32 %v3092, 7
    %v3094 = vsub.s32 5, %v3093
    %v3095 = vrot.slane %v3033, %v3094
    %v3096 = vlaneseq
    %v3097 = vshrl.u32 %v3096, 7
    %v3098 = vsub.s32 1, %v3097
    %v3099 = vrot.slane %v3034, %v3098
    %v3100 = vlaneseq
    %v3101 = vshrl.u32 %v3100, 7
    %v3102 = vsub.s32 5, %v3101
    %v3103 = vrot.slane %v3034, %v3102
    %v3108 = vstv %s108
    %v3109 = vmul.f32 %v1068, %v3108
    %v3110 = vmul.f32 %v1069, %v3108
    %v3111 = vmul.f32 %v1070, %v3108
    %v3112 = vmul.f32 %v1071, %v3108
    %v3113 = vlaneseq
    %v3114 = vshrl.u32 %v3113, 7
    %v3115 = vsub.s32 1, %v3114
    %v3116 = vrot.slane %v3091, %v3115
    %v3117 = vlaneseq
    %v3118 = vshrl.u32 %v3117, 7
    %v3119 = vsub.s32 1, %v3118
    %v3120 = vrot.slane %v3095, %v3119
    %v3121 = vlaneseq
    %v3122 = vshrl.u32 %v3121, 7
    %v3123 = vsub.s32 1, %v3122
    %v3124 = vrot.slane %v3099, %v3123
    %v3125 = vlaneseq
    %v3126 = vshrl.u32 %v3125, 7
    %v3127 = vsub.s32 1, %v3126
    %v3128 = vrot.slane %v3103, %v3127
    %v3129 = vlaneseq
    %v3130 = vshrl.u32 %v3129, 7
    %v3131 = vsub.s32 1, %v3130
    %v3132 = vrot.slane %v3082, %v3131
    %v3133 = vlaneseq
    %v3134 = vshrl.u32 %v3133, 7
    %v3135 = vsub.s32 1, %v3134
    %v3136 = vrot.slane %v3083, %v3135
    %v3137 = vlaneseq
    %v3138 = vshrl.u32 %v3137, 7
    %v3139 = vsub.s32 1, %v3138
    %v3140 = vrot.slane %v3084, %v3139
    %v3141 = vlaneseq
    %v3142 = vshrl.u32 %v3141, 7
    %v3143 = vsub.s32 1, %v3142
    %v3144 = vrot.slane %v3085, %v3143
    %v3145 = vmul.f32 %v2781, %v3116
    %v3146 = vmul.f32 %v2783, %v3120
    %v3147 = vmul.f32 %v2863, %v3124
    %v3148 = vmul.f32 %v2865, %v3128
    %v3149 = vmul.f32 %v2945, %v3132
    %v3150 = vmul.f32 %v2947, %v3136
    %v3151 = vmul.f32 %v3027, %v3140
    %v3152 = vmul.f32 %v3029, %v3144
    %v3153 = vadd.f32 %v3109, %v3145
    %v3154 = vadd.f32 %v3110, %v3146
    %v3155 = vadd.f32 %v3111, %v3147
    %v3156 = vadd.f32 %v3112, %v3148
    %v3157 = vadd.f32 %v3109, %v3149
    %v3158 = vadd.f32 %v3110, %v3150
    %v3159 = vadd.f32 %v3111, %v3151
    %v3160 = vadd.f32 %v3112, %v3152
    %v3161 = vmul.f32 %v3153, %v3153
    %v3162 = vmul.f32 %v3154, %v3154
    %v3163 = vmul.f32 %v3155, %v3155
    %v3164 = vmul.f32 %v3156, %v3156
    %v3165 = vadd.f32 %v3161, %v3162
    %v3166 = vadd.f32 %v3165, %v3163
    %v3167 = vadd.f32 %v3166, %v3164
    %3168 = vadd.xlane.f32.xlu0 %v3167
    %v3169 = vpop.xlane.xlu0 %3168
    %v3170 = vmax.f32 %v3169, 1e-24
    %v3171 = vrsqrt.pop %v3170
    %v3172 = vmul.f32 %v3153, %v3171
    %v3173 = vmul.f32 %v3154, %v3171
    %v3174 = vmul.f32 %v3155, %v3171
    %v3175 = vmul.f32 %v3156, %v3171
    %v3176 = vmul.f32 %v3157, %v3157
    %v3177 = vmul.f32 %v3158, %v3158
    %v3178 = vmul.f32 %v3159, %v3159
    %v3179 = vmul.f32 %v3160, %v3160
    %v3180 = vadd.f32 %v3176, %v3177
    %v3181 = vadd.f32 %v3180, %v3178
    %v3182 = vadd.f32 %v3181, %v3179
    %3183 = vadd.xlane.f32.xlu0 %v3182
    %v3184 = vpop.xlane.xlu0 %3183
    %v3185 = vmax.f32 %v3184, 1e-24
    %v3186 = vrsqrt.pop %v3185
    %v3187 = vmul.f32 %v3157, %v3186
    %v3188 = vmul.f32 %v3158, %v3186
    %v3189 = vmul.f32 %v3159, %v3186
    %v3190 = vmul.f32 %v3160, %v3186
    %v3191 = vpack.c.bf16 %v3172, %v3172
    %v3192 = vpack.c.bf16 %v3173, %v3173
    %v3193 = vpack.c.bf16 %v3174, %v3174
    %v3194 = vpack.c.bf16 %v3175, %v3175
    %v3195 = vpack.c.bf16 %v3187, %v3187
    %v3196 = vpack.c.bf16 %v3188, %v3188
    %v3197 = vpack.c.bf16 %v3189, %v3189
    %v3198 = vpack.c.bf16 %v3190, %v3190
    %v3199 = vld [vmem:[#allocation10] sm:$0xf]
    %v3200 = vld [vmem:[#allocation10 + $0x4] sm:$0xf]
    %v3201 = vld [vmem:[#allocation10 + $0x8] sm:$0xf]
    %v3202 = vld [vmem:[#allocation10 + $0xc] sm:$0xf]
    %v3203 = vld [vmem:[#allocation10 + $0x10] sm:$0xf]
    %v3204 = vld [vmem:[#allocation10 + $0x14] sm:$0xf]
    %v3205 = vld [vmem:[#allocation10 + $0x18] sm:$0xf]
    %v3206 = vld [vmem:[#allocation10 + $0x1c] sm:$0xf]
    %v3207 = vld [vmem:[#allocation10 + $0x20] sm:$0xf]
    %v3208 = vld [vmem:[#allocation10 + $0x24] sm:$0xf]
    %v3209 = vld [vmem:[#allocation10 + $0x28] sm:$0xf]
    %v3210 = vld [vmem:[#allocation10 + $0x2c] sm:$0xf]
    %v3211 = vld [vmem:[#allocation10 + $0x30] sm:$0xf]
    %v3212 = vld [vmem:[#allocation10 + $0x34] sm:$0xf]
    %v3213 = vld [vmem:[#allocation10 + $0x38] sm:$0xf]
    %v3214 = vld [vmem:[#allocation10 + $0x3c] sm:$0xf]
    %v3215 = vld [vmem:[#allocation10 + $0x40] sm:$0xf]
    %v3216 = vld [vmem:[#allocation10 + $0x44] sm:$0xf]
    %v3217 = vld [vmem:[#allocation10 + $0x48] sm:$0xf]
    %v3218 = vld [vmem:[#allocation10 + $0x4c] sm:$0xf]
    %v3219 = vld [vmem:[#allocation10 + $0x50] sm:$0xf]
    %v3220 = vld [vmem:[#allocation10 + $0x54] sm:$0xf]
    %v3221 = vld [vmem:[#allocation10 + $0x58] sm:$0xf]
    %v3222 = vld [vmem:[#allocation10 + $0x5c] sm:$0xf]
    %v3223 = vld [vmem:[#allocation10 + $0x60] sm:$0xf]
    %v3224 = vld [vmem:[#allocation10 + $0x64] sm:$0xf]
    %v3225 = vld [vmem:[#allocation10 + $0x68] sm:$0xf]
    %v3226 = vld [vmem:[#allocation10 + $0x6c] sm:$0xf]
    %v3227 = vld [vmem:[#allocation10 + $0x70] sm:$0xf]
    %v3228 = vld [vmem:[#allocation10 + $0x74] sm:$0xf]
    %v3229 = vld [vmem:[#allocation10 + $0x78] sm:$0xf]
    %v3230 = vld [vmem:[#allocation10 + $0x7c] sm:$0xf]
    %v3231 = vld [vmem:[#allocation10 + $0x80] sm:$0xf]
    %v3232 = vld [vmem:[#allocation10 + $0x84] sm:$0xf]
    %v3233 = vld [vmem:[#allocation10 + $0x88] sm:$0xf]
    %v3234 = vld [vmem:[#allocation10 + $0x8c] sm:$0xf]
    %v3235 = vld [vmem:[#allocation10 + $0x90] sm:$0xf]
    %v3236 = vld [vmem:[#allocation10 + $0x94] sm:$0xf]
    %v3237 = vld [vmem:[#allocation10 + $0x98] sm:$0xf]
    %v3238 = vld [vmem:[#allocation10 + $0x9c] sm:$0xf]
    %v3239 = vld [vmem:[#allocation10 + $0xa0] sm:$0xf]
    %v3240 = vld [vmem:[#allocation10 + $0xa4] sm:$0xf]
    %v3241 = vld [vmem:[#allocation10 + $0xa8] sm:$0xf]
    %v3242 = vld [vmem:[#allocation10 + $0xac] sm:$0xf]
    %v3243 = vld [vmem:[#allocation10 + $0xb0] sm:$0xf]
    %v3244 = vld [vmem:[#allocation10 + $0xb4] sm:$0xf]
    %v3245 = vld [vmem:[#allocation10 + $0xb8] sm:$0xf]
    %v3246 = vld [vmem:[#allocation10 + $0xbc] sm:$0xf]
    %v3247 = vld [vmem:[#allocation10 + $0xc0] sm:$0xf]
    %v3248 = vld [vmem:[#allocation10 + $0xc4] sm:$0xf]
    %v3249 = vld [vmem:[#allocation10 + $0xc8] sm:$0xf]
    %v3250 = vld [vmem:[#allocation10 + $0xcc] sm:$0xf]
    %v3251 = vld [vmem:[#allocation10 + $0xd0] sm:$0xf]
    %v3252 = vld [vmem:[#allocation10 + $0xd4] sm:$0xf]
    %v3253 = vld [vmem:[#allocation10 + $0xd8] sm:$0xf]
    %v3254 = vld [vmem:[#allocation10 + $0xdc] sm:$0xf]
    %v3255 = vld [vmem:[#allocation10 + $0xe0] sm:$0xf]
    %v3256 = vld [vmem:[#allocation10 + $0xe4] sm:$0xf]
    %v3257 = vld [vmem:[#allocation10 + $0xe8] sm:$0xf]
    %v3258 = vld [vmem:[#allocation10 + $0xec] sm:$0xf]
    %v3259 = vld [vmem:[#allocation10 + $0xf0] sm:$0xf]
    %v3260 = vld [vmem:[#allocation10 + $0xf4] sm:$0xf]
    %v3261 = vld [vmem:[#allocation10 + $0xf8] sm:$0xf]
    %v3262 = vld [vmem:[#allocation10 + $0xfc] sm:$0xf]
    %v3263 = vld [vmem:[#allocation10 + $0x100] sm:$0xf]
    %v3264 = vld [vmem:[#allocation10 + $0x104] sm:$0xf]
    %v3265 = vld [vmem:[#allocation10 + $0x108] sm:$0xf]
    %v3266 = vld [vmem:[#allocation10 + $0x10c] sm:$0xf]
    %v3267 = vld [vmem:[#allocation10 + $0x110] sm:$0xf]
    %v3268 = vld [vmem:[#allocation10 + $0x114] sm:$0xf]
    %v3269 = vld [vmem:[#allocation10 + $0x118] sm:$0xf]
    %v3270 = vld [vmem:[#allocation10 + $0x11c] sm:$0xf]
    %v3271 = vld [vmem:[#allocation10 + $0x120] sm:$0xf]
    %v3272 = vld [vmem:[#allocation10 + $0x124] sm:$0xf]
    %v3273 = vld [vmem:[#allocation10 + $0x128] sm:$0xf]
    %v3274 = vld [vmem:[#allocation10 + $0x12c] sm:$0xf]
    %v3275 = vld [vmem:[#allocation10 + $0x130] sm:$0xf]
    %v3276 = vld [vmem:[#allocation10 + $0x134] sm:$0xf]
    %v3277 = vld [vmem:[#allocation10 + $0x138] sm:$0xf]
    %v3278 = vld [vmem:[#allocation10 + $0x13c] sm:$0xf]
    %v3279 = vld [vmem:[#allocation10 + $0x140] sm:$0xf]
    %v3280 = vld [vmem:[#allocation10 + $0x144] sm:$0xf]
    %v3281 = vld [vmem:[#allocation10 + $0x148] sm:$0xf]
    %v3282 = vld [vmem:[#allocation10 + $0x14c] sm:$0xf]
    %v3283 = vld [vmem:[#allocation10 + $0x150] sm:$0xf]
    %v3284 = vld [vmem:[#allocation10 + $0x154] sm:$0xf]
    %v3285 = vld [vmem:[#allocation10 + $0x158] sm:$0xf]
    %v3286 = vld [vmem:[#allocation10 + $0x15c] sm:$0xf]
    %v3287 = vld [vmem:[#allocation10 + $0x160] sm:$0xf]
    %v3288 = vld [vmem:[#allocation10 + $0x164] sm:$0xf]
    %v3289 = vld [vmem:[#allocation10 + $0x168] sm:$0xf]
    %v3290 = vld [vmem:[#allocation10 + $0x16c] sm:$0xf]
    %v3291 = vld [vmem:[#allocation10 + $0x170] sm:$0xf]
    %v3292 = vld [vmem:[#allocation10 + $0x174] sm:$0xf]
    %v3293 = vld [vmem:[#allocation10 + $0x178] sm:$0xf]
    %v3294 = vld [vmem:[#allocation10 + $0x17c] sm:$0xf]
    %v3295 = vld [vmem:[#allocation10 + $0x180] sm:$0xf]
    %v3296 = vld [vmem:[#allocation10 + $0x184] sm:$0xf]
    %v3297 = vld [vmem:[#allocation10 + $0x188] sm:$0xf]
    %v3298 = vld [vmem:[#allocation10 + $0x18c] sm:$0xf]
    %v3299 = vld [vmem:[#allocation10 + $0x190] sm:$0xf]
    %v3300 = vld [vmem:[#allocation10 + $0x194] sm:$0xf]
    %v3301 = vld [vmem:[#allocation10 + $0x198] sm:$0xf]
    %v3302 = vld [vmem:[#allocation10 + $0x19c] sm:$0xf]
    %v3303 = vld [vmem:[#allocation10 + $0x1a0] sm:$0xf]
    %v3304 = vld [vmem:[#allocation10 + $0x1a4] sm:$0xf]
    %v3305 = vld [vmem:[#allocation10 + $0x1a8] sm:$0xf]
    %v3306 = vld [vmem:[#allocation10 + $0x1ac] sm:$0xf]
    %v3307 = vld [vmem:[#allocation10 + $0x1b0] sm:$0xf]
    %v3308 = vld [vmem:[#allocation10 + $0x1b4] sm:$0xf]
    %v3309 = vld [vmem:[#allocation10 + $0x1b8] sm:$0xf]
    %v3310 = vld [vmem:[#allocation10 + $0x1bc] sm:$0xf]
    %v3311 = vld [vmem:[#allocation10 + $0x1c0] sm:$0xf]
    %v3312 = vld [vmem:[#allocation10 + $0x1c4] sm:$0xf]
    %v3313 = vld [vmem:[#allocation10 + $0x1c8] sm:$0xf]
    %v3314 = vld [vmem:[#allocation10 + $0x1cc] sm:$0xf]
    %v3315 = vld [vmem:[#allocation10 + $0x1d0] sm:$0xf]
    %v3316 = vld [vmem:[#allocation10 + $0x1d4] sm:$0xf]
    %v3317 = vld [vmem:[#allocation10 + $0x1d8] sm:$0xf]
    %v3318 = vld [vmem:[#allocation10 + $0x1dc] sm:$0xf]
    %v3319 = vld [vmem:[#allocation10 + $0x1e0] sm:$0xf]
    %v3320 = vld [vmem:[#allocation10 + $0x1e4] sm:$0xf]
    %v3321 = vld [vmem:[#allocation10 + $0x1e8] sm:$0xf]
    %v3322 = vld [vmem:[#allocation10 + $0x1ec] sm:$0xf]
    %v3323 = vld [vmem:[#allocation10 + $0x1f0] sm:$0xf]
    %v3324 = vld [vmem:[#allocation10 + $0x1f4] sm:$0xf]
    %v3325 = vld [vmem:[#allocation10 + $0x1f8] sm:$0xf]
    %v3326 = vld [vmem:[#allocation10 + $0x1fc] sm:$0xf]
    %v3455 = vunpack.c.l.b16 %v3199
    %v3456 = vunpack.c.l.b16 %v3200
    %v3457 = vunpack.c.l.b16 %v3201
    %v3458 = vunpack.c.l.b16 %v3202
    %v3459 = vunpack.c.l.b16 %v3203
    %v3460 = vunpack.c.l.b16 %v3204
    %v3461 = vunpack.c.l.b16 %v3205
    %v3462 = vunpack.c.l.b16 %v3206
    %v3463 = vunpack.c.l.b16 %v3207
    %v3464 = vunpack.c.l.b16 %v3208
    %v3465 = vunpack.c.l.b16 %v3209
    %v3466 = vunpack.c.l.b16 %v3210
    %v3467 = vunpack.c.l.b16 %v3211
    %v3468 = vunpack.c.l.b16 %v3212
    %v3469 = vunpack.c.l.b16 %v3213
    %v3470 = vunpack.c.l.b16 %v3214
    %v3471 = vunpack.c.l.b16 %v3215
    %v3472 = vunpack.c.l.b16 %v3216
    %v3473 = vunpack.c.l.b16 %v3217
    %v3474 = vunpack.c.l.b16 %v3218
    %v3475 = vunpack.c.l.b16 %v3219
    %v3476 = vunpack.c.l.b16 %v3220
    %v3477 = vunpack.c.l.b16 %v3221
    %v3478 = vunpack.c.l.b16 %v3222
    %v3479 = vunpack.c.l.b16 %v3223
    %v3480 = vunpack.c.l.b16 %v3224
    %v3481 = vunpack.c.l.b16 %v3225
    %v3482 = vunpack.c.l.b16 %v3226
    %v3483 = vunpack.c.l.b16 %v3227
    %v3484 = vunpack.c.l.b16 %v3228
    %v3485 = vunpack.c.l.b16 %v3229
    %v3486 = vunpack.c.l.b16 %v3230
    %v3487 = vunpack.c.l.b16 %v3231
    %v3488 = vunpack.c.l.b16 %v3232
    %v3489 = vunpack.c.l.b16 %v3233
    %v3490 = vunpack.c.l.b16 %v3234
    %v3491 = vunpack.c.l.b16 %v3235
    %v3492 = vunpack.c.l.b16 %v3236
    %v3493 = vunpack.c.l.b16 %v3237
    %v3494 = vunpack.c.l.b16 %v3238
    %v3495 = vunpack.c.l.b16 %v3239
    %v3496 = vunpack.c.l.b16 %v3240
    %v3497 = vunpack.c.l.b16 %v3241
    %v3498 = vunpack.c.l.b16 %v3242
    %v3499 = vunpack.c.l.b16 %v3243
    %v3500 = vunpack.c.l.b16 %v3244
    %v3501 = vunpack.c.l.b16 %v3245
    %v3502 = vunpack.c.l.b16 %v3246
    %v3503 = vunpack.c.l.b16 %v3247
    %v3504 = vunpack.c.l.b16 %v3248
    %v3505 = vunpack.c.l.b16 %v3249
    %v3506 = vunpack.c.l.b16 %v3250
    %v3507 = vunpack.c.l.b16 %v3251
    %v3508 = vunpack.c.l.b16 %v3252
    %v3509 = vunpack.c.l.b16 %v3253
    %v3510 = vunpack.c.l.b16 %v3254
    %v3511 = vunpack.c.l.b16 %v3255
    %v3512 = vunpack.c.l.b16 %v3256
    %v3513 = vunpack.c.l.b16 %v3257
    %v3514 = vunpack.c.l.b16 %v3258
    %v3515 = vunpack.c.l.b16 %v3259
    %v3516 = vunpack.c.l.b16 %v3260
    %v3517 = vunpack.c.l.b16 %v3261
    %v3518 = vunpack.c.l.b16 %v3262
    %v3519 = vunpack.c.l.b16 %v3263
    %v3520 = vunpack.c.l.b16 %v3264
    %v3521 = vunpack.c.l.b16 %v3265
    %v3522 = vunpack.c.l.b16 %v3266
    %v3523 = vunpack.c.l.b16 %v3267
    %v3524 = vunpack.c.l.b16 %v3268
    %v3525 = vunpack.c.l.b16 %v3269
    %v3526 = vunpack.c.l.b16 %v3270
    %v3527 = vunpack.c.l.b16 %v3271
    %v3528 = vunpack.c.l.b16 %v3272
    %v3529 = vunpack.c.l.b16 %v3273
    %v3530 = vunpack.c.l.b16 %v3274
    %v3531 = vunpack.c.l.b16 %v3275
    %v3532 = vunpack.c.l.b16 %v3276
    %v3533 = vunpack.c.l.b16 %v3277
    %v3534 = vunpack.c.l.b16 %v3278
    %v3535 = vunpack.c.l.b16 %v3279
    %v3536 = vunpack.c.l.b16 %v3280
    %v3537 = vunpack.c.l.b16 %v3281
    %v3538 = vunpack.c.l.b16 %v3282
    %v3539 = vunpack.c.l.b16 %v3283
    %v3540 = vunpack.c.l.b16 %v3284
    %v3541 = vunpack.c.l.b16 %v3285
    %v3542 = vunpack.c.l.b16 %v3286
    %v3543 = vunpack.c.l.b16 %v3287
    %v3544 = vunpack.c.l.b16 %v3288
    %v3545 = vunpack.c.l.b16 %v3289
    %v3546 = vunpack.c.l.b16 %v3290
    %v3547 = vunpack.c.l.b16 %v3291
    %v3548 = vunpack.c.l.b16 %v3292
    %v3549 = vunpack.c.l.b16 %v3293
    %v3550 = vunpack.c.l.b16 %v3294
    %v3551 = vunpack.c.l.b16 %v3295
    %v3552 = vunpack.c.l.b16 %v3296
    %v3553 = vunpack.c.l.b16 %v3297
    %v3554 = vunpack.c.l.b16 %v3298
    %v3555 = vunpack.c.l.b16 %v3299
    %v3556 = vunpack.c.l.b16 %v3300
    %v3557 = vunpack.c.l.b16 %v3301
    %v3558 = vunpack.c.l.b16 %v3302
    %v3559 = vunpack.c.l.b16 %v3303
    %v3560 = vunpack.c.l.b16 %v3304
    %v3561 = vunpack.c.l.b16 %v3305
    %v3562 = vunpack.c.l.b16 %v3306
    %v3563 = vunpack.c.l.b16 %v3307
    %v3564 = vunpack.c.l.b16 %v3308
    %v3565 = vunpack.c.l.b16 %v3309
    %v3566 = vunpack.c.l.b16 %v3310
    %v3567 = vunpack.c.l.b16 %v3311
    %v3568 = vunpack.c.l.b16 %v3312
    %v3569 = vunpack.c.l.b16 %v3313
    %v3570 = vunpack.c.l.b16 %v3314
    %v3571 = vunpack.c.l.b16 %v3315
    %v3572 = vunpack.c.l.b16 %v3316
    %v3573 = vunpack.c.l.b16 %v3317
    %v3574 = vunpack.c.l.b16 %v3318
    %v3575 = vunpack.c.l.b16 %v3319
    %v3576 = vunpack.c.l.b16 %v3320
    %v3577 = vunpack.c.l.b16 %v3321
    %v3578 = vunpack.c.l.b16 %v3322
    %v3579 = vunpack.c.l.b16 %v3323
    %v3580 = vunpack.c.l.b16 %v3324
    %v3581 = vunpack.c.l.b16 %v3325
    %v3582 = vunpack.c.l.b16 %v3326
    %v3583 = vpack.c.b16 %v3456, %v3455
    %v3584 = vpack.c.b16 %v3458, %v3457
    %v3585 = vpack.c.b16 %v3460, %v3459
    %v3586 = vpack.c.b16 %v3462, %v3461
    %v3587 = vpack.c.b16 %v3464, %v3463
    %v3588 = vpack.c.b16 %v3466, %v3465
    %v3589 = vpack.c.b16 %v3468, %v3467
    %v3590 = vpack.c.b16 %v3470, %v3469
    %v3591 = vpack.c.b16 %v3472, %v3471
    %v3592 = vpack.c.b16 %v3474, %v3473
    %v3593 = vpack.c.b16 %v3476, %v3475
    %v3594 = vpack.c.b16 %v3478, %v3477
    %v3595 = vpack.c.b16 %v3480, %v3479
    %v3596 = vpack.c.b16 %v3482, %v3481
    %v3597 = vpack.c.b16 %v3484, %v3483
    %v3598 = vpack.c.b16 %v3486, %v3485
    %v3599 = vpack.c.b16 %v3488, %v3487
    %v3600 = vpack.c.b16 %v3490, %v3489
    %v3601 = vpack.c.b16 %v3492, %v3491
    %v3602 = vpack.c.b16 %v3494, %v3493
    %v3603 = vpack.c.b16 %v3496, %v3495
    %v3604 = vpack.c.b16 %v3498, %v3497
    %v3605 = vpack.c.b16 %v3500, %v3499
    %v3606 = vpack.c.b16 %v3502, %v3501
    %v3607 = vpack.c.b16 %v3504, %v3503
    %v3608 = vpack.c.b16 %v3506, %v3505
    %v3609 = vpack.c.b16 %v3508, %v3507
    %v3610 = vpack.c.b16 %v3510, %v3509
    %v3611 = vpack.c.b16 %v3512, %v3511
    %v3612 = vpack.c.b16 %v3514, %v3513
    %v3613 = vpack.c.b16 %v3516, %v3515
    %v3614 = vpack.c.b16 %v3518, %v3517
    %v3615 = vpack.c.b16 %v3520, %v3519
    %v3616 = vpack.c.b16 %v3522, %v3521
    %v3617 = vpack.c.b16 %v3524, %v3523
    %v3618 = vpack.c.b16 %v3526, %v3525
    %v3619 = vpack.c.b16 %v3528, %v3527
    %v3620 = vpack.c.b16 %v3530, %v3529
    %v3621 = vpack.c.b16 %v3532, %v3531
    %v3622 = vpack.c.b16 %v3534, %v3533
    %v3623 = vpack.c.b16 %v3536, %v3535
    %v3624 = vpack.c.b16 %v3538, %v3537
    %v3625 = vpack.c.b16 %v3540, %v3539
    %v3626 = vpack.c.b16 %v3542, %v3541
    %v3627 = vpack.c.b16 %v3544, %v3543
    %v3628 = vpack.c.b16 %v3546, %v3545
    %v3629 = vpack.c.b16 %v3548, %v3547
    %v3630 = vpack.c.b16 %v3550, %v3549
    %v3631 = vpack.c.b16 %v3552, %v3551
    %v3632 = vpack.c.b16 %v3554, %v3553
    %v3633 = vpack.c.b16 %v3556, %v3555
    %v3634 = vpack.c.b16 %v3558, %v3557
    %v3635 = vpack.c.b16 %v3560, %v3559
    %v3636 = vpack.c.b16 %v3562, %v3561
    %v3637 = vpack.c.b16 %v3564, %v3563
    %v3638 = vpack.c.b16 %v3566, %v3565
    %v3639 = vpack.c.b16 %v3568, %v3567
    %v3640 = vpack.c.b16 %v3570, %v3569
    %v3641 = vpack.c.b16 %v3572, %v3571
    %v3642 = vpack.c.b16 %v3574, %v3573
    %v3643 = vpack.c.b16 %v3576, %v3575
    %v3644 = vpack.c.b16 %v3578, %v3577
    %v3645 = vpack.c.b16 %v3580, %v3579
    %v3646 = vpack.c.b16 %v3582, %v3581
    %3711 = vmatprep.subr.bf16.mxu0 0
    %3712 = vmatpush1.bf16.msra.mxu0 %v3583
    %3713 = vmatprep.subr.bf16.mxu0 0
    %3714 = vmatpush1.bf16.msra.mxu0 %v3584
    %3715 = vmatprep.subr.bf16.mxu0 0
    %3716 = vmatpush1.bf16.msra.mxu0 %v3585
    %3717 = vmatprep.subr.bf16.mxu0 0
    %3718 = vmatpush1.bf16.msra.mxu0 %v3586
    %3719 = vmatprep.subr.bf16.mxu0 0
    %3720 = vmatpush1.bf16.msra.mxu0 %v3587
    %3721 = vmatprep.subr.bf16.mxu0 0
    %3722 = vmatpush1.bf16.msra.mxu0 %v3588
    %3723 = vmatprep.subr.bf16.mxu0 0
    %3724 = vmatpush1.bf16.msra.mxu0 %v3589
    %3725 = vmatprep.subr.bf16.mxu0 0
    %3726 = vmatpush1.bf16.msra.mxu0 %v3590
    %3727 = vmatprep.subr.bf16.mxu0 0
    %3728 = vmatpush1.bf16.msra.mxu0 %v3591
    %3729 = vmatprep.subr.bf16.mxu0 0
    %3730 = vmatpush1.bf16.msra.mxu0 %v3592
    %3731 = vmatprep.subr.bf16.mxu0 0
    %3732 = vmatpush1.bf16.msra.mxu0 %v3593
    %3733 = vmatprep.subr.bf16.mxu0 0
    %3734 = vmatpush1.bf16.msra.mxu0 %v3594
    %3735 = vmatprep.subr.bf16.mxu0 0
    %3736 = vmatpush1.bf16.msra.mxu0 %v3595
    %3737 = vmatprep.subr.bf16.mxu0 0
    %3738 = vmatpush1.bf16.msra.mxu0 %v3596
    %3739 = vmatprep.subr.bf16.mxu0 0
    %3740 = vmatpush1.bf16.msra.mxu0 %v3597
    %3741 = vmatprep.subr.bf16.mxu0 0
    %3742 = vmatpush1.bf16.msra.mxu0 %v3598
    %3743 = vmatprep.mubr.bf16.mxu0 %v3192
    %3744 = vmatmul.mubr.bf16.gmra.mrb[0].mxu0 %v3191
    %v3745 = vpop.f32.mrb[0].mxu0
    %v3746 = vadd.f32 0.0, %v3745
    %v3747 = vpop.f32.mrb[0].mxu0
    %v3748 = vpop.f32.mrb[0].mxu0
    %v3749 = vpop.f32.mrb[0].mxu0
    %3750 = vdwg.mxu0
    %3751 = vmatprep.subr.bf16.mxu0 0
    %3752 = vmatpush1.bf16.msra.mxu0 %v3599
    %3753 = vmatprep.subr.bf16.mxu0 0
    %3754 = vmatpush1.bf16.msra.mxu0 %v3600
    %3755 = vmatprep.subr.bf16.mxu0 0
    %3756 = vmatpush1.bf16.msra.mxu0 %v3601
    %3757 = vmatprep.subr.bf16.mxu0 0
    %3758 = vmatpush1.bf16.msra.mxu0 %v3602
    %3759 = vmatprep.subr.bf16.mxu0 0
    %3760 = vmatpush1.bf16.msra.mxu0 %v3603
    %3761 = vmatprep.subr.bf16.mxu0 0
    %3762 = vmatpush1.bf16.msra.mxu0 %v3604
    %3763 = vmatprep.subr.bf16.mxu0 0
    %3764 = vmatpush1.bf16.msra.mxu0 %v3605
    %3765 = vmatprep.subr.bf16.mxu0 0
    %3766 = vmatpush1.bf16.msra.mxu0 %v3606
    %3767 = vmatprep.subr.bf16.mxu0 0
    %3768 = vmatpush1.bf16.msra.mxu0 %v3607
    %3769 = vmatprep.subr.bf16.mxu0 0
    %3770 = vmatpush1.bf16.msra.mxu0 %v3608
    %3771 = vmatprep.subr.bf16.mxu0 0
    %3772 = vmatpush1.bf16.msra.mxu0 %v3609
    %3773 = vmatprep.subr.bf16.mxu0 0
    %3774 = vmatpush1.bf16.msra.mxu0 %v3610
    %3775 = vmatprep.subr.bf16.mxu0 0
    %3776 = vmatpush1.bf16.msra.mxu0 %v3611
    %3777 = vmatprep.subr.bf16.mxu0 0
    %3778 = vmatpush1.bf16.msra.mxu0 %v3612
    %3779 = vmatprep.subr.bf16.mxu0 0
    %3780 = vmatpush1.bf16.msra.mxu0 %v3613
    %3781 = vmatprep.subr.bf16.mxu0 0
    %3782 = vmatpush1.bf16.msra.mxu0 %v3614
    %3783 = vmatprep.mubr.bf16.mxu0 %v3194
    %3784 = vmatmul.mubr.bf16.gmra.mrb[0].mxu0 %v3193
    %v3785 = vpop.f32.mrb[0].mxu0
    %v3786 = vadd.f32 %v3746, %v3785
    %v3787 = vpop.f32.mrb[0].mxu0
    %v3788 = vpop.f32.mrb[0].mxu0
    %v3789 = vpop.f32.mrb[0].mxu0
    %3790 = vdwg.mxu0
    %3791 = vmatprep.subr.bf16.mxu0 0
    %3792 = vmatpush1.bf16.msra.mxu0 %v3615
    %3793 = vmatprep.subr.bf16.mxu0 0
    %3794 = vmatpush1.bf16.msra.mxu0 %v3616
    %3795 = vmatprep.subr.bf16.mxu0 0
    %3796 = vmatpush1.bf16.msra.mxu0 %v3617
    %3797 = vmatprep.subr.bf16.mxu0 0
    %3798 = vmatpush1.bf16.msra.mxu0 %v3618
    %3799 = vmatprep.subr.bf16.mxu0 0
    %3800 = vmatpush1.bf16.msra.mxu0 %v3619
    %3801 = vmatprep.subr.bf16.mxu0 0
    %3802 = vmatpush1.bf16.msra.mxu0 %v3620
    %3803 = vmatprep.subr.bf16.mxu0 0
    %3804 = vmatpush1.bf16.msra.mxu0 %v3621
    %3805 = vmatprep.subr.bf16.mxu0 0
    %3806 = vmatpush1.bf16.msra.mxu0 %v3622
    %3807 = vmatprep.subr.bf16.mxu0 0
    %3808 = vmatpush1.bf16.msra.mxu0 %v3623
    %3809 = vmatprep.subr.bf16.mxu0 0
    %3810 = vmatpush1.bf16.msra.mxu0 %v3624
    %3811 = vmatprep.subr.bf16.mxu0 0
    %3812 = vmatpush1.bf16.msra.mxu0 %v3625
    %3813 = vmatprep.subr.bf16.mxu0 0
    %3814 = vmatpush1.bf16.msra.mxu0 %v3626
    %3815 = vmatprep.subr.bf16.mxu0 0
    %3816 = vmatpush1.bf16.msra.mxu0 %v3627
    %3817 = vmatprep.subr.bf16.mxu0 0
    %3818 = vmatpush1.bf16.msra.mxu0 %v3628
    %3819 = vmatprep.subr.bf16.mxu0 0
    %3820 = vmatpush1.bf16.msra.mxu0 %v3629
    %3821 = vmatprep.subr.bf16.mxu0 0
    %3822 = vmatpush1.bf16.msra.mxu0 %v3630
    %3823 = vmatprep.mubr.bf16.mxu0 %v3196
    %3824 = vmatmul.mubr.bf16.gmra.mrb[0].mxu0 %v3195
    %v3825 = vpop.f32.mrb[0].mxu0
    %v3826 = vadd.f32 %v3786, %v3825
    %v3827 = vpop.f32.mrb[0].mxu0
    %v3828 = vpop.f32.mrb[0].mxu0
    %v3829 = vpop.f32.mrb[0].mxu0
    %3830 = vdwg.mxu0
    %3831 = vmatprep.subr.bf16.mxu0 0
    %3832 = vmatpush1.bf16.msra.mxu0 %v3631
    %3833 = vmatprep.subr.bf16.mxu0 0
    %3834 = vmatpush1.bf16.msra.mxu0 %v3632
    %3835 = vmatprep.subr.bf16.mxu0 0
    %3836 = vmatpush1.bf16.msra.mxu0 %v3633
    %3837 = vmatprep.subr.bf16.mxu0 0
    %3838 = vmatpush1.bf16.msra.mxu0 %v3634
    %3839 = vmatprep.subr.bf16.mxu0 0
    %3840 = vmatpush1.bf16.msra.mxu0 %v3635
    %3841 = vmatprep.subr.bf16.mxu0 0
    %3842 = vmatpush1.bf16.msra.mxu0 %v3636
    %3843 = vmatprep.subr.bf16.mxu0 0
    %3844 = vmatpush1.bf16.msra.mxu0 %v3637
    %3845 = vmatprep.subr.bf16.mxu0 0
    %3846 = vmatpush1.bf16.msra.mxu0 %v3638
    %3847 = vmatprep.subr.bf16.mxu0 0
    %3848 = vmatpush1.bf16.msra.mxu0 %v3639
    %3849 = vmatprep.subr.bf16.mxu0 0
    %3850 = vmatpush1.bf16.msra.mxu0 %v3640
    %3851 = vmatprep.subr.bf16.mxu0 0
    %3852 = vmatpush1.bf16.msra.mxu0 %v3641
    %3853 = vmatprep.subr.bf16.mxu0 0
    %3854 = vmatpush1.bf16.msra.mxu0 %v3642
    %3855 = vmatprep.subr.bf16.mxu0 0
    %3856 = vmatpush1.bf16.msra.mxu0 %v3643
    %3857 = vmatprep.subr.bf16.mxu0 0
    %3858 = vmatpush1.bf16.msra.mxu0 %v3644
    %3859 = vmatprep.subr.bf16.mxu0 0
    %3860 = vmatpush1.bf16.msra.mxu0 %v3645
    %3861 = vmatprep.subr.bf16.mxu0 0
    %3862 = vmatpush1.bf16.msra.mxu0 %v3646
    %3863 = vmatprep.mubr.bf16.mxu0 %v3198
    %3864 = vmatmul.mubr.bf16.gmra.mrb[0].mxu0 %v3197
    %v3865 = vpop.f32.mrb[0].mxu0
    %v3866 = vadd.f32 %v3826, %v3865
    %v3867 = vpop.f32.mrb[0].mxu0
    %v3868 = vpop.f32.mrb[0].mxu0
    %v3869 = vpop.f32.mrb[0].mxu0
    %3870 = vdwg.mxu0
    %v3935 = vunpack.c.l.b16 %v1086
    %v3936 = vunpack.c.l.b16 %v1087
    %v3937 = vunpack.c.l.b16 %v1088
    %v3938 = vunpack.c.l.b16 %v1089
    %v3939 = vunpack.c.l.b16 %v1090
    %v3940 = vunpack.c.l.b16 %v1091
    %v3941 = vunpack.c.l.b16 %v1092
    %v3942 = vunpack.c.l.b16 %v1093
    %v3943 = vunpack.c.l.b16 %v1094
    %v3944 = vunpack.c.l.b16 %v1095
    %v3945 = vunpack.c.l.b16 %v1096
    %v3946 = vunpack.c.l.b16 %v1097
    %v3947 = vunpack.c.l.b16 %v1098
    %v3948 = vunpack.c.l.b16 %v1099
    %v3949 = vunpack.c.l.b16 %v1100
    %v3950 = vunpack.c.l.b16 %v1101
    %v3951 = vunpack.c.l.b16 %v1102
    %v3952 = vunpack.c.l.b16 %v1103
    %v3953 = vunpack.c.l.b16 %v1104
    %v3954 = vunpack.c.l.b16 %v1105
    %v3955 = vunpack.c.l.b16 %v1106
    %v3956 = vunpack.c.l.b16 %v1107
    %v3957 = vunpack.c.l.b16 %v1108
    %v3958 = vunpack.c.l.b16 %v1109
    %v3959 = vunpack.c.l.b16 %v1110
    %v3960 = vunpack.c.l.b16 %v1111
    %v3961 = vunpack.c.l.b16 %v1112
    %v3962 = vunpack.c.l.b16 %v1113
    %v3963 = vunpack.c.l.b16 %v1114
    %v3964 = vunpack.c.l.b16 %v1115
    %v3965 = vunpack.c.l.b16 %v1116
    %v3966 = vunpack.c.l.b16 %v1117
    %v3967 = vunpack.c.l.b16 %v1118
    %v3968 = vunpack.c.l.b16 %v1119
    %v3969 = vunpack.c.l.b16 %v1120
    %v3970 = vunpack.c.l.b16 %v1121
    %v3971 = vunpack.c.l.b16 %v1122
    %v3972 = vunpack.c.l.b16 %v1123
    %v3973 = vunpack.c.l.b16 %v1124
    %v3974 = vunpack.c.l.b16 %v1125
    %v3975 = vunpack.c.l.b16 %v1126
    %v3976 = vunpack.c.l.b16 %v1127
    %v3977 = vunpack.c.l.b16 %v1128
    %v3978 = vunpack.c.l.b16 %v1129
    %v3979 = vunpack.c.l.b16 %v1130
    %v3980 = vunpack.c.l.b16 %v1131
    %v3981 = vunpack.c.l.b16 %v1132
    %v3982 = vunpack.c.l.b16 %v1133
    %v3983 = vunpack.c.l.b16 %v1134
    %v3984 = vunpack.c.l.b16 %v1135
    %v3985 = vunpack.c.l.b16 %v1136
    %v3986 = vunpack.c.l.b16 %v1137
    %v3987 = vunpack.c.l.b16 %v1138
    %v3988 = vunpack.c.l.b16 %v1139
    %v3989 = vunpack.c.l.b16 %v1140
    %v3990 = vunpack.c.l.b16 %v1141
    %v3991 = vunpack.c.l.b16 %v1142
    %v3992 = vunpack.c.l.b16 %v1143
    %v3993 = vunpack.c.l.b16 %v1144
    %v3994 = vunpack.c.l.b16 %v1145
    %v3995 = vunpack.c.l.b16 %v1146
    %v3996 = vunpack.c.l.b16 %v1147
    %v3997 = vunpack.c.l.b16 %v1148
    %v3998 = vunpack.c.l.b16 %v1149
    %v3999 = vpack.c.b16 %v3936, %v3935
    %v4000 = vpack.c.b16 %v3938, %v3937
    %v4001 = vpack.c.b16 %v3940, %v3939
    %v4002 = vpack.c.b16 %v3942, %v3941
    %v4003 = vpack.c.b16 %v3944, %v3943
    %v4004 = vpack.c.b16 %v3946, %v3945
    %v4005 = vpack.c.b16 %v3948, %v3947
    %v4006 = vpack.c.b16 %v3950, %v3949
    %v4007 = vpack.c.b16 %v3952, %v3951
    %v4008 = vpack.c.b16 %v3954, %v3953
    %v4009 = vpack.c.b16 %v3956, %v3955
    %v4010 = vpack.c.b16 %v3958, %v3957
    %v4011 = vpack.c.b16 %v3960, %v3959
    %v4012 = vpack.c.b16 %v3962, %v3961
    %v4013 = vpack.c.b16 %v3964, %v3963
    %v4014 = vpack.c.b16 %v3966, %v3965
    %v4015 = vpack.c.b16 %v3968, %v3967
    %v4016 = vpack.c.b16 %v3970, %v3969
    %v4017 = vpack.c.b16 %v3972, %v3971
    %v4018 = vpack.c.b16 %v3974, %v3973
    %v4019 = vpack.c.b16 %v3976, %v3975
    %v4020 = vpack.c.b16 %v3978, %v3977
    %v4021 = vpack.c.b16 %v3980, %v3979
    %v4022 = vpack.c.b16 %v3982, %v3981
    %v4023 = vpack.c.b16 %v3984, %v3983
    %v4024 = vpack.c.b16 %v3986, %v3985
    %v4025 = vpack.c.b16 %v3988, %v3987
    %v4026 = vpack.c.b16 %v3990, %v3989
    %v4027 = vpack.c.b16 %v3992, %v3991
    %v4028 = vpack.c.b16 %v3994, %v3993
    %v4029 = vpack.c.b16 %v3996, %v3995
    %v4030 = vpack.c.b16 %v3998, %v3997
    %4063 = vmatprep.subr.bf16.mxu0 0
    %4064 = vmatpush1.bf16.msra.mxu0 %v3999
    %4065 = vmatprep.subr.bf16.mxu0 0
    %4066 = vmatpush1.bf16.msra.mxu0 %v4000
    %4067 = vmatprep.subr.bf16.mxu0 0
    %4068 = vmatpush1.bf16.msra.mxu0 %v4001
    %4069 = vmatprep.subr.bf16.mxu0 0
    %4070 = vmatpush1.bf16.msra.mxu0 %v4002
    %4071 = vmatprep.subr.bf16.mxu0 0
    %4072 = vmatpush1.bf16.msra.mxu0 %v4003
    %4073 = vmatprep.subr.bf16.mxu0 0
    %4074 = vmatpush1.bf16.msra.mxu0 %v4004
    %4075 = vmatprep.subr.bf16.mxu0 0
    %4076 = vmatpush1.bf16.msra.mxu0 %v4005
    %4077 = vmatprep.subr.bf16.mxu0 0
    %4078 = vmatpush1.bf16.msra.mxu0 %v4006
    %4079 = vmatprep.subr.bf16.mxu0 0
    %4080 = vmatpush1.bf16.msra.mxu0 %v4007
    %4081 = vmatprep.subr.bf16.mxu0 0
    %4082 = vmatpush1.bf16.msra.mxu0 %v4008
    %4083 = vmatprep.subr.bf16.mxu0 0
    %4084 = vmatpush1.bf16.msra.mxu0 %v4009
    %4085 = vmatprep.subr.bf16.mxu0 0
    %4086 = vmatpush1.bf16.msra.mxu0 %v4010
    %4087 = vmatprep.subr.bf16.mxu0 0
    %4088 = vmatpush1.bf16.msra.mxu0 %v4011
    %4089 = vmatprep.subr.bf16.mxu0 0
    %4090 = vmatpush1.bf16.msra.mxu0 %v4012
    %4091 = vmatprep.subr.bf16.mxu0 0
    %4092 = vmatpush1.bf16.msra.mxu0 %v4013
    %4093 = vmatprep.subr.bf16.mxu0 0
    %4094 = vmatpush1.bf16.msra.mxu0 %v4014
    %4095 = vmatprep.mubr.bf16.mxu0 %v1083
    %4096 = vmatmul.mubr.bf16.gmra.mrb[0].mxu0 %v1082
    %v4097 = vpop.f32.mrb[0].mxu0
    %v4098 = vadd.f32 %v3866, %v4097
    %v4099 = vpop.f32.mrb[0].mxu0
    %v4100 = vpop.f32.mrb[0].mxu0
    %v4101 = vpop.f32.mrb[0].mxu0
    %4102 = vdwg.mxu0
    %4103 = vmatprep.subr.bf16.mxu0 0
    %4104 = vmatpush1.bf16.msra.mxu0 %v4015
    %4105 = vmatprep.subr.bf16.mxu0 0
    %4106 = vmatpush1.bf16.msra.mxu0 %v4016
    %4107 = vmatprep.subr.bf16.mxu0 0
    %4108 = vmatpush1.bf16.msra.mxu0 %v4017
    %4109 = vmatprep.subr.bf16.mxu0 0
    %4110 = vmatpush1.bf16.msra.mxu0 %v4018
    %4111 = vmatprep.subr.bf16.mxu0 0
    %4112 = vmatpush1.bf16.msra.mxu0 %v4019
    %4113 = vmatprep.subr.bf16.mxu0 0
    %4114 = vmatpush1.bf16.msra.mxu0 %v4020
    %4115 = vmatprep.subr.bf16.mxu0 0
    %4116 = vmatpush1.bf16.msra.mxu0 %v4021
    %4117 = vmatprep.subr.bf16.mxu0 0
    %4118 = vmatpush1.bf16.msra.mxu0 %v4022
    %4119 = vmatprep.subr.bf16.mxu0 0
    %4120 = vmatpush1.bf16.msra.mxu0 %v4023
    %4121 = vmatprep.subr.bf16.mxu0 0
    %4122 = vmatpush1.bf16.msra.mxu0 %v4024
    %4123 = vmatprep.subr.bf16.mxu0 0
    %4124 = vmatpush1.bf16.msra.mxu0 %v4025
    %4125 = vmatprep.subr.bf16.mxu0 0
    %4126 = vmatpush1.bf16.msra.mxu0 %v4026
    %4127 = vmatprep.subr.bf16.mxu0 0
    %4128 = vmatpush1.bf16.msra.mxu0 %v4027
    %4129 = vmatprep.subr.bf16.mxu0 0
    %4130 = vmatpush1.bf16.msra.mxu0 %v4028
    %4131 = vmatprep.subr.bf16.mxu0 0
    %4132 = vmatpush1.bf16.msra.mxu0 %v4029
    %4133 = vmatprep.subr.bf16.mxu0 0
    %4134 = vmatpush1.bf16.msra.mxu0 %v4030
    %4135 = vmatprep.mubr.bf16.mxu0 %v1085
    %4136 = vmatmul.mubr.bf16.gmra.mrb[0].mxu0 %v1084
    %v4137 = vpop.f32.mrb[0].mxu0
    %v4138 = vadd.f32 %v4098, %v4137
    %v4139 = vpop.f32.mrb[0].mxu0
    %v4140 = vpop.f32.mrb[0].mxu0
    %v4141 = vpop.f32.mrb[0].mxu0
    %4142 = vdwg.mxu0
    %4143 = vst [vmem:[#allocation14] sm:$0xff] %v4138
    // Predicated region
    $region54: #{tpu_custom_call.1} parent=1 // pred_check
      _
    $region55: #{tpu_custom_call.1} parent=1 // pred_check_branch
      %4145 = sbr.rel (0) target = $region57
    $region56: #{tpu_custom_call.1} parent=1 // pred_region
      %s4147 = ssub.s32 512, 512
      %4148 = vsyncadd [#allocation4], %s4147
      %s4150 = sshll.u32 [#allocation13], 4
      %s4151 = int_to_ptr.vmem [resolvable:$true] %s4150
      %4153 = dma.vmem_to_hbm [thread:$0]  %s4151, 512, %s7, [#allocation4]
    $region57: #{tpu_custom_call.1} parent=1 // pred_fallthru
      _
    // Predicated region
    $region58: #{tpu_custom_call.1} parent=1 // pred_check
      _
    $region59: #{tpu_custom_call.1} parent=1 // pred_check_branch
      %4155 = sbr.rel (0) target = $region61
    $region60: #{tpu_custom_call.1} parent=1 // pred_region
      %s4157 = ssub.s32 128, 128
      %4158 = vsyncadd [#allocation15], %s4157
      %s4160 = sshll.u32 [#allocation14], 4
      %s4161 = int_to_ptr.vmem [resolvable:$true] %s4160
      %4163 = dma.vmem_to_hbm [thread:$0]  %s4161, 128, %s8, [#allocation15]
    $region61: #{tpu_custom_call.1} parent=1 // pred_fallthru
      _
    // Predicated region
    $region62: #{tpu_custom_call.1} parent=1 // pred_check
      _
    $region63: #{tpu_custom_call.1} parent=1 // pred_check_branch
      %4165 = sbr.rel (0) target = $region65
    $region64: #{tpu_custom_call.1} parent=1 // pred_region
      %4166 = dma.done [#allocation4], 512
    $region65: #{tpu_custom_call.1} parent=1 // pred_fallthru
      _
    // Predicated region
    $region66: #{tpu_custom_call.1} parent=1 // pred_check
      _
    $region67: #{tpu_custom_call.1} parent=1 // pred_check_branch
      %4168 = sbr.rel (0) target = $region69
    $region68: #{tpu_custom_call.1} parent=1 // pred_region
      %4169 = dma.done [#allocation15], 128
    $region69: #{tpu_custom_call.1} parent=1 // pred_fallthru
      _
    %4170 = vsyncpa [#allocation3], 1
    %4171 = vsyncpa [#allocation8], 1
    %4172 = vsyncpa [#allocation11], 1
    %4173 = vsyncpa [#allocation4], 1
    %4174 = vsyncpa [#allocation15], 1
    %4175 = vsyncpa [#allocation5], 1

</llo_original>
